<compile_context>
chip_gen: v7x
topology: tpu7x:2x2x1
jax: 0.10.0
libtpu: 0.0.40
codegen_flags: <defaults>
</compile_context>

<pallas_src>
import functools
import math

import jax
import jax.numpy as jnp
import numpy as np
from jax.experimental import pallas as pl
from jax.experimental.pallas import tpu as pltpu


# ----------------------------------------------------------------------------
# Kernel
# ----------------------------------------------------------------------------
def _decoder_kernel(hs_ref, enc_ref, mask_ref,
                    wq_ref, bq_ref, wk_ref, bk_ref, wv_ref, bv_ref,
                    wo_ref, bo_ref, wvoc_ref, bvoc_ref, wcg_ref, bcg_ref,
                    comb_ref, logits_ref, copy_ref,
                    comb_scratch, *, num_heads):
    cdt = wq_ref.dtype                       # matmul-input dtype (bf16 by default)
    Bt, Td, H = hs_ref.shape
    Te = enc_ref.shape[1]
    NH = num_heads
    d = H // NH

    # ---- attention + residual + copy heads: once per batch block (vj == 0) ----
    @pl.when(pl.program_id(1) == 0)
    def _attention_and_copy_heads():
        hs = hs_ref[...].reshape(Bt * Td, H)          # f32 (Bt*Td, H)
        enc = enc_ref[...].reshape(Bt * Te, H)        # bf16 (Bt*Te, H), host-cast
        hs_c = hs.astype(cdt)

        # Q/K/V projections on flattened row slabs; weights pre-transposed (H, H),
        # 1/sqrt(d) already folded into wq/bq on the host.
        q = jnp.dot(hs_c, wq_ref[...], preferred_element_type=jnp.float32) + bq_ref[...]
        k = jnp.dot(enc, wk_ref[...], preferred_element_type=jnp.float32) + bk_ref[...]
        v = jnp.dot(enc, wv_ref[...], preferred_element_type=jnp.float32) + bv_ref[...]

        # split heads -> one batched contraction over (Bt*NH) instead of a
        # per-head Python loop with narrow slices + lane-axis concat.
        qh = jnp.transpose(q.reshape(Bt, Td, NH, d), (0, 2, 1, 3)).reshape(Bt * NH, Td, d)
        kh = jnp.transpose(k.reshape(Bt, Te, NH, d), (0, 2, 1, 3)).reshape(Bt * NH, Te, d)
        vh = jnp.transpose(v.reshape(Bt, Te, NH, d), (0, 2, 1, 3)).reshape(Bt * NH, Te, d)

        s = jnp.einsum('bqd,bkd->bqk', qh.astype(cdt), kh.astype(cdt),
                       preferred_element_type=jnp.float32)        # (Bt*NH, Td, Te) f32

        # key_padding_mask = ~attention_mask  (mask==1 -> valid key).
        # TODO(synk): rows whose keys are ALL padding get uniform attention here,
        # whereas PyTorch nn.MultiheadAttention yields NaN for such rows.
        keep = jnp.broadcast_to(mask_ref[...][:, None, :, :],
                                (Bt, NH, 1, Te)).reshape(Bt * NH, 1, Te)
        s = jnp.where(keep > 0.5, s, -1e30)

        m = jnp.max(s, axis=-1, keepdims=True)
        p = jnp.exp(s - m)
        p = p * pl.reciprocal(jnp.sum(p, axis=-1, keepdims=True), approx=True)

        o = jnp.einsum('bqk,bkd->bqd', p.astype(cdt), vh.astype(cdt),
                       preferred_element_type=jnp.float32)        # (Bt*NH, Td, d)
        o = jnp.transpose(o.reshape(Bt, NH, Td, d), (0, 2, 1, 3)).reshape(Bt * Td, H)

        attn = jnp.dot(o.astype(cdt), wo_ref[...],
                       preferred_element_type=jnp.float32) + bo_ref[...]

        # residual: combined_states = hidden_states + aspect_aware_states (f32)
        combined = hs + attn                                      # f32 (Bt*Td, H)
        comb_ref[...] = combined.reshape(Bt, Td, H).astype(comb_ref.dtype)
        # bf16 cache reused by every vocab tile (identical numerics to casting
        # the f32 value per tile, since matmul inputs are bf16 anyway).
        comb_scratch[...] = combined.astype(cdt)

        # fused copy_attention + copy_gate: single (H, 2) matmul, sigmoid on col 1.
        cg = jnp.dot(combined.astype(cdt), wcg_ref[...],
                     preferred_element_type=jnp.float32)          # (Bt*Td, 2)
        bc = bcg_ref[0]                                           # SMEM scalars
        bg = bcg_ref[1]
        col = jax.lax.broadcasted_iota(jnp.int32, cg.shape, 1)
        fused = jnp.where(col == 1, jax.nn.sigmoid(cg + bg), cg + bc)
        copy_ref[...] = fused.reshape(Bt, Td, 2).astype(copy_ref.dtype)

    # ---- vocab projection for this (batch block, vocab tile): every grid step ----
    TV = wvoc_ref.shape[1]
    logits = jnp.dot(comb_scratch[...], wvoc_ref[...],
                     preferred_element_type=jnp.float32) + bvoc_ref[...]
    logits_ref[...] = logits.reshape(Bt, Td, TV).astype(logits_ref.dtype)


# ----------------------------------------------------------------------------
# Host-side helpers: VMEM-budget-driven tiling
# ----------------------------------------------------------------------------
def _round_up(x, m):
    return ((x + m - 1) // m) * m


def _vmem_capacity_bytes():
    try:
        info = pltpu.get_tpu_info()
        cap = getattr(info, "vmem_capacity_bytes", None)
        if cap:
            return int(cap)
    except Exception:
        pass
    return 128 * 1024 * 1024   # v5e / v6e default; v7x reports 64 MiB via get_tpu_info


def _vmem_estimate(bt, tv, Td, Te, H, NH, logits_bytes, cdt_bytes=2):
    """Conservative resident-VMEM model for one grid step (steady state + vj==0 transients)."""
    f32 = 4
    est = 0
    est += 2 * bt * Td * H * f32            # hidden_states input (double-buffered, f32)
    est += 2 * bt * Te * H * cdt_bytes      # encoder input (bf16, double-buffered)
    est += 2 * bt * Te * f32                # key mask
    est += 4 * H * H * cdt_bytes            # q/k/v/o weights (single-buffered)
    est += 4 * H * f32                      # q/k/v/o biases (single-buffered)
    est += 2 * H * tv * cdt_bytes           # vocab weight tile (double-buffered)
    est += 2 * tv * f32                     # vocab bias tile
    est += H * 2 * cdt_bytes                # fused copy/gate weight
    est += 2 * bt * Td * H * f32            # combined-states output
    est += 2 * bt * Td * tv * logits_bytes  # logits output tile
    est += 2 * bt * Td * 8 * f32            # copy output (tiny, lane-padded)
    est += bt * Td * H * cdt_bytes          # comb_scratch
    # transient attention footprint on the vj == 0 step (q/k/v slabs, scores, probs, ctx)
    est += bt * (Td + 2 * Te) * H * f32
    est += 2 * bt * NH * Td * Te * f32
    est += 2 * bt * Td * H * f32
    return est


def _choose_tiles(B, Td, Te, H, NH, V, vmem_budget, logits_bytes):
    """Pick (batch_block, vocab_block) maximizing per-step GEMM work within VMEM budget."""
    # Keep >= 2 batch blocks whenever B >= 2 so both v7x TensorCores get work.
    bt_cap = max(1, (B + 1) // 2) if B >= 2 else 1
    m_targets = (2048, 1024, 512, 256, 128, 64, 32, 16, 8, 1)
    bt_candidates = sorted({max(1, min(bt_cap, m // max(Td, 1))) for m in m_targets},
                           reverse=True)
    v_pad128 = _round_up(max(V, 128), 128)
    tv_candidates = [c for c in (4096, 2048, 1024, 512, 256, 128) if c <= v_pad128]
    if not tv_candidates:
        tv_candidates = [v_pad128]
    best = None
    for bt in bt_candidates:
        for tv in tv_candidates:
            if _vmem_estimate(bt, tv, Td, Te, H, NH, logits_bytes) > vmem_budget:
                continue
            score = (bt * Td * tv, bt * Td)
            if best is None or score > best[0]:
                best = (score, bt, tv)
    if best is None:
        return 1, 128
    return best[1], best[2]


def _const_spec(arr):
    """BlockSpec for a grid-invariant operand; single-buffered to save VMEM."""
    zeros = (0,) * arr.ndim
    idx = lambda b, vj: zeros
    try:
        return pl.BlockSpec(arr.shape, idx, pipeline_mode=pl.Buffered(1))
    except TypeError:   # older BlockSpec without pipeline_mode kwarg
        return pl.BlockSpec(arr.shape, idx)


# ----------------------------------------------------------------------------
# Wrapper
# ----------------------------------------------------------------------------
def generative_decoder_forward(hidden_states, encoder_outputs, attention_mask, params,
                               num_heads, *, batch_block=None, vocab_block=None,
                               compute_dtype=jnp.bfloat16, logits_dtype=jnp.bfloat16):
    """Pallas implementation of GenerativeDecoder (post base_model.decoder).

    hidden_states:   (B, Td, H) float32 -- output of base_model.decoder
    encoder_outputs: (B, Te, H) float32
    attention_mask:  (B, Te) bool/int   -- True/1 = valid key position
    logits_dtype:    dtype of the vocab logits output (bf16 default; pass
                     jnp.float32 if the downstream loss needs full precision).
    """
    B, Td, H = hidden_states.shape
    _, Te, _ = encoder_outputs.shape
    V = params["w_vocab"].shape[0]
    assert H % num_heads == 0
    d = H // num_heads
    f32 = jnp.float32
    cdt = compute_dtype
    logit_bytes = jnp.dtype(logits_dtype).itemsize

    # ---- tiling: derived from actual VMEM capacity + full footprint model ----
    vmem_cap = _vmem_capacity_bytes()
    auto_bt, auto_tv = _choose_tiles(B, Td, Te, H, num_heads, V,
                                     int(vmem_cap * 0.6), logit_bytes)
    Bt = batch_block if batch_block is not None else auto_bt
    TV = vocab_block if vocab_block is not None else auto_tv

    # pad batch / vocab to tile multiples (zero / fully-masked tails, sliced off below)
    B_pad = _round_up(B, Bt)
    V_pad = _round_up(V, TV)

    # ---- host-side weight prep: pre-transpose, fold 1/sqrt(d), fuse copy heads ----
    scale = 1.0 / math.sqrt(d)
    wq_t = (params["w_q"].astype(f32) * scale).T.astype(cdt)      # (H, H)
    bq_s = params["b_q"].astype(f32) * scale                      # (1, H)
    wk_t = params["w_k"].T.astype(cdt)
    bk = params["b_k"].astype(f32)
    wv_t = params["w_v"].T.astype(cdt)
    bv = params["b_v"].astype(f32)
    wo_t = params["w_o"].T.astype(cdt)
    bo = params["b_o"].astype(f32)
    wvoc_t = params["w_vocab"].T.astype(cdt)                      # (H, V)
    bvoc = params["b_vocab"].astype(f32).reshape(1, V)            # (1, V)
    wcg_t = jnp.concatenate([params["w_copy"], params["w_gate"]],
                            axis=0).T.astype(cdt)                 # (H, 2)
    bcg = jnp.concatenate([params["b_copy"].reshape(-1),
                           params["b_gate"].reshape(-1)]).astype(f32)   # (2,) -> SMEM

    if V_pad != V:
        wvoc_t = jnp.pad(wvoc_t, ((0, 0), (0, V_pad - V)))
        bvoc = jnp.pad(bvoc, ((0, 0), (0, V_pad - V)))

    # encoder activations only feed bf16 K/V matmuls -> cast on host (halves HBM read
    # and VMEM for that tile; identical numerics to the previous in-kernel cast).
    enc = encoder_outputs.astype(cdt)
    hs = hidden_states.astype(f32)
    mask = attention_mask.astype(f32).reshape(B, 1, Te)
    if B_pad != B:
        pad = B_pad - B
        hs = jnp.pad(hs, ((0, pad), (0, 0), (0, 0)))
        enc = jnp.pad(enc, ((0, pad), (0, 0), (0, 0)))
        mask = jnp.pad(mask, ((0, pad), (0, 0), (0, 0)))

    in_specs = [
        pl.BlockSpec((Bt, Td, H), lambda b, vj: (b, 0, 0)),       # hidden_states (f32)
        pl.BlockSpec((Bt, Te, H), lambda b, vj: (b, 0, 0)),       # encoder_outputs (bf16)
        pl.BlockSpec((Bt, 1, Te), lambda b, vj: (b, 0, 0)),       # key mask
        _const_spec(wq_t), _const_spec(bq_s),
        _const_spec(wk_t), _const_spec(bk),
        _const_spec(wv_t), _const_spec(bv),
        _const_spec(wo_t), _const_spec(bo),
        pl.BlockSpec((H, TV), lambda b, vj: (0, vj)),             # vocab weight tile
        pl.BlockSpec((1, TV), lambda b, vj: (0, vj)),             # vocab bias tile
        _const_spec(wcg_t),
        pl.BlockSpec(memory_space=pltpu.MemorySpace.SMEM),        # copy/gate biases
    ]

    out_shape = (
        jax.ShapeDtypeStruct((B_pad, Td, H), jnp.float32),        # combined states
        jax.ShapeDtypeStruct((B_pad, Td, V_pad), logits_dtype),   # vocab logits
        jax.ShapeDtypeStruct((B_pad, Td, 2), jnp.float32),        # [copy_score, copy_prob]
    )
    out_specs = (
        pl.BlockSpec((Bt, Td, H), lambda b, vj: (b, 0, 0)),
        pl.BlockSpec((Bt, Td, TV), lambda b, vj: (b, 0, vj)),
        pl.BlockSpec((Bt, Td, 2), lambda b, vj: (b, 0, 0)),
    )

    est = _vmem_estimate(Bt, TV, Td, Te, H, num_heads, logit_bytes)
    vmem_limit = int(min(vmem_cap * 0.92, max(24 * 1024 * 1024, est * 1.5)))

    kernel = functools.partial(_decoder_kernel, num_heads=num_heads)

    combined, logits, copy_out = pl.pallas_call(
        kernel,
        out_shape=out_shape,
        grid_spec=pltpu.PrefetchScalarGridSpec(
            num_scalar_prefetch=0,
            # vocab axis MUST stay innermost: comb_scratch / combined / copy outputs
            # computed at vj==0 are reused by the remaining vocab tiles of the block.
            grid=(B_pad // Bt, V_pad // TV),
            in_specs=in_specs,
            out_specs=out_specs,
            scratch_shapes=[pltpu.VMEM((Bt * Td, H), cdt)],       # cached combined states
        ),
        compiler_params=pltpu.CompilerParams(
            # batch axis megacore-shardable (>=2 blocks guaranteed by the tiler when B>=2);
            # vocab axis sequential (revisited outputs + scratch reuse).
            dimension_semantics=("parallel", "arbitrary"),
            vmem_limit_bytes=vmem_limit,
        ),
    )(hs, enc, mask, wq_t, bq_s, wk_t, bk, wv_t, bv, wo_t, bo, wvoc_t, bvoc, wcg_t, bcg)

    if B_pad != B:
        combined = combined[:B]
        logits = logits[:B]
        copy_out = copy_out[:B]
    if V_pad != V:
        logits = logits[..., :V]

    return {
        "logits": logits,
        "copy_scores": copy_out[..., 0],
        "copy_probs": copy_out[..., 1],
        "hidden_states": combined,
    }


# ----------------------------------------------------------------------------
# Pure-JAX f32 reference mirroring the PyTorch forward semantics
# ----------------------------------------------------------------------------
def reference_forward(hidden_states, encoder_outputs, attention_mask, params, num_heads):
    H = hidden_states.shape[-1]
    d = H // num_heads
    scale = 1.0 / math.sqrt(d)
    q = hidden_states @ params["w_q"].T + params["b_q"]
    k = encoder_outputs @ params["w_k"].T + params["b_k"]
    v = encoder_outputs @ params["w_v"].T + params["b_v"]

    B, Td, _ = q.shape
    Te = k.shape[1]
    qh = q.reshape(B, Td, num_heads, d).transpose(0, 2, 1, 3)
    kh = k.reshape(B, Te, num_heads, d).transpose(0, 2, 1, 3)
    vh = v.reshape(B, Te, num_heads, d).transpose(0, 2, 1, 3)
    s = jnp.einsum("bhqd,bhkd->bhqk", qh, kh) * scale
    keep = attention_mask.astype(jnp.float32)[:, None, None, :]
    s = jnp.where(keep > 0.5, s, -1e30)
    p = jax.nn.softmax(s, axis=-1)
    o = jnp.einsum("bhqk,bhkd->bhqd", p, vh).transpose(0, 2, 1, 3).reshape(B, Td, H)
    attn = o @ params["w_o"].T + params["b_o"]
    combined = hidden_states + attn
    logits = combined @ params["w_vocab"].T + params["b_vocab"]
    cscores = (combined @ params["w_copy"].T + params["b_copy"][0, 0])[..., 0]
    cprobs = jax.nn.sigmoid(combined @ params["w_gate"].T + params["b_gate"][0, 0])[..., 0]
    return {"logits": logits, "copy_scores": cscores, "copy_probs": cprobs,
            "hidden_states": combined}


def init_params(key, hidden_size, vocab_size):
    H, V = hidden_size, vocab_size
    ks = jax.random.split(key, 16)
    n = lambda k, shape: (jax.random.normal(k, shape, jnp.float32) * 0.02)
    return {
        # MultiheadAttention in_proj (split into q/k/v) + out_proj
        "w_q": n(ks[0], (H, H)), "b_q": n(ks[1], (1, H)),
        "w_k": n(ks[2], (H, H)), "b_k": n(ks[3], (1, H)),
        "w_v": n(ks[4], (H, H)), "b_v": n(ks[5], (1, H)),
        "w_o": n(ks[6], (H, H)), "b_o": n(ks[7], (1, H)),
        # vocab_projection
        "w_vocab": n(ks[8], (V, H)), "b_vocab": n(ks[9], (1, V)),
        # copy_attention / copy_gate (Linear H -> 1)
        "w_copy": n(ks[10], (1, H)), "b_copy": n(ks[11], (1, 1)),
        "w_gate": n(ks[12], (1, H)), "b_gate": n(ks[13], (1, 1)),
    }


if __name__ == "__main__":
    B, Td, Te, H, NH, V = 4, 8, 16, 32, 4, 256

    key = jax.random.PRNGKey(0)
    k_ids, k_emb, k_enc, k_par = jax.random.split(key, 4)

    # TODO(synk): base_model.decoder is an external pretrained seq2seq decoder
    # (not part of this module's parameters); it is stubbed here by a
    # deterministic embedding lookup producing `hidden_states`.
    decoder_input_ids = jax.random.randint(k_ids, (B, Td), 0, V)
    embed_table = jax.random.normal(k_emb, (V, H), jnp.float32) * 0.02
    hidden_states = embed_table[decoder_input_ids]                  # (B, Td, H)

    encoder_outputs = jax.random.normal(k_enc, (B, Te, H), jnp.float32) * 0.5
    lengths = jnp.array([Te, Te - 5, Te, Te - 9], dtype=jnp.int32)
    attention_mask = (jnp.arange(Te)[None, :] < lengths[:, None])   # (B, Te) bool

    params = init_params(k_par, H, V)

    out = generative_decoder_forward(hidden_states, encoder_outputs, attention_mask,
                                     params, num_heads=NH)
    jax.block_until_ready(out)

    ref = reference_forward(hidden_states, encoder_outputs, attention_mask,
                            params, num_heads=NH)
    # bf16 matmul inputs, bf16 logits output and approx reciprocal in the softmax
    # -> looser tolerance than pure-f32 (errors measured well below these bounds).
    for name in ("logits", "copy_scores", "copy_probs", "hidden_states"):
        got = np.asarray(jnp.asarray(out[name], jnp.float32))
        np.testing.assert_allclose(got, np.asarray(ref[name]), rtol=2e-2, atol=2e-3)

    print("KERNEL_OK")
</pallas_src>

<mosaic_0001>
module attributes {stable_mosaic.version = 11 : i64} {
  func.func @_decoder_kernel(%arg0: i32, %arg1: i32, %arg2: memref<2x8x32xf32, #tpu.memory_space<vmem>>, %arg3: memref<2x16x32xbf16, #tpu.memory_space<vmem>>, %arg4: memref<2x1x16xf32, #tpu.memory_space<vmem>>, %arg5: memref<32x32xbf16, #tpu.memory_space<vmem>>, %arg6: memref<1x32xf32, #tpu.memory_space<vmem>>, %arg7: memref<32x32xbf16, #tpu.memory_space<vmem>>, %arg8: memref<1x32xf32, #tpu.memory_space<vmem>>, %arg9: memref<32x32xbf16, #tpu.memory_space<vmem>>, %arg10: memref<1x32xf32, #tpu.memory_space<vmem>>, %arg11: memref<32x32xbf16, #tpu.memory_space<vmem>>, %arg12: memref<1x32xf32, #tpu.memory_space<vmem>>, %arg13: memref<32x256xbf16, #tpu.memory_space<vmem>>, %arg14: memref<1x256xf32, #tpu.memory_space<vmem>>, %arg15: memref<32x2xbf16, #tpu.memory_space<vmem>>, %arg16: memref<2xf32, #tpu.memory_space<smem>>, %arg17: memref<2x8x32xf32, #tpu.memory_space<vmem>>, %arg18: memref<2x8x256xbf16, #tpu.memory_space<vmem>>, %arg19: memref<2x8x2xf32, #tpu.memory_space<vmem>>, %arg20: memref<16x32xbf16, #tpu.memory_space<vmem>>) attributes {dimension_semantics = [#tpu.dimension_semantics<parallel>, #tpu.dimension_semantics<arbitrary>], iteration_bounds = array<i64: 2, 1>, scalar_prefetch = 0 : i64, scratch_operands = 1 : i64, tpu.core_type = #tpu.core_type<tc>, window_params = [{transform_indices = @transform_0, window_bounds = array<i64: 2, 8, 32>}, {transform_indices = @transform_1, window_bounds = array<i64: 2, 16, 32>}, {transform_indices = @transform_2, window_bounds = array<i64: 2, 1, 16>}, {pipeline_mode = #tpu.pipeline_mode<synchronous>, transform_indices = @transform_3, window_bounds = array<i64: 32, 32>}, {pipeline_mode = #tpu.pipeline_mode<synchronous>, transform_indices = @transform_4, window_bounds = array<i64: 1, 32>}, {pipeline_mode = #tpu.pipeline_mode<synchronous>, transform_indices = @transform_5, window_bounds = array<i64: 32, 32>}, {pipeline_mode = #tpu.pipeline_mode<synchronous>, transform_indices = @transform_6, window_bounds = array<i64: 1, 32>}, {pipeline_mode = #tpu.pipeline_mode<synchronous>, transform_indices = @transform_7, window_bounds = array<i64: 32, 32>}, {pipeline_mode = #tpu.pipeline_mode<synchronous>, transform_indices = @transform_8, window_bounds = array<i64: 1, 32>}, {pipeline_mode = #tpu.pipeline_mode<synchronous>, transform_indices = @transform_9, window_bounds = array<i64: 32, 32>}, {pipeline_mode = #tpu.pipeline_mode<synchronous>, transform_indices = @transform_10, window_bounds = array<i64: 1, 32>}, {transform_indices = @transform_11, window_bounds = array<i64: 32, 256>}, {transform_indices = @transform_12, window_bounds = array<i64: 1, 256>}, {pipeline_mode = #tpu.pipeline_mode<synchronous>, transform_indices = @transform_13, window_bounds = array<i64: 32, 2>}, {transform_indices = @transform_14, window_bounds = array<i64: 2>}, {transform_indices = @transform_15, window_bounds = array<i64: 2, 8, 32>}, {transform_indices = @transform_16, window_bounds = array<i64: 2, 8, 256>}, {transform_indices = @transform_17, window_bounds = array<i64: 2, 8, 2>}]} {
    %c0_i32 = arith.constant 0 : i32
    %0 = arith.cmpi eq, %arg1, %c0_i32 : i32
    %1 = arith.extui %0 : i1 to i32
    %c0_i32_0 = arith.constant 0 : i32
    %2 = arith.cmpi ne, %1, %c0_i32_0 : i32
    scf.if %2 {
      %c0_9 = arith.constant 0 : index
      %c0_10 = arith.constant 0 : index
      %c0_11 = arith.constant 0 : index
      %12 = vector.load %arg2[%c0_9, %c0_10, %c0_11] : memref<2x8x32xf32, #tpu.memory_space<vmem>>, vector<2x8x32xf32>
      %13 = vector.shape_cast %12 : vector<2x8x32xf32> to vector<16x32xf32>
      %c0_12 = arith.constant 0 : index
      %c0_13 = arith.constant 0 : index
      %c0_14 = arith.constant 0 : index
      %14 = vector.load %arg3[%c0_12, %c0_13, %c0_14] : memref<2x16x32xbf16, #tpu.memory_space<vmem>>, vector<2x16x32xbf16>
      %15 = vector.shape_cast %14 : vector<2x16x32xbf16> to vector<32x32xbf16>
      %16 = arith.truncf %13 : vector<16x32xf32> to vector<16x32xbf16>
      %c0_15 = arith.constant 0 : index
      %c0_16 = arith.constant 0 : index
      %17 = vector.load %arg5[%c0_15, %c0_16] : memref<32x32xbf16, #tpu.memory_space<vmem>>, vector<32x32xbf16>
      %cst_17 = arith.constant dense<0.000000e+00> : vector<16x32xf32>
      %18 = tpu.matmul %16, %17, %cst_17 {dimension_numbers = #tpu.dot_dimension_numbers<[1], [0], [0], [1], [0, 0, 1, 1], [], []>} : vector<16x32xbf16>, vector<32x32xbf16>, vector<16x32xf32> -> vector<16x32xf32>
      %c0_18 = arith.constant 0 : index
      %c0_19 = arith.constant 0 : index
      %19 = vector.load %arg6[%c0_18, %c0_19] : memref<1x32xf32, #tpu.memory_space<vmem>>, vector<1x32xf32>
      %20 = vector.broadcast %19 : vector<1x32xf32> to vector<16x32xf32>
      %21 = arith.addf %18, %20 : vector<16x32xf32>
      %c0_20 = arith.constant 0 : index
      %c0_21 = arith.constant 0 : index
      %22 = vector.load %arg7[%c0_20, %c0_21] : memref<32x32xbf16, #tpu.memory_space<vmem>>, vector<32x32xbf16>
      %cst_22 = arith.constant dense<0.000000e+00> : vector<32x32xf32>
      %23 = tpu.matmul %15, %22, %cst_22 {dimension_numbers = #tpu.dot_dimension_numbers<[1], [0], [0], [1], [0, 0, 1, 1], [], []>} : vector<32x32xbf16>, vector<32x32xbf16>, vector<32x32xf32> -> vector<32x32xf32>
      %c0_23 = arith.constant 0 : index
      %c0_24 = arith.constant 0 : index
      %24 = vector.load %arg8[%c0_23, %c0_24] : memref<1x32xf32, #tpu.memory_space<vmem>>, vector<1x32xf32>
      %25 = vector.broadcast %24 : vector<1x32xf32> to vector<32x32xf32>
      %26 = arith.addf %23, %25 : vector<32x32xf32>
      %c0_25 = arith.constant 0 : index
      %c0_26 = arith.constant 0 : index
      %27 = vector.load %arg9[%c0_25, %c0_26] : memref<32x32xbf16, #tpu.memory_space<vmem>>, vector<32x32xbf16>
      %cst_27 = arith.constant dense<0.000000e+00> : vector<32x32xf32>
      %28 = tpu.matmul %15, %27, %cst_27 {dimension_numbers = #tpu.dot_dimension_numbers<[1], [0], [0], [1], [0, 0, 1, 1], [], []>} : vector<32x32xbf16>, vector<32x32xbf16>, vector<32x32xf32> -> vector<32x32xf32>
      %c0_28 = arith.constant 0 : index
      %c0_29 = arith.constant 0 : index
      %29 = vector.load %arg10[%c0_28, %c0_29] : memref<1x32xf32, #tpu.memory_space<vmem>>, vector<1x32xf32>
      %30 = vector.broadcast %29 : vector<1x32xf32> to vector<32x32xf32>
      %31 = arith.addf %28, %30 : vector<32x32xf32>
      %32 = vector.shape_cast %21 : vector<16x32xf32> to vector<2x8x4x8xf32>
      %33 = tpu.transpose %32, [0, 2, 1, 3] : vector<2x8x4x8xf32> -> vector<2x4x8x8xf32>
      %34 = vector.shape_cast %33 : vector<2x4x8x8xf32> to vector<8x8x8xf32>
      %35 = vector.shape_cast %26 : vector<32x32xf32> to vector<2x16x4x8xf32>
      %36 = tpu.transpose %35, [0, 2, 1, 3] : vector<2x16x4x8xf32> -> vector<2x4x16x8xf32>
      %37 = vector.shape_cast %36 : vector<2x4x16x8xf32> to vector<8x16x8xf32>
      %38 = vector.shape_cast %31 : vector<32x32xf32> to vector<2x16x4x8xf32>
      %39 = tpu.transpose %38, [0, 2, 1, 3] : vector<2x16x4x8xf32> -> vector<2x4x16x8xf32>
      %40 = vector.shape_cast %39 : vector<2x4x16x8xf32> to vector<8x16x8xf32>
      %41 = arith.truncf %34 : vector<8x8x8xf32> to vector<8x8x8xbf16>
      %42 = arith.truncf %37 : vector<8x16x8xf32> to vector<8x16x8xbf16>
      "tpu.trace_start"() <{level = 10 : i32, message = "bqd,bkd->bqk"}> : () -> ()
      %cst_30 = arith.constant dense<0.000000e+00> : vector<8x8x16xf32>
      %43 = tpu.matmul %41, %42, %cst_30 {dimension_numbers = #tpu.dot_dimension_numbers<[2], [2], [1], [1], [0, 0, 0, 1, 1, 1], [0], [0]>} : vector<8x8x8xbf16>, vector<8x16x8xbf16>, vector<8x8x16xf32> -> vector<8x8x16xf32>
      "tpu.trace_stop"() : () -> ()
      %c0_31 = arith.constant 0 : index
      %c0_32 = arith.constant 0 : index
      %c0_33 = arith.constant 0 : index
      %44 = vector.load %arg4[%c0_31, %c0_32, %c0_33] : memref<2x1x16xf32, #tpu.memory_space<vmem>>, vector<2x1x16xf32>
      %45 = vector.shape_cast %44 : vector<2x1x16xf32> to vector<2x1x1x16xf32>
      %46 = vector.shape_cast %45 : vector<2x1x1x16xf32> to vector<2x1x1x16xf32>
      %47 = vector.broadcast %46 : vector<2x1x1x16xf32> to vector<2x4x1x16xf32>
      %48 = vector.shape_cast %47 : vector<2x4x1x16xf32> to vector<8x1x16xf32>
      %cst_34 = arith.constant 5.000000e-01 : f32
      %49 = vector.broadcast %cst_34 : f32 to vector<8x1x16xf32>
      %50 = arith.cmpf ogt, %48, %49 : vector<8x1x16xf32>
      %cst_35 = arith.constant -1.000000e+30 : f32
      %51 = vector.shape_cast %50 : vector<8x1x16xi1> to vector<8x1x16xi1>
      %52 = vector.broadcast %51 : vector<8x1x16xi1> to vector<8x8x16xi1>
      %53 = vector.broadcast %cst_35 : f32 to vector<8x8x16xf32>
      %54 = arith.select %52, %43, %53 : vector<8x8x16xi1>, vector<8x8x16xf32>
      %cst_36 = arith.constant dense<0xFF800000> : vector<8x8xf32>
      %55 = vector.multi_reduction <maximumf>, %54, %cst_36 [2] : vector<8x8x16xf32> to vector<8x8xf32>
      %56 = vector.shape_cast %55 : vector<8x8xf32> to vector<8x8x1xf32>
      %57 = vector.broadcast %56 : vector<8x8x1xf32> to vector<8x8x16xf32>
      %58 = arith.subf %54, %57 : vector<8x8x16xf32>
      %59 = math.exp %58 : vector<8x8x16xf32>
      %cst_37 = arith.constant dense<0.000000e+00> : vector<8x8xf32>
      %60 = vector.multi_reduction <add>, %59, %cst_37 [2] : vector<8x8x16xf32> to vector<8x8xf32>
      %61 = vector.shape_cast %60 : vector<8x8xf32> to vector<8x8x1xf32>
      %62 = tpu.reciprocal %61 {approx = true} : vector<8x8x1xf32> -> vector<8x8x1xf32>
      %63 = vector.broadcast %62 : vector<8x8x1xf32> to vector<8x8x16xf32>
      %64 = arith.mulf %59, %63 : vector<8x8x16xf32>
      %65 = arith.truncf %64 : vector<8x8x16xf32> to vector<8x8x16xbf16>
      %66 = arith.truncf %40 : vector<8x16x8xf32> to vector<8x16x8xbf16>
      "tpu.trace_start"() <{level = 10 : i32, message = "bqk,bkd->bqd"}> : () -> ()
      %cst_38 = arith.constant dense<0.000000e+00> : vector<8x8x8xf32>
      %67 = tpu.matmul %65, %66, %cst_38 {dimension_numbers = #tpu.dot_dimension_numbers<[2], [1], [1], [2], [0, 0, 0, 1, 1, 2], [0], [0]>} : vector<8x8x16xbf16>, vector<8x16x8xbf16>, vector<8x8x8xf32> -> vector<8x8x8xf32>
      "tpu.trace_stop"() : () -> ()
      %68 = vector.shape_cast %67 : vector<8x8x8xf32> to vector<2x4x8x8xf32>
      %69 = tpu.transpose %68, [0, 2, 1, 3] : vector<2x4x8x8xf32> -> vector<2x8x4x8xf32>
      %70 = vector.shape_cast %69 : vector<2x8x4x8xf32> to vector<16x32xf32>
      %71 = arith.truncf %70 : vector<16x32xf32> to vector<16x32xbf16>
      %c0_39 = arith.constant 0 : index
      %c0_40 = arith.constant 0 : index
      %72 = vector.load %arg11[%c0_39, %c0_40] : memref<32x32xbf16, #tpu.memory_space<vmem>>, vector<32x32xbf16>
      %cst_41 = arith.constant dense<0.000000e+00> : vector<16x32xf32>
      %73 = tpu.matmul %71, %72, %cst_41 {dimension_numbers = #tpu.dot_dimension_numbers<[1], [0], [0], [1], [0, 0, 1, 1], [], []>} : vector<16x32xbf16>, vector<32x32xbf16>, vector<16x32xf32> -> vector<16x32xf32>
      %c0_42 = arith.constant 0 : index
      %c0_43 = arith.constant 0 : index
      %74 = vector.load %arg12[%c0_42, %c0_43] : memref<1x32xf32, #tpu.memory_space<vmem>>, vector<1x32xf32>
      %75 = vector.broadcast %74 : vector<1x32xf32> to vector<16x32xf32>
      %76 = arith.addf %73, %75 : vector<16x32xf32>
      %77 = arith.addf %13, %76 : vector<16x32xf32>
      %78 = vector.shape_cast %77 : vector<16x32xf32> to vector<2x8x32xf32>
      %c0_44 = arith.constant 0 : index
      %c0_45 = arith.constant 0 : index
      %c0_46 = arith.constant 0 : index
      %79 = vector.load %arg17[%c0_44, %c0_45, %c0_46] : memref<2x8x32xf32, #tpu.memory_space<vmem>>, vector<2x8x32xf32>
      tpu.vector_store %arg17[%c0_44, %c0_45, %c0_46], %78 {strides = array<i32>} : memref<2x8x32xf32, #tpu.memory_space<vmem>>, vector<2x8x32xf32>,
      %80 = arith.truncf %77 : vector<16x32xf32> to vector<16x32xbf16>
      %c0_47 = arith.constant 0 : index
      %c0_48 = arith.constant 0 : index
      %81 = vector.load %arg20[%c0_47, %c0_48] : memref<16x32xbf16, #tpu.memory_space<vmem>>, vector<16x32xbf16>
      tpu.vector_store %arg20[%c0_47, %c0_48], %80 {strides = array<i32>} : memref<16x32xbf16, #tpu.memory_space<vmem>>, vector<16x32xbf16>,
      %82 = arith.truncf %77 : vector<16x32xf32> to vector<16x32xbf16>
      %c0_49 = arith.constant 0 : index
      %c0_50 = arith.constant 0 : index
      %83 = vector.load %arg15[%c0_49, %c0_50] : memref<32x2xbf16, #tpu.memory_space<vmem>>, vector<32x2xbf16>
      %cst_51 = arith.constant dense<0.000000e+00> : vector<16x2xf32>
      %84 = tpu.matmul %82, %83, %cst_51 {dimension_numbers = #tpu.dot_dimension_numbers<[1], [0], [0], [1], [0, 0, 1, 1], [], []>} : vector<16x32xbf16>, vector<32x2xbf16>, vector<16x2xf32> -> vector<16x2xf32>
      %c0_52 = arith.constant 0 : index
      %85 = memref.load %arg16[%c0_52] : memref<2xf32, #tpu.memory_space<smem>>
      %c1 = arith.constant 1 : index
      %86 = memref.load %arg16[%c1] : memref<2xf32, #tpu.memory_space<smem>>
      %87 = tpu.iota {dimensions = array<i32: 1>} : vector<16x2xi32>
      %c1_i32 = arith.constant 1 : i32
      %88 = vector.broadcast %c1_i32 : i32 to vector<16x2xi32>
      %89 = arith.cmpi eq, %87, %88 : vector<16x2xi32>
      %90 = vector.broadcast %86 : f32 to vector<16x2xf32>
      %91 = arith.addf %84, %90 : vector<16x2xf32>
      %92 = arith.negf %91 : vector<16x2xf32>
      %93 = math.exp %92 : vector<16x2xf32>
      %cst_53 = arith.constant 1.000000e+00 : f32
      %94 = vector.broadcast %cst_53 : f32 to vector<16x2xf32>
      %95 = arith.addf %94, %93 : vector<16x2xf32>
      %96 = arith.divf %94, %95 : vector<16x2xf32>
      %97 = vector.broadcast %85 : f32 to vector<16x2xf32>
      %98 = arith.addf %84, %97 : vector<16x2xf32>
      %99 = arith.select %89, %96, %98 : vector<16x2xi1>, vector<16x2xf32>
      %100 = vector.shape_cast %99 : vector<16x2xf32> to vector<2x8x2xf32>
      %c0_54 = arith.constant 0 : index
      %c0_55 = arith.constant 0 : index
      %c0_56 = arith.constant 0 : index
      %101 = vector.load %arg19[%c0_54, %c0_55, %c0_56] : memref<2x8x2xf32, #tpu.memory_space<vmem>>, vector<2x8x2xf32>
      tpu.vector_store %arg19[%c0_54, %c0_55, %c0_56], %100 {strides = array<i32>} : memref<2x8x2xf32, #tpu.memory_space<vmem>>, vector<2x8x2xf32>,
    } else {
    }
    %c0 = arith.constant 0 : index
    %c0_1 = arith.constant 0 : index
    %3 = vector.load %arg20[%c0, %c0_1] : memref<16x32xbf16, #tpu.memory_space<vmem>>, vector<16x32xbf16>
    %c0_2 = arith.constant 0 : index
    %c0_3 = arith.constant 0 : index
    %4 = vector.load %arg13[%c0_2, %c0_3] : memref<32x256xbf16, #tpu.memory_space<vmem>>, vector<32x256xbf16>
    %cst = arith.constant dense<0.000000e+00> : vector<16x256xf32>
    %5 = tpu.matmul %3, %4, %cst {dimension_numbers = #tpu.dot_dimension_numbers<[1], [0], [0], [1], [0, 0, 1, 1], [], []>} : vector<16x32xbf16>, vector<32x256xbf16>, vector<16x256xf32> -> vector<16x256xf32>
    %c0_4 = arith.constant 0 : index
    %c0_5 = arith.constant 0 : index
    %6 = vector.load %arg14[%c0_4, %c0_5] : memref<1x256xf32, #tpu.memory_space<vmem>>, vector<1x256xf32>
    %7 = vector.broadcast %6 : vector<1x256xf32> to vector<16x256xf32>
    %8 = arith.addf %5, %7 : vector<16x256xf32>
    %9 = vector.shape_cast %8 : vector<16x256xf32> to vector<2x8x256xf32>
    %10 = arith.truncf %9 : vector<2x8x256xf32> to vector<2x8x256xbf16>
    %c0_6 = arith.constant 0 : index
    %c0_7 = arith.constant 0 : index
    %c0_8 = arith.constant 0 : index
    %11 = vector.load %arg18[%c0_6, %c0_7, %c0_8] : memref<2x8x256xbf16, #tpu.memory_space<vmem>>, vector<2x8x256xbf16>
    tpu.vector_store %arg18[%c0_6, %c0_7, %c0_8], %10 {strides = array<i32>} : memref<2x8x256xbf16, #tpu.memory_space<vmem>>, vector<2x8x256xbf16>,
    return
  }
  func.func @transform_0(%arg0: i32, %arg1: i32) -> (i32, i32, i32) {
    %c0_i32 = arith.constant 0 : i32
    %c0_i32_0 = arith.constant 0 : i32
    %c0_i32_1 = arith.constant 0 : i32
    return %arg0, %c0_i32, %c0_i32_0 : i32, i32, i32
  }
  func.func @transform_1(%arg0: i32, %arg1: i32) -> (i32, i32, i32) {
    %c0_i32 = arith.constant 0 : i32
    %c0_i32_0 = arith.constant 0 : i32
    %c0_i32_1 = arith.constant 0 : i32
    return %arg0, %c0_i32, %c0_i32_0 : i32, i32, i32
  }
  func.func @transform_2(%arg0: i32, %arg1: i32) -> (i32, i32, i32) {
    %c0_i32 = arith.constant 0 : i32
    %c0_i32_0 = arith.constant 0 : i32
    %c0_i32_1 = arith.constant 0 : i32
    return %arg0, %c0_i32, %c0_i32_0 : i32, i32, i32
  }
  func.func @transform_3(%arg0: i32, %arg1: i32) -> (i32, i32) {
    %c0_i32 = arith.constant 0 : i32
    %c0_i32_0 = arith.constant 0 : i32
    %c0_i32_1 = arith.constant 0 : i32
    return %c0_i32, %c0_i32_0 : i32, i32
  }
  func.func @transform_4(%arg0: i32, %arg1: i32) -> (i32, i32) {
    %c0_i32 = arith.constant 0 : i32
    %c0_i32_0 = arith.constant 0 : i32
    %c0_i32_1 = arith.constant 0 : i32
    return %c0_i32, %c0_i32_0 : i32, i32
  }
  func.func @transform_5(%arg0: i32, %arg1: i32) -> (i32, i32) {
    %c0_i32 = arith.constant 0 : i32
    %c0_i32_0 = arith.constant 0 : i32
    %c0_i32_1 = arith.constant 0 : i32
    return %c0_i32, %c0_i32_0 : i32, i32
  }
  func.func @transform_6(%arg0: i32, %arg1: i32) -> (i32, i32) {
    %c0_i32 = arith.constant 0 : i32
    %c0_i32_0 = arith.constant 0 : i32
    %c0_i32_1 = arith.constant 0 : i32
    return %c0_i32, %c0_i32_0 : i32, i32
  }
  func.func @transform_7(%arg0: i32, %arg1: i32) -> (i32, i32) {
    %c0_i32 = arith.constant 0 : i32
    %c0_i32_0 = arith.constant 0 : i32
    %c0_i32_1 = arith.constant 0 : i32
    return %c0_i32, %c0_i32_0 : i32, i32
  }
  func.func @transform_8(%arg0: i32, %arg1: i32) -> (i32, i32) {
    %c0_i32 = arith.constant 0 : i32
    %c0_i32_0 = arith.constant 0 : i32
    %c0_i32_1 = arith.constant 0 : i32
    return %c0_i32, %c0_i32_0 : i32, i32
  }
  func.func @transform_9(%arg0: i32, %arg1: i32) -> (i32, i32) {
    %c0_i32 = arith.constant 0 : i32
    %c0_i32_0 = arith.constant 0 : i32
    %c0_i32_1 = arith.constant 0 : i32
    return %c0_i32, %c0_i32_0 : i32, i32
  }
  func.func @transform_10(%arg0: i32, %arg1: i32) -> (i32, i32) {
    %c0_i32 = arith.constant 0 : i32
    %c0_i32_0 = arith.constant 0 : i32
    %c0_i32_1 = arith.constant 0 : i32
    return %c0_i32, %c0_i32_0 : i32, i32
  }
  func.func @transform_11(%arg0: i32, %arg1: i32) -> (i32, i32) {
    %c0_i32 = arith.constant 0 : i32
    %c0_i32_0 = arith.constant 0 : i32
    return %c0_i32, %arg1 : i32, i32
  }
  func.func @transform_12(%arg0: i32, %arg1: i32) -> (i32, i32) {
    %c0_i32 = arith.constant 0 : i32
    %c0_i32_0 = arith.constant 0 : i32
    return %c0_i32, %arg1 : i32, i32
  }
  func.func @transform_13(%arg0: i32, %arg1: i32) -> (i32, i32) {
    %c0_i32 = arith.constant 0 : i32
    %c0_i32_0 = arith.constant 0 : i32
    %c0_i32_1 = arith.constant 0 : i32
    return %c0_i32, %c0_i32_0 : i32, i32
  }
  func.func @transform_14(%arg0: i32, %arg1: i32) -> i32 {
    %c0_i32 = arith.constant 0 : i32
    %c0_i32_0 = arith.constant 0 : i32
    return %c0_i32 : i32
  }
  func.func @transform_15(%arg0: i32, %arg1: i32) -> (i32, i32, i32) {
    %c0_i32 = arith.constant 0 : i32
    %c0_i32_0 = arith.constant 0 : i32
    %c0_i32_1 = arith.constant 0 : i32
    return %arg0, %c0_i32, %c0_i32_0 : i32, i32, i32
  }
  func.func @transform_16(%arg0: i32, %arg1: i32) -> (i32, i32, i32) {
    %c0_i32 = arith.constant 0 : i32
    %c0_i32_0 = arith.constant 0 : i32
    return %arg0, %c0_i32, %arg1 : i32, i32, i32
  }
  func.func @transform_17(%arg0: i32, %arg1: i32) -> (i32, i32, i32) {
    %c0_i32 = arith.constant 0 : i32
    %c0_i32_0 = arith.constant 0 : i32
    %c0_i32_1 = arith.constant 0 : i32
    return %arg0, %c0_i32, %c0_i32_0 : i32, i32, i32
  }
}

</mosaic_0001>

<llo_original>
// kernel: tpu_custom_call.1
$region0: #{tpu_custom_call.1}
  #allocation0 [shape = 'u32[]', space=smem, size = 0x4, offset = 0x4, fixed_abs, tag = 'smem constant byte address 0x4 - core index']
  #allocation1 [shape = 'u32[144,128]{1,0:T(1,128)}', space=vmem, size = 0x12000, scoped, tag = 'internal scratch']
  #allocation2 [shape = 'bf16[16,32]{1,0:T(16,128)(2,1)}', space=vmem, size = 0x1000, scoped, tag = 'scratch operand']
  %s0 = inlined_call_operand.hbm [shape: f32[4,8,32], index: 0, kind: input, shape index: {}]
  %s1 = inlined_call_operand.hbm [shape: bf16[4,16,32], index: 1, kind: input, shape index: {}]
  %s2 = inlined_call_operand.vmem [shape: f32[4,1,16], index: 2, kind: input, shape index: {}]
  %s3 = inlined_call_operand.vmem [shape: bf16[32,32], index: 3, kind: input, shape index: {}]
  %s4 = inlined_call_operand.vmem [shape: f32[1,32], index: 4, kind: input, shape index: {}]
  %s5 = inlined_call_operand.hbm [shape: bf16[32,32], index: 5, kind: input, shape index: {}]
  %s6 = inlined_call_operand.vmem [shape: f32[1,32], index: 6, kind: input, shape index: {}]
  %s7 = inlined_call_operand.hbm [shape: bf16[32,32], index: 7, kind: input, shape index: {}]
  %s8 = inlined_call_operand.vmem [shape: f32[1,32], index: 8, kind: input, shape index: {}]
  %s9 = inlined_call_operand.hbm [shape: bf16[32,32], index: 9, kind: input, shape index: {}]
  %s10 = inlined_call_operand.vmem [shape: f32[1,32], index: 10, kind: input, shape index: {}]
  %s11 = inlined_call_operand.vmem [shape: bf16[32,256], index: 11, kind: input, shape index: {}]
  %s12 = inlined_call_operand.vmem [shape: f32[1,256], index: 12, kind: input, shape index: {}]
  %s13 = inlined_call_operand.vmem [shape: bf16[32,2], index: 13, kind: input, shape index: {}]
  %s14 = inlined_call_operand.vmem [shape: f32[2], index: 14, kind: input, shape index: {}]
  %s15 = inlined_call_operand.hbm [shape: f32[4,8,32], index: 15, kind: output, shape index: {0}]
  %s16 = inlined_call_operand.hbm [shape: bf16[4,8,256], index: 16, kind: output, shape index: {1}]
  %s17 = inlined_call_operand.vmem [shape: f32[4,8,2], index: 17, kind: output, shape index: {2}]
  %18 = xla_tuple %s15, %s16, %s17
  %s19 = sld [smem:[#allocation0]]
  $region137: #{tpu_custom_call.1} parent=0
    _
  %s21 = ssub.s32 1, %s19
  %s22 = scalar_select 0, %s21, %s19
  $region1: #{tpu_custom_call.1} parent=0
    #allocation3 [shape = 'u8[16384]{0}', space=vmem, size = 0x4000, scoped, tag = 'input window, operand 0']
    #allocation4 [shape = 's32[2]{0}', space=sflag, size = 0x8, scoped, tag = 'scoped memory for tpu_custom_call.1']
    #allocation5 [shape = 's32[2]{0}', space=sflag, size = 0x8, scoped, tag = 'scoped memory for tpu_custom_call.1']
    #allocation6 [shape = 's32[2]{0}', space=sflag, size = 0x8, scoped, tag = 'scoped memory for tpu_custom_call.1']
    #allocation7 [shape = 'u8[16384]{0}', space=vmem, size = 0x4000, scoped, tag = 'input window, operand 1']
    #allocation8 [shape = 's32[2]{0}', space=sflag, size = 0x8, scoped, tag = 'scoped memory for tpu_custom_call.1']
    #allocation9 [shape = 'u8[8192]{0}', space=vmem, size = 0x2000, scoped, tag = 'input window, operand 5, single buffered']
    #allocation10 [shape = 'u8[8192]{0}', space=vmem, size = 0x2000, scoped, tag = 'input window, operand 7, single buffered']
    #allocation11 [shape = 's32[1]{0}', space=sflag, size = 0x4, scoped, tag = 'scoped memory for tpu_custom_call.1']
    #allocation12 [shape = 'u8[8192]{0}', space=vmem, size = 0x2000, scoped, tag = 'input window, operand 9, single buffered']
    #allocation13 [shape = 'u8[512]{0}', space=smem, size = 0x200, scoped, tag = 'input window, operand 14, single buffered']
    #allocation14 [shape = 'u8[16384]{0}', space=vmem, size = 0x4000, scoped, tag = 'output window, operand 0']
    #allocation15 [shape = 'u8[16384]{0}', space=vmem, size = 0x4000, scoped, tag = 'output window, operand 1']
    #allocation16 [shape = 's32[2]{0}', space=sflag, size = 0x8, scoped, tag = 'scoped memory for tpu_custom_call.1']
    %23 = vsyncpa [#allocation4], 0
    %s24 = scalar_lea.sflag [#allocation4], 1
    %25 = vsyncpa %s24, 0
    %26 = vsyncpa [#allocation8], 0
    %s27 = scalar_lea.sflag [#allocation8], 1
    %28 = vsyncpa %s27, 0
    %29 = vsyncpa [#allocation11], 0
    %30 = vsyncpa [#allocation6], 0
    %31 = vsyncpa [#allocation5], 0
    %s32 = scalar_lea.sflag [#allocation5], 1
    %33 = vsyncpa %s32, 0
    %34 = vsyncpa [#allocation16], 0
    %s35 = scalar_lea.sflag [#allocation16], 1
    %36 = vsyncpa %s35, 0
    loop: start=0, step=1, limit=4
    $region2: #{tpu_custom_call.1} parent=1 // loop_pre_header
      _
    $region3: #{tpu_custom_call.1} parent=1 // loop_header
      %s38 = sphi 0, %s42
      %p39 = scmp.ge.s32.totalorder %s38, 4
      %s45 = sphi 0, %s57
      %s46 = sphi 0, %s53
      %s47 = sphi 0, %s45
      %s48 = sphi 0, %s46
      %s49 = sphi 0, %s47
      %s50 = sphi 0, %s48
      %s60 = sphi 0, %s62
      %s63 = sphi 0, %s60
      %s64 = sphi 0, %s63
      %s80 = sphi 0, %s64
      %s86 = sphi 0, %s88
      %s89 = sphi 0, %s86
      %s90 = sphi 0, %s89
      %s106 = sphi 0, %s90
      %s112 = sphi 0, %s114
      %s115 = sphi 0, %s112
      %s116 = sphi 0, %s115
      %s132 = sphi 0, %s116
      %s136 = sphi 0, %s136
      %s138 = sphi 0, %s136
      %s139 = sphi 0, %s138
      %s153 = sphi 0, %s139
      %s157 = sphi 0, %s157
      %s159 = sphi 0, %s157
      %s160 = sphi 0, %s159
      %s174 = sphi 0, %s160
      %s178 = sphi 0, %s178
      %s180 = sphi 0, %s178
      %s181 = sphi 0, %s180
      %s195 = sphi 0, %s181
      %s199 = sphi 0, %s199
      %s201 = sphi 0, %s199
      %s202 = sphi 0, %s201
      %s216 = sphi 0, %s202
      %s220 = sphi 0, %s220
      %s222 = sphi 0, %s220
      %s223 = sphi 0, %s222
      %s237 = sphi 0, %s223
      %s241 = sphi 0, %s241
      %s243 = sphi 0, %s241
      %s244 = sphi 0, %s243
      %s258 = sphi 0, %s244
      %s262 = sphi 0, %s262
      %s264 = sphi 0, %s262
      %s265 = sphi 0, %s264
      %s279 = sphi 0, %s265
      %s283 = sphi 0, %s283
      %s285 = sphi 0, %s283
      %s286 = sphi 0, %s285
      %s300 = sphi 0, %s286
      %s306 = sphi 0, %s308
      %s309 = sphi 0, %s306
      %s310 = sphi 0, %s309
      %s326 = sphi 0, %s310
      %s332 = sphi 0, %s334
      %s335 = sphi 0, %s332
      %s336 = sphi 0, %s335
      %s352 = sphi 0, %s336
      %s356 = sphi 0, %s356
      %s358 = sphi 0, %s356
      %s359 = sphi 0, %s358
      %s373 = sphi 0, %s359
      %s377 = sphi 0, %s377
      %s379 = sphi 0, %s377
      %s380 = sphi 0, %s379
      %s394 = sphi 0, %s380
      %s400 = sphi 0, %s402
      %s403 = sphi 0, %s400
      %s404 = sphi 0, %s403
      %s420 = sphi 0, %s404
      %s428 = sphi 0, %s430
      %s431 = sphi 0, %s428
      %s432 = sphi 0, %s431
      %s448 = sphi 0, %s432
      %s454 = sphi 0, %s456
      %s457 = sphi 0, %s454
      %s458 = sphi 0, %s457
      %s474 = sphi 0, %s458
    $region4: #{tpu_custom_call.1} parent=1 // loop_header_branch
      %41 = sbr.rel (%p39) target = $region8
    $region5: #{tpu_custom_call.1} parent=1 // loop_body
      %s43 = ssub.s32 %s38, 1
      %s44 = ssub.s32 %s38, 2
      %s51 = sadd.s32 1, %s46
      %p52 = scmp.ge.s32.totalorder %s51, 1
      %s53 = scalar_select %p52, 0, %s51
      %s54 = sadd.s32 1, %s45
      %s55 = scalar_select %p52, %s54, %s45
      %p56 = scmp.ge.s32.totalorder %s55, 2
      %s57 = scalar_select %p56, 0, %s55
      %s58 = ssub.s32 %s45, %s57
      %p59 = scmp.eq.s32.totalorder %s58, 0
      %s61 = sadd.s32 %s60, 1
      %s62 = scalar_select %p59, %s60, %s61
      %p65 = pneg %p59
      %p66 = scmp.eq.s32.totalorder %s38, 1
      %p67 = por %p65, %p66
      %p68 = scmp.ne.s32.totalorder %s60, %s63
      %p69 = scmp.eq.s32.totalorder %s38, 0
      %p70 = por %p68, %p69
      %p71 = scmp.ne.s32.totalorder %s60, %s63
      %p72 = scmp.eq.s32.totalorder %s43, 1
      %p73 = por %p71, %p72
      %p74 = scmp.ne.s32.totalorder %s63, %s64
      %p75 = scmp.eq.s32.totalorder %s43, 0
      %p76 = por %p74, %p75
      %p77 = scmp.ne.s32.totalorder %s63, %s64
      %p78 = scmp.eq.s32.totalorder %s44, 1
      %p79 = por %p77, %p78
      %p81 = scmp.ne.s32.totalorder %s64, %s80
      %p82 = scmp.eq.s32.totalorder %s44, 0
      %p83 = por %p81, %p82
      %s84 = ssub.s32 %s45, %s57
      %p85 = scmp.eq.s32.totalorder %s84, 0
      %s87 = sadd.s32 %s86, 1
      %s88 = scalar_select %p85, %s86, %s87
      %p91 = pneg %p85
      %p92 = scmp.eq.s32.totalorder %s38, 1
      %p93 = por %p91, %p92
      %p94 = scmp.ne.s32.totalorder %s86, %s89
      %p95 = scmp.eq.s32.totalorder %s38, 0
      %p96 = por %p94, %p95
      %p97 = scmp.ne.s32.totalorder %s86, %s89
      %p98 = scmp.eq.s32.totalorder %s43, 1
      %p99 = por %p97, %p98
      %p100 = scmp.ne.s32.totalorder %s89, %s90
      %p101 = scmp.eq.s32.totalorder %s43, 0
      %p102 = por %p100, %p101
      %p103 = scmp.ne.s32.totalorder %s89, %s90
      %p104 = scmp.eq.s32.totalorder %s44, 1
      %p105 = por %p103, %p104
      %p107 = scmp.ne.s32.totalorder %s90, %s106
      %p108 = scmp.eq.s32.totalorder %s44, 0
      %p109 = por %p107, %p108
      %s110 = ssub.s32 %s45, %s57
      %p111 = scmp.eq.s32.totalorder %s110, 0
      %s113 = sadd.s32 %s112, 1
      %s114 = scalar_select %p111, %s112, %s113
      %p117 = pneg %p111
      %p118 = scmp.eq.s32.totalorder %s38, 1
      %p119 = por %p117, %p118
      %p120 = scmp.ne.s32.totalorder %s112, %s115
      %p121 = scmp.eq.s32.totalorder %s38, 0
      %p122 = por %p120, %p121
      %p123 = scmp.ne.s32.totalorder %s112, %s115
      %p124 = scmp.eq.s32.totalorder %s43, 1
      %p125 = por %p123, %p124
      %p126 = scmp.ne.s32.totalorder %s115, %s116
      %p127 = scmp.eq.s32.totalorder %s43, 0
      %p128 = por %p126, %p127
      %p129 = scmp.ne.s32.totalorder %s115, %s116
      %p130 = scmp.eq.s32.totalorder %s44, 1
      %p131 = por %p129, %p130
      %p133 = scmp.ne.s32.totalorder %s116, %s132
      %p134 = scmp.eq.s32.totalorder %s44, 0
      %p135 = por %p133, %p134
      %s137 = sadd.s32 %s136, 1
      %p140 = scmp.eq.s32.totalorder %s38, 1
      %p141 = scmp.ne.s32.totalorder %s136, %s138
      %p142 = scmp.eq.s32.totalorder %s38, 0
      %p143 = por %p141, %p142
      %p144 = scmp.ne.s32.totalorder %s136, %s138
      %p145 = scmp.eq.s32.totalorder %s43, 1
      %p146 = por %p144, %p145
      %p147 = scmp.ne.s32.totalorder %s138, %s139
      %p148 = scmp.eq.s32.totalorder %s43, 0
      %p149 = por %p147, %p148
      %p150 = scmp.ne.s32.totalorder %s138, %s139
      %p151 = scmp.eq.s32.totalorder %s44, 1
      %p152 = por %p150, %p151
      %p154 = scmp.ne.s32.totalorder %s139, %s153
      %p155 = scmp.eq.s32.totalorder %s44, 0
      %p156 = por %p154, %p155
      %s158 = sadd.s32 %s157, 1
      %p161 = scmp.eq.s32.totalorder %s38, 1
      %p162 = scmp.ne.s32.totalorder %s157, %s159
      %p163 = scmp.eq.s32.totalorder %s38, 0
      %p164 = por %p162, %p163
      %p165 = scmp.ne.s32.totalorder %s157, %s159
      %p166 = scmp.eq.s32.totalorder %s43, 1
      %p167 = por %p165, %p166
      %p168 = scmp.ne.s32.totalorder %s159, %s160
      %p169 = scmp.eq.s32.totalorder %s43, 0
      %p170 = por %p168, %p169
      %p171 = scmp.ne.s32.totalorder %s159, %s160
      %p172 = scmp.eq.s32.totalorder %s44, 1
      %p173 = por %p171, %p172
      %p175 = scmp.ne.s32.totalorder %s160, %s174
      %p176 = scmp.eq.s32.totalorder %s44, 0
      %p177 = por %p175, %p176
      %s179 = sadd.s32 %s178, 1
      %p182 = scmp.eq.s32.totalorder %s38, 1
      %p183 = scmp.ne.s32.totalorder %s178, %s180
      %p184 = scmp.eq.s32.totalorder %s38, 0
      %p185 = por %p183, %p184
      %p186 = scmp.ne.s32.totalorder %s178, %s180
      %p187 = scmp.eq.s32.totalorder %s43, 1
      %p188 = por %p186, %p187
      %p189 = scmp.ne.s32.totalorder %s180, %s181
      %p190 = scmp.eq.s32.totalorder %s43, 0
      %p191 = por %p189, %p190
      %p192 = scmp.ne.s32.totalorder %s180, %s181
      %p193 = scmp.eq.s32.totalorder %s44, 1
      %p194 = por %p192, %p193
      %p196 = scmp.ne.s32.totalorder %s181, %s195
      %p197 = scmp.eq.s32.totalorder %s44, 0
      %p198 = por %p196, %p197
      %s200 = sadd.s32 %s199, 1
      %p203 = scmp.eq.s32.totalorder %s38, 1
      %p204 = scmp.ne.s32.totalorder %s199, %s201
      %p205 = scmp.eq.s32.totalorder %s38, 0
      %p206 = por %p204, %p205
      %p207 = scmp.ne.s32.totalorder %s199, %s201
      %p208 = scmp.eq.s32.totalorder %s43, 1
      %p209 = por %p207, %p208
      %p210 = scmp.ne.s32.totalorder %s201, %s202
      %p211 = scmp.eq.s32.totalorder %s43, 0
      %p212 = por %p210, %p211
      %p213 = scmp.ne.s32.totalorder %s201, %s202
      %p214 = scmp.eq.s32.totalorder %s44, 1
      %p215 = por %p213, %p214
      %p217 = scmp.ne.s32.totalorder %s202, %s216
      %p218 = scmp.eq.s32.totalorder %s44, 0
      %p219 = por %p217, %p218
      %s221 = sadd.s32 %s220, 1
      %p224 = scmp.eq.s32.totalorder %s38, 1
      %p225 = scmp.ne.s32.totalorder %s220, %s222
      %p226 = scmp.eq.s32.totalorder %s38, 0
      %p227 = por %p225, %p226
      %p228 = scmp.ne.s32.totalorder %s220, %s222
      %p229 = scmp.eq.s32.totalorder %s43, 1
      %p230 = por %p228, %p229
      %p231 = scmp.ne.s32.totalorder %s222, %s223
      %p232 = scmp.eq.s32.totalorder %s43, 0
      %p233 = por %p231, %p232
      %p234 = scmp.ne.s32.totalorder %s222, %s223
      %p235 = scmp.eq.s32.totalorder %s44, 1
      %p236 = por %p234, %p235
      %p238 = scmp.ne.s32.totalorder %s223, %s237
      %p239 = scmp.eq.s32.totalorder %s44, 0
      %p240 = por %p238, %p239
      %s242 = sadd.s32 %s241, 1
      %p245 = scmp.eq.s32.totalorder %s38, 1
      %p246 = scmp.ne.s32.totalorder %s241, %s243
      %p247 = scmp.eq.s32.totalorder %s38, 0
      %p248 = por %p246, %p247
      %p249 = scmp.ne.s32.totalorder %s241, %s243
      %p250 = scmp.eq.s32.totalorder %s43, 1
      %p251 = por %p249, %p250
      %p252 = scmp.ne.s32.totalorder %s243, %s244
      %p253 = scmp.eq.s32.totalorder %s43, 0
      %p254 = por %p252, %p253
      %p255 = scmp.ne.s32.totalorder %s243, %s244
      %p256 = scmp.eq.s32.totalorder %s44, 1
      %p257 = por %p255, %p256
      %p259 = scmp.ne.s32.totalorder %s244, %s258
      %p260 = scmp.eq.s32.totalorder %s44, 0
      %p261 = por %p259, %p260
      %s263 = sadd.s32 %s262, 1
      %p266 = scmp.eq.s32.totalorder %s38, 1
      %p267 = scmp.ne.s32.totalorder %s262, %s264
      %p268 = scmp.eq.s32.totalorder %s38, 0
      %p269 = por %p267, %p268
      %p270 = scmp.ne.s32.totalorder %s262, %s264
      %p271 = scmp.eq.s32.totalorder %s43, 1
      %p272 = por %p270, %p271
      %p273 = scmp.ne.s32.totalorder %s264, %s265
      %p274 = scmp.eq.s32.totalorder %s43, 0
      %p275 = por %p273, %p274
      %p276 = scmp.ne.s32.totalorder %s264, %s265
      %p277 = scmp.eq.s32.totalorder %s44, 1
      %p278 = por %p276, %p277
      %p280 = scmp.ne.s32.totalorder %s265, %s279
      %p281 = scmp.eq.s32.totalorder %s44, 0
      %p282 = por %p280, %p281
      %s284 = sadd.s32 %s283, 1
      %p287 = scmp.eq.s32.totalorder %s38, 1
      %p288 = scmp.ne.s32.totalorder %s283, %s285
      %p289 = scmp.eq.s32.totalorder %s38, 0
      %p290 = por %p288, %p289
      %p291 = scmp.ne.s32.totalorder %s283, %s285
      %p292 = scmp.eq.s32.totalorder %s43, 1
      %p293 = por %p291, %p292
      %p294 = scmp.ne.s32.totalorder %s285, %s286
      %p295 = scmp.eq.s32.totalorder %s43, 0
      %p296 = por %p294, %p295
      %p297 = scmp.ne.s32.totalorder %s285, %s286
      %p298 = scmp.eq.s32.totalorder %s44, 1
      %p299 = por %p297, %p298
      %p301 = scmp.ne.s32.totalorder %s286, %s300
      %p302 = scmp.eq.s32.totalorder %s44, 0
      %p303 = por %p301, %p302
      %s304 = ssub.s32 %s46, %s53
      %p305 = scmp.eq.s32.totalorder %s304, 0
      %s307 = sadd.s32 %s306, 1
      %s308 = scalar_select %p305, %s306, %s307
      %p311 = pneg %p305
      %p312 = scmp.eq.s32.totalorder %s38, 1
      %p313 = por %p311, %p312
      %p314 = scmp.ne.s32.totalorder %s306, %s309
      %p315 = scmp.eq.s32.totalorder %s38, 0
      %p316 = por %p314, %p315
      %p317 = scmp.ne.s32.totalorder %s306, %s309
      %p318 = scmp.eq.s32.totalorder %s43, 1
      %p319 = por %p317, %p318
      %p320 = scmp.ne.s32.totalorder %s309, %s310
      %p321 = scmp.eq.s32.totalorder %s43, 0
      %p322 = por %p320, %p321
      %p323 = scmp.ne.s32.totalorder %s309, %s310
      %p324 = scmp.eq.s32.totalorder %s44, 1
      %p325 = por %p323, %p324
      %p327 = scmp.ne.s32.totalorder %s310, %s326
      %p328 = scmp.eq.s32.totalorder %s44, 0
      %p329 = por %p327, %p328
      %s330 = ssub.s32 %s46, %s53
      %p331 = scmp.eq.s32.totalorder %s330, 0
      %s333 = sadd.s32 %s332, 1
      %s334 = scalar_select %p331, %s332, %s333
      %p337 = pneg %p331
      %p338 = scmp.eq.s32.totalorder %s38, 1
      %p339 = por %p337, %p338
      %p340 = scmp.ne.s32.totalorder %s332, %s335
      %p341 = scmp.eq.s32.totalorder %s38, 0
      %p342 = por %p340, %p341
      %p343 = scmp.ne.s32.totalorder %s332, %s335
      %p344 = scmp.eq.s32.totalorder %s43, 1
      %p345 = por %p343, %p344
      %p346 = scmp.ne.s32.totalorder %s335, %s336
      %p347 = scmp.eq.s32.totalorder %s43, 0
      %p348 = por %p346, %p347
      %p349 = scmp.ne.s32.totalorder %s335, %s336
      %p350 = scmp.eq.s32.totalorder %s44, 1
      %p351 = por %p349, %p350
      %p353 = scmp.ne.s32.totalorder %s336, %s352
      %p354 = scmp.eq.s32.totalorder %s44, 0
      %p355 = por %p353, %p354
      %s357 = sadd.s32 %s356, 1
      %p360 = scmp.eq.s32.totalorder %s38, 1
      %p361 = scmp.ne.s32.totalorder %s356, %s358
      %p362 = scmp.eq.s32.totalorder %s38, 0
      %p363 = por %p361, %p362
      %p364 = scmp.ne.s32.totalorder %s356, %s358
      %p365 = scmp.eq.s32.totalorder %s43, 1
      %p366 = por %p364, %p365
      %p367 = scmp.ne.s32.totalorder %s358, %s359
      %p368 = scmp.eq.s32.totalorder %s43, 0
      %p369 = por %p367, %p368
      %p370 = scmp.ne.s32.totalorder %s358, %s359
      %p371 = scmp.eq.s32.totalorder %s44, 1
      %p372 = por %p370, %p371
      %p374 = scmp.ne.s32.totalorder %s359, %s373
      %p375 = scmp.eq.s32.totalorder %s44, 0
      %p376 = por %p374, %p375
      %s378 = sadd.s32 %s377, 1
      %p381 = scmp.eq.s32.totalorder %s38, 1
      %p382 = scmp.ne.s32.totalorder %s377, %s379
      %p383 = scmp.eq.s32.totalorder %s38, 0
      %p384 = por %p382, %p383
      %p385 = scmp.ne.s32.totalorder %s377, %s379
      %p386 = scmp.eq.s32.totalorder %s43, 1
      %p387 = por %p385, %p386
      %p388 = scmp.ne.s32.totalorder %s379, %s380
      %p389 = scmp.eq.s32.totalorder %s43, 0
      %p390 = por %p388, %p389
      %p391 = scmp.ne.s32.totalorder %s379, %s380
      %p392 = scmp.eq.s32.totalorder %s44, 1
      %p393 = por %p391, %p392
      %p395 = scmp.ne.s32.totalorder %s380, %s394
      %p396 = scmp.eq.s32.totalorder %s44, 0
      %p397 = por %p395, %p396
      %s398 = ssub.s32 %s45, %s57
      %p399 = scmp.eq.s32.totalorder %s398, 0
      %s401 = sadd.s32 %s400, 1
      %s402 = scalar_select %p399, %s400, %s401
      %p405 = pneg %p399
      %p406 = scmp.eq.s32.totalorder %s38, 1
      %p407 = por %p405, %p406
      %p408 = scmp.ne.s32.totalorder %s400, %s403
      %p409 = scmp.eq.s32.totalorder %s38, 0
      %p410 = por %p408, %p409
      %p411 = scmp.ne.s32.totalorder %s400, %s403
      %p412 = scmp.eq.s32.totalorder %s43, 1
      %p413 = por %p411, %p412
      %p414 = scmp.ne.s32.totalorder %s403, %s404
      %p415 = scmp.eq.s32.totalorder %s43, 0
      %p416 = por %p414, %p415
      %p417 = scmp.ne.s32.totalorder %s403, %s404
      %p418 = scmp.eq.s32.totalorder %s44, 1
      %p419 = por %p417, %p418
      %p421 = scmp.ne.s32.totalorder %s404, %s420
      %p422 = scmp.eq.s32.totalorder %s44, 0
      %p423 = por %p421, %p422
      %s424 = ssub.s32 %s45, %s57
      %s425 = ssub.s32 %s46, %s53
      %s426 = sor.u32 %s424, %s425
      %p427 = scmp.eq.s32.totalorder %s426, 0
      %s429 = sadd.s32 %s428, 1
      %s430 = scalar_select %p427, %s428, %s429
      %p433 = pneg %p427
      %p434 = scmp.eq.s32.totalorder %s38, 1
      %p435 = por %p433, %p434
      %p436 = scmp.ne.s32.totalorder %s428, %s431
      %p437 = scmp.eq.s32.totalorder %s38, 0
      %p438 = por %p436, %p437
      %p439 = scmp.ne.s32.totalorder %s428, %s431
      %p440 = scmp.eq.s32.totalorder %s43, 1
      %p441 = por %p439, %p440
      %p442 = scmp.ne.s32.totalorder %s431, %s432
      %p443 = scmp.eq.s32.totalorder %s43, 0
      %p444 = por %p442, %p443
      %p445 = scmp.ne.s32.totalorder %s431, %s432
      %p446 = scmp.eq.s32.totalorder %s44, 1
      %p447 = por %p445, %p446
      %p449 = scmp.ne.s32.totalorder %s432, %s448
      %p450 = scmp.eq.s32.totalorder %s44, 0
      %p451 = por %p449, %p450
      %s452 = ssub.s32 %s45, %s57
      %p453 = scmp.eq.s32.totalorder %s452, 0
      %s455 = sadd.s32 %s454, 1
      %s456 = scalar_select %p453, %s454, %s455
      %p459 = pneg %p453
      %p460 = scmp.eq.s32.totalorder %s38, 1
      %p461 = por %p459, %p460
      %p462 = scmp.ne.s32.totalorder %s454, %s457
      %p463 = scmp.eq.s32.totalorder %s38, 0
      %p464 = por %p462, %p463
      %p465 = scmp.ne.s32.totalorder %s454, %s457
      %p466 = scmp.eq.s32.totalorder %s43, 1
      %p467 = por %p465, %p466
      %p468 = scmp.ne.s32.totalorder %s457, %s458
      %p469 = scmp.eq.s32.totalorder %s43, 0
      %p470 = por %p468, %p469
      %p471 = scmp.ne.s32.totalorder %s457, %s458
      %p472 = scmp.eq.s32.totalorder %s44, 1
      %p473 = por %p471, %p472
      %p475 = scmp.ne.s32.totalorder %s458, %s474
      %p476 = scmp.eq.s32.totalorder %s44, 0
      %p477 = por %p475, %p476
      %p478 = scmp.le.s32.totalorder 1, %s38
      %p479 = scmp.lt.s32.totalorder %s38, 3
      %p480 = pnand %p478, %p479
      %p481 = pneg %p480
      // Predicated region
      $region9: #{tpu_custom_call.1} parent=5 // pred_check
        _
      $region10: #{tpu_custom_call.1} parent=5 // pred_check_branch
        %483 = sbr.rel (%p480) target = $region12
      $region11: #{tpu_custom_call.1} parent=5 // pred_region
        %s484 = ssub.s32 %s38, 1
        // Predicated region
        $region13: #{tpu_custom_call.1} parent=11 // pred_check
          %p485 = pneg %p149
        $region14: #{tpu_custom_call.1} parent=11 // pred_check_branch
          %487 = sbr.rel (%p485) target = $region16
        $region15: #{tpu_custom_call.1} parent=11 // pred_region
          _
        $region16: #{tpu_custom_call.1} parent=11 // pred_fallthru
          _
        // Predicated region
        $region17: #{tpu_custom_call.1} parent=11 // pred_check
          %p488 = pneg %p170
        $region18: #{tpu_custom_call.1} parent=11 // pred_check_branch
          %490 = sbr.rel (%p488) target = $region20
        $region19: #{tpu_custom_call.1} parent=11 // pred_region
          _
        $region20: #{tpu_custom_call.1} parent=11 // pred_fallthru
          _
        // Predicated region
        $region21: #{tpu_custom_call.1} parent=11 // pred_check
          %p491 = pneg %p191
        $region22: #{tpu_custom_call.1} parent=11 // pred_check_branch
          %493 = sbr.rel (%p491) target = $region24
        $region23: #{tpu_custom_call.1} parent=11 // pred_region
          %s495 = ssub.s32 256, 256
          %496 = vsyncadd [#allocation8], %s495
          %s497 = sshll.u32 [#allocation9], 4
          %s498 = int_to_ptr.vmem [resolvable:$true] %s497
          %503 = dma.hbm_to_vmem [thread:$0]  %s5, 256, %s498, [#allocation8], 64, 64, 4
        $region24: #{tpu_custom_call.1} parent=11 // pred_fallthru
          _
        // Predicated region
        $region25: #{tpu_custom_call.1} parent=11 // pred_check
          %p504 = pneg %p212
        $region26: #{tpu_custom_call.1} parent=11 // pred_check_branch
          %506 = sbr.rel (%p504) target = $region28
        $region27: #{tpu_custom_call.1} parent=11 // pred_region
          _
        $region28: #{tpu_custom_call.1} parent=11 // pred_fallthru
          _
        // Predicated region
        $region29: #{tpu_custom_call.1} parent=11 // pred_check
          %p507 = pneg %p233
        $region30: #{tpu_custom_call.1} parent=11 // pred_check_branch
          %509 = sbr.rel (%p507) target = $region32
        $region31: #{tpu_custom_call.1} parent=11 // pred_region
          %s511 = ssub.s32 256, 256
          %512 = vsyncadd [#allocation11], %s511
          %s513 = sshll.u32 [#allocation10], 4
          %s514 = int_to_ptr.vmem [resolvable:$true] %s513
          %519 = dma.hbm_to_vmem [thread:$0]  %s7, 256, %s514, [#allocation11], 64, 64, 4
        $region32: #{tpu_custom_call.1} parent=11 // pred_fallthru
          _
        // Predicated region
        $region33: #{tpu_custom_call.1} parent=11 // pred_check
          %p520 = pneg %p254
        $region34: #{tpu_custom_call.1} parent=11 // pred_check_branch
          %522 = sbr.rel (%p520) target = $region36
        $region35: #{tpu_custom_call.1} parent=11 // pred_region
          _
        $region36: #{tpu_custom_call.1} parent=11 // pred_fallthru
          _
        // Predicated region
        $region37: #{tpu_custom_call.1} parent=11 // pred_check
          %p523 = pneg %p275
        $region38: #{tpu_custom_call.1} parent=11 // pred_check_branch
          %525 = sbr.rel (%p523) target = $region40
        $region39: #{tpu_custom_call.1} parent=11 // pred_region
          %s527 = ssub.s32 256, 256
          %528 = vsyncadd [#allocation11], %s527
          %s529 = sshll.u32 [#allocation12], 4
          %s530 = int_to_ptr.vmem [resolvable:$true] %s529
          %535 = dma.hbm_to_vmem [thread:$0]  %s9, 256, %s530, [#allocation11], 64, 64, 4
        $region40: #{tpu_custom_call.1} parent=11 // pred_fallthru
          _
        // Predicated region
        $region41: #{tpu_custom_call.1} parent=11 // pred_check
          %p536 = pneg %p296
        $region42: #{tpu_custom_call.1} parent=11 // pred_check_branch
          %538 = sbr.rel (%p536) target = $region44
        $region43: #{tpu_custom_call.1} parent=11 // pred_region
          _
        $region44: #{tpu_custom_call.1} parent=11 // pred_fallthru
          _
        // Predicated region
        $region45: #{tpu_custom_call.1} parent=11 // pred_check
          %p539 = pneg %p322
        $region46: #{tpu_custom_call.1} parent=11 // pred_check_branch
          %541 = sbr.rel (%p539) target = $region48
        $region47: #{tpu_custom_call.1} parent=11 // pred_region
          %s542 = smul.u32 2, %s48
          %p543 = scmp.lt.s32.totalorder %s542, 1
          %s544 = scalar_select %p543, %s542, 1
          %s545 = smul.addr %s544, 4
          %s546 = scalar_lea.vmem %s11, %s545
          %s547 = smul.u32 2, %s48
        $region48: #{tpu_custom_call.1} parent=11 // pred_fallthru
          _
        // Predicated region
        $region49: #{tpu_custom_call.1} parent=11 // pred_check
          %p548 = pneg %p348
        $region50: #{tpu_custom_call.1} parent=11 // pred_check_branch
          %550 = sbr.rel (%p548) target = $region52
        $region51: #{tpu_custom_call.1} parent=11 // pred_region
          %s551 = smul.u32 2, %s48
          %p552 = scmp.lt.s32.totalorder %s551, 1
          %s553 = scalar_select %p552, %s551, 1
          %s554 = scalar_lea.vmem %s12, %s553
          %s555 = smul.u32 2, %s48
        $region52: #{tpu_custom_call.1} parent=11 // pred_fallthru
          _
        // Predicated region
        $region53: #{tpu_custom_call.1} parent=11 // pred_check
          %p556 = pneg %p369
        $region54: #{tpu_custom_call.1} parent=11 // pred_check_branch
          %558 = sbr.rel (%p556) target = $region56
        $region55: #{tpu_custom_call.1} parent=11 // pred_region
          _
        $region56: #{tpu_custom_call.1} parent=11 // pred_fallthru
          _
        // Predicated region
        $region57: #{tpu_custom_call.1} parent=11 // pred_check
          %p559 = pneg %p390
        $region58: #{tpu_custom_call.1} parent=11 // pred_check_branch
          %561 = sbr.rel (%p559) target = $region60
        $region59: #{tpu_custom_call.1} parent=11 // pred_region
          %s563 = ssub.s32 16, 16
          %564 = vsyncadd [#allocation6], %s563
          %s566 = sshll.u32 %s14, 4
          %s567 = int_to_ptr.vmem [resolvable:$true] %s566
          %569 = dma.vmem_to_smem %s567, 16, [#allocation13], [#allocation6]
        $region60: #{tpu_custom_call.1} parent=11 // pred_fallthru
          _
      $region12: #{tpu_custom_call.1} parent=5 // pred_fallthru
        _
      %p570 = scmp.lt.s32.totalorder %s38, 2
      // Predicated region
      $region61: #{tpu_custom_call.1} parent=5 // pred_check
        %p571 = pneg %p570
      $region62: #{tpu_custom_call.1} parent=5 // pred_check_branch
        %573 = sbr.rel (%p571) target = $region64
      $region63: #{tpu_custom_call.1} parent=5 // pred_region
        // Predicated region
        $region65: #{tpu_custom_call.1} parent=63 // pred_check
          %p574 = pneg %p70
        $region66: #{tpu_custom_call.1} parent=63 // pred_check_branch
          %576 = sbr.rel (%p574) target = $region68
        $region67: #{tpu_custom_call.1} parent=63 // pred_region
          %s577 = sand.u32 %s60, 1
          %s578 = scalar_lea.sflag [#allocation4], %s577
          %s579 = sand.u32 %s60, 1
          %s580 = smul.addr %s579, 16
          %s581 = scalar_lea.vmem [#allocation3], %s580
          %s582 = smul.u32 2, %s45
          %s584 = ssub.s32 256, 256
          %585 = vsyncadd %s578, %s584
          %s586 = smul.addr %s582, 128
          %s587 = scalar_lea.hbm %s0, %s586
          %s588 = sshll.u32 %s581, 4
          %s589 = int_to_ptr.vmem [resolvable:$true] %s588
          %594 = dma.hbm_to_vmem [thread:$0]  %s587, 256, %s589, %s578, 128, 128, 8
        $region68: #{tpu_custom_call.1} parent=63 // pred_fallthru
          _
        // Predicated region
        $region69: #{tpu_custom_call.1} parent=63 // pred_check
          %p595 = pneg %p96
        $region70: #{tpu_custom_call.1} parent=63 // pred_check_branch
          %597 = sbr.rel (%p595) target = $region72
        $region71: #{tpu_custom_call.1} parent=63 // pred_region
          %s598 = sand.u32 %s38, 1
          %s599 = scalar_lea.sflag [#allocation8], %s598
          %s600 = sand.u32 %s86, 1
          %s601 = smul.addr %s600, 16
          %s602 = scalar_lea.vmem [#allocation7], %s601
          %s603 = smul.u32 2, %s45
          %s605 = ssub.s32 256, 256
          %606 = vsyncadd %s599, %s605
          %s607 = smul.addr %s603, 2
          %s608 = smul.addr %s607, 64
          %s609 = scalar_lea.hbm %s1, %s608
          %s610 = sshll.u32 %s602, 4
          %s611 = int_to_ptr.vmem [resolvable:$true] %s610
          %616 = dma.hbm_to_vmem [thread:$0]  %s609, 256, %s611, %s599, 64, 64, 4
        $region72: #{tpu_custom_call.1} parent=63 // pred_fallthru
          _
        // Predicated region
        $region73: #{tpu_custom_call.1} parent=63 // pred_check
          %p617 = pneg %p122
        $region74: #{tpu_custom_call.1} parent=63 // pred_check_branch
          %619 = sbr.rel (%p617) target = $region76
        $region75: #{tpu_custom_call.1} parent=63 // pred_region
          %s620 = smul.u32 2, %s45
          %p621 = scmp.lt.s32.totalorder %s620, 3
          %s622 = scalar_select %p621, %s620, 3
          %s623 = scalar_lea.vmem %s2, %s622
          %s624 = smul.u32 2, %s45
        $region76: #{tpu_custom_call.1} parent=63 // pred_fallthru
          _
      $region64: #{tpu_custom_call.1} parent=5 // pred_fallthru
        _
      %p625 = scmp.le.s32.totalorder 1, %s38
      %p626 = scmp.lt.s32.totalorder %s38, 3
      %p627 = pnand %p625, %p626
      %p628 = pneg %p627
      // Predicated region
      $region77: #{tpu_custom_call.1} parent=5 // pred_check
        _
      $region78: #{tpu_custom_call.1} parent=5 // pred_check_branch
        %630 = sbr.rel (%p627) target = $region80
      $region79: #{tpu_custom_call.1} parent=5 // pred_region
        %s631 = ssub.s32 %s38, 1
        %s632 = sand.u32 %s63, 1
        %s633 = scalar_lea.sflag [#allocation4], %s632
        %s634 = sand.u32 %s63, 1
        %s635 = smul.addr %s634, 16
        %s636 = scalar_lea.vmem [#allocation3], %s635
        // Predicated region
        $region81: #{tpu_custom_call.1} parent=79 // pred_check
          %p637 = pneg %p76
        $region82: #{tpu_custom_call.1} parent=79 // pred_check_branch
          %639 = sbr.rel (%p637) target = $region84
        $region83: #{tpu_custom_call.1} parent=79 // pred_region
          %640 = dma.done %s633, 256
        $region84: #{tpu_custom_call.1} parent=79 // pred_fallthru
          _
        %s641 = sand.u32 %s43, 1
        %s642 = scalar_lea.sflag [#allocation8], %s641
        %s643 = sand.u32 %s89, 1
        %s644 = smul.addr %s643, 16
        %s645 = scalar_lea.vmem [#allocation7], %s644
        // Predicated region
        $region85: #{tpu_custom_call.1} parent=79 // pred_check
          %p646 = pneg %p102
        $region86: #{tpu_custom_call.1} parent=79 // pred_check_branch
          %648 = sbr.rel (%p646) target = $region88
        $region87: #{tpu_custom_call.1} parent=79 // pred_region
          %649 = dma.done %s642, 256
        $region88: #{tpu_custom_call.1} parent=79 // pred_fallthru
          _
        // Predicated region
        $region89: #{tpu_custom_call.1} parent=79 // pred_check
          %p650 = pneg %p191
        $region90: #{tpu_custom_call.1} parent=79 // pred_check_branch
          %652 = sbr.rel (%p650) target = $region92
        $region91: #{tpu_custom_call.1} parent=79 // pred_region
          %653 = dma.done [#allocation8], 256
        $region92: #{tpu_custom_call.1} parent=79 // pred_fallthru
          _
        // Predicated region
        $region93: #{tpu_custom_call.1} parent=79 // pred_check
          %p654 = pneg %p233
        $region94: #{tpu_custom_call.1} parent=79 // pred_check_branch
          %656 = sbr.rel (%p654) target = $region96
        $region95: #{tpu_custom_call.1} parent=79 // pred_region
          %657 = dma.done [#allocation11], 256
        $region96: #{tpu_custom_call.1} parent=79 // pred_fallthru
          _
        // Predicated region
        $region97: #{tpu_custom_call.1} parent=79 // pred_check
          %p658 = pneg %p275
        $region98: #{tpu_custom_call.1} parent=79 // pred_check_branch
          %660 = sbr.rel (%p658) target = $region100
        $region99: #{tpu_custom_call.1} parent=79 // pred_region
          %661 = dma.done [#allocation11], 256
        $region100: #{tpu_custom_call.1} parent=79 // pred_fallthru
          _
        // Predicated region
        $region101: #{tpu_custom_call.1} parent=79 // pred_check
          %p662 = pneg %p390
        $region102: #{tpu_custom_call.1} parent=79 // pred_check_branch
          %664 = sbr.rel (%p662) target = $region104
        $region103: #{tpu_custom_call.1} parent=79 // pred_region
          %665 = dma.done [#allocation6], 16
        $region104: #{tpu_custom_call.1} parent=79 // pred_fallthru
          _
        %666 = sfence
        %s667 = sand.u32 %s63, 1
        %s668 = scalar_lea.sflag [#allocation4], %s667
        %s669 = sand.u32 %s63, 1
        %s670 = smul.addr %s669, 16
        %s671 = scalar_lea.vmem [#allocation3], %s670
        %p672 = pneg %p76
        %p673 = pneg %p73
        %s674 = sand.u32 %s43, 1
        %s675 = scalar_lea.sflag [#allocation8], %s674
        %s676 = sand.u32 %s89, 1
        %s677 = smul.addr %s676, 16
        %s678 = scalar_lea.vmem [#allocation7], %s677
        %p679 = pneg %p102
        %p680 = pneg %p99
        %s681 = smul.u32 2, %s47
        %p682 = scmp.lt.s32.totalorder %s681, 3
        %s683 = scalar_select %p682, %s681, 3
        %s684 = scalar_lea.vmem %s2, %s683
        %p685 = pneg %p128
        %p686 = pneg %p125
        %p687 = pneg %p149
        %p688 = pneg %p146
        %p689 = pneg %p170
        %p690 = pneg %p167
        %p691 = pneg %p191
        %p692 = pneg %p188
        %p693 = pneg %p212
        %p694 = pneg %p209
        %p695 = pneg %p233
        %p696 = pneg %p230
        %p697 = pneg %p254
        %p698 = pneg %p251
        %p699 = pneg %p275
        %p700 = pneg %p272
        %p701 = pneg %p296
        %p702 = pneg %p293
        %s703 = smul.u32 2, %s48
        %p704 = scmp.lt.s32.totalorder %s703, 1
        %s705 = scalar_select %p704, %s703, 1
        %s706 = smul.addr %s705, 4
        %s707 = scalar_lea.vmem %s11, %s706
        %p708 = pneg %p322
        %p709 = pneg %p319
        %s710 = smul.u32 2, %s48
        %p711 = scmp.lt.s32.totalorder %s710, 1
        %s712 = scalar_select %p711, %s710, 1
        %s713 = scalar_lea.vmem %s12, %s712
        %p714 = pneg %p348
        %p715 = pneg %p345
        %p716 = pneg %p369
        %p717 = pneg %p366
        %p718 = pneg %p390
        %p719 = pneg %p387
        %p720 = pneg %p416
        %p721 = pneg %p413
        %s722 = sand.u32 %s403, 1
        %s723 = scalar_lea.sflag [#allocation5], %s722
        %s724 = sand.u32 %s403, 1
        %s725 = smul.addr %s724, 16
        %s726 = scalar_lea.vmem [#allocation14], %s725
        %p727 = pneg %p444
        %p728 = pneg %p441
        %s729 = sand.u32 %s431, 1
        %s730 = scalar_lea.sflag [#allocation16], %s729
        %s731 = sand.u32 %s431, 1
        %s732 = smul.addr %s731, 16
        %s733 = scalar_lea.vmem [#allocation15], %s732
        %p734 = pneg %p470
        %p735 = pneg %p467
        %s736 = smul.u32 2, %s47
        %p737 = scmp.lt.s32.totalorder %s736, 3
        %s738 = scalar_select %p737, %s736, 3
        %s739 = smul.addr %s738, 8
        %s740 = scalar_lea.vmem %s17, %s739
        %s741 = smul.u32 2, %s47
        %s742 = smul.u32 2, %s47
        %s743 = smul.u32 2, %s47
        %p744 = scmp.lt.s32.totalorder %s743, 3
        %s745 = scalar_select %p744, %s743, 3
        %s746 = scalar_lea.vmem %s2, %s745
        %s747 = smul.u32 2, %s47
        %s748 = smul.u32 2, %s48
        %p749 = scmp.lt.s32.totalorder %s748, 1
        %s750 = scalar_select %p749, %s748, 1
        %s751 = smul.addr %s750, 4
        %s752 = scalar_lea.vmem %s11, %s751
        %s753 = smul.u32 2, %s48
        %s754 = smul.u32 2, %s48
        %p755 = scmp.lt.s32.totalorder %s754, 1
        %s756 = scalar_select %p755, %s754, 1
        %s757 = scalar_lea.vmem %s12, %s756
        %s758 = smul.u32 2, %s48
        %s759 = smul.u32 2, %s47
        %s760 = smul.u32 2, %s47
        %s761 = smul.u32 2, %s48
        %s762 = smul.u32 2, %s47
        %p763 = scmp.lt.s32.totalorder %s762, 3
        %s764 = scalar_select %p763, %s762, 3
        %s765 = smul.addr %s764, 8
        %s766 = scalar_lea.vmem %s17, %s765
        %s767 = smul.u32 2, %s47
        %p769 = scmp.eq.s32.totalorder %s48, 0
        // Predicated region
        $region105: #{tpu_custom_call.1} parent=79 // pred_check
          %p770 = pneg %p769
        $region106: #{tpu_custom_call.1} parent=79 // pred_check_branch
          %772 = sbr.rel (%p770) target = $region108
        $region107: #{tpu_custom_call.1} parent=79 // pred_region
          %v773 = vld [vmem:[%s636] sm:$0xff]
          %v774 = vld [vmem:[%s636 + $0x8] sm:$0xff]
          %v775 = vld [vmem:[%s645] sm:$0xf]
          %v776 = vld [vmem:[%s645 + $0x4] sm:$0xf]
          %v777 = vld [vmem:[%s645 + $0x8] sm:$0xf]
          %v778 = vld [vmem:[%s645 + $0xc] sm:$0xf]
          %v779 = vpack.c.bf16 %v774, %v773
          %v780 = vld [vmem:[%s3] sm:$0xf]
          %v781 = vld [vmem:[%s3 + $0x4] sm:$0xf]
          %v782 = vld [vmem:[%s3 + $0x8] sm:$0xf]
          %v783 = vld [vmem:[%s3 + $0xc] sm:$0xf]
          %v784 = vld [vmem:[%s4] sm:$0x1]
          %v786 = vlaneseq
          %v787 = vshrl.u32 %v786, 7
          %v788 = vsub.s32 0, %v787
          %v789 = vrot.slane %v784, %v788
          %v795 = vunpack.c.l.b16 %v780
          %v796 = vunpack.c.l.b16 %v781
          %v797 = vunpack.c.l.b16 %v782
          %v798 = vunpack.c.l.b16 %v783
          %v799 = vpack.c.b16 %v796, %v795
          %v800 = vpack.c.b16 %v798, %v797
          %vm803 = vcmask 261120
          %v805 = vsel %vm803, %v779, 0
          %807 = vmatprep.subr.bf16.mxu0 0
          %808 = vmatpush1.bf16.msra.mxu0 %v799
          %809 = vmatprep.subr.bf16.mxu0 0
          %810 = vmatpush1.bf16.msra.mxu0 %v800
          %811 = vmatprep.subr.bf16.mxu0 0
          %812 = vmatpush1.bf16.msra.mxu0 0
          %813 = vmatprep.subr.bf16.mxu0 0
          %814 = vmatpush1.bf16.msra.mxu0 0
          %815 = vmatprep.subr.bf16.mxu0 0
          %816 = vmatpush1.bf16.msra.mxu0 0
          %817 = vmatprep.subr.bf16.mxu0 0
          %818 = vmatpush1.bf16.msra.mxu0 0
          %819 = vmatprep.subr.bf16.mxu0 0
          %820 = vmatpush1.bf16.msra.mxu0 0
          %821 = vmatprep.subr.bf16.mxu0 0
          %822 = vmatpush1.bf16.msra.mxu0 0
          %823 = vmatprep.subr.bf16.mxu0 0
          %824 = vmatpush1.bf16.msra.mxu0 0
          %825 = vmatprep.subr.bf16.mxu0 0
          %826 = vmatpush1.bf16.msra.mxu0 0
          %827 = vmatprep.subr.bf16.mxu0 0
          %828 = vmatpush1.bf16.msra.mxu0 0
          %829 = vmatprep.subr.bf16.mxu0 0
          %830 = vmatpush1.bf16.msra.mxu0 0
          %831 = vmatprep.subr.bf16.mxu0 0
          %832 = vmatpush1.bf16.msra.mxu0 0
          %833 = vmatprep.subr.bf16.mxu0 0
          %834 = vmatpush1.bf16.msra.mxu0 0
          %835 = vmatprep.subr.bf16.mxu0 0
          %836 = vmatpush1.bf16.msra.mxu0 0
          %837 = vmatprep.subr.bf16.mxu0 0
          %838 = vmatpush1.bf16.msra.mxu0 0
          %839 = vmatprep.mubr.bf16.mxu0 0
          %840 = vmatmul.mubr.bf16.gmra.mrb[0].mxu0 %v805
          %v841 = vpop.f32.mrb[0].mxu0
          %v842 = vadd.f32 %v789, %v841
          %v843 = vpop.f32.mrb[0].mxu0
          %v844 = vpop.f32.mrb[0].mxu0
          %v845 = vadd.f32 %v789, %v844
          %v846 = vpop.f32.mrb[0].mxu0
          %847 = vdwg.mxu0
          %v848 = vld [vmem:[#allocation9] sm:$0xf]
          %v849 = vld [vmem:[#allocation9 + $0x4] sm:$0xf]
          %v850 = vld [vmem:[#allocation9 + $0x8] sm:$0xf]
          %v851 = vld [vmem:[#allocation9 + $0xc] sm:$0xf]
          %v852 = vld [vmem:[%s6] sm:$0x1]
          %v854 = vlaneseq
          %v855 = vshrl.u32 %v854, 7
          %v856 = vsub.s32 0, %v855
          %v857 = vrot.slane %v852, %v856
          %v863 = vunpack.c.l.b16 %v775
          %v864 = vunpack.c.l.b16 %v776
          %v865 = vunpack.c.l.b16 %v777
          %v866 = vunpack.c.l.b16 %v778
          %v867 = vpack.c.b16 %v864, %v863
          %v868 = vpack.c.b16 %v866, %v865
          %v873 = vunpack.c.l.b16 %v848
          %v874 = vunpack.c.l.b16 %v849
          %v875 = vunpack.c.l.b16 %v850
          %v876 = vunpack.c.l.b16 %v851
          %v877 = vpack.c.b16 %v874, %v873
          %v878 = vpack.c.b16 %v876, %v875
          %v882 = vsel %vm803, %v867, 0
          %v885 = vsel %vm803, %v868, 0
          %887 = vmatprep.subr.bf16.mxu0 0
          %888 = vmatpush1.bf16.msra.mxu0 %v877
          %889 = vmatprep.subr.bf16.mxu0 0
          %890 = vmatpush1.bf16.msra.mxu0 %v878
          %891 = vmatprep.subr.bf16.mxu0 0
          %892 = vmatpush1.bf16.msra.mxu0 0
          %893 = vmatprep.subr.bf16.mxu0 0
          %894 = vmatpush1.bf16.msra.mxu0 0
          %895 = vmatprep.subr.bf16.mxu0 0
          %896 = vmatpush1.bf16.msra.mxu0 0
          %897 = vmatprep.subr.bf16.mxu0 0
          %898 = vmatpush1.bf16.msra.mxu0 0
          %899 = vmatprep.subr.bf16.mxu0 0
          %900 = vmatpush1.bf16.msra.mxu0 0
          %901 = vmatprep.subr.bf16.mxu0 0
          %902 = vmatpush1.bf16.msra.mxu0 0
          %903 = vmatprep.subr.bf16.mxu0 0
          %904 = vmatpush1.bf16.msra.mxu0 0
          %905 = vmatprep.subr.bf16.mxu0 0
          %906 = vmatpush1.bf16.msra.mxu0 0
          %907 = vmatprep.subr.bf16.mxu0 0
          %908 = vmatpush1.bf16.msra.mxu0 0
          %909 = vmatprep.subr.bf16.mxu0 0
          %910 = vmatpush1.bf16.msra.mxu0 0
          %911 = vmatprep.subr.bf16.mxu0 0
          %912 = vmatpush1.bf16.msra.mxu0 0
          %913 = vmatprep.subr.bf16.mxu0 0
          %914 = vmatpush1.bf16.msra.mxu0 0
          %915 = vmatprep.subr.bf16.mxu0 0
          %916 = vmatpush1.bf16.msra.mxu0 0
          %917 = vmatprep.subr.bf16.mxu0 0
          %918 = vmatpush1.bf16.msra.mxu0 0
          %919 = vmatprep.mubr.bf16.mxu0 0
          %920 = vmatmul.mubr.bf16.gmra.mrb[0].mxu0 %v882
          %v921 = vpop.f32.mrb[0].mxu0
          %v922 = vadd.f32 %v857, %v921
          %v923 = vpop.f32.mrb[0].mxu0
          %v924 = vpop.f32.mrb[0].mxu0
          %v925 = vadd.f32 %v857, %v924
          %v926 = vpop.f32.mrb[0].mxu0
          %927 = vmatprep.mubr.bf16.mxu0 0
          %928 = vmatmul.mubr.bf16.gmra.mrb[0].mxu0 %v885
          %v929 = vpop.f32.mrb[0].mxu0
          %v930 = vadd.f32 %v857, %v929
          %v931 = vpop.f32.mrb[0].mxu0
          %v932 = vpop.f32.mrb[0].mxu0
          %v933 = vadd.f32 %v857, %v932
          %v934 = vpop.f32.mrb[0].mxu0
          %935 = vdwg.mxu0
          %v936 = vld [vmem:[#allocation10] sm:$0xf]
          %v937 = vld [vmem:[#allocation10 + $0x4] sm:$0xf]
          %v938 = vld [vmem:[#allocation10 + $0x8] sm:$0xf]
          %v939 = vld [vmem:[#allocation10 + $0xc] sm:$0xf]
          %v940 = vld [vmem:[%s8] sm:$0x1]
          %v942 = vlaneseq
          %v943 = vshrl.u32 %v942, 7
          %v944 = vsub.s32 0, %v943
          %v945 = vrot.slane %v940, %v944
          %v951 = vunpack.c.l.b16 %v936
          %v952 = vunpack.c.l.b16 %v937
          %v953 = vunpack.c.l.b16 %v938
          %v954 = vunpack.c.l.b16 %v939
          %v955 = vpack.c.b16 %v952, %v951
          %v956 = vpack.c.b16 %v954, %v953
          %959 = vmatprep.subr.bf16.mxu0 0
          %960 = vmatpush1.bf16.msra.mxu0 %v955
          %961 = vmatprep.subr.bf16.mxu0 0
          %962 = vmatpush1.bf16.msra.mxu0 %v956
          %963 = vmatprep.subr.bf16.mxu0 0
          %964 = vmatpush1.bf16.msra.mxu0 0
          %965 = vmatprep.subr.bf16.mxu0 0
          %966 = vmatpush1.bf16.msra.mxu0 0
          %967 = vmatprep.subr.bf16.mxu0 0
          %968 = vmatpush1.bf16.msra.mxu0 0
          %969 = vmatprep.subr.bf16.mxu0 0
          %970 = vmatpush1.bf16.msra.mxu0 0
          %971 = vmatprep.subr.bf16.mxu0 0
          %972 = vmatpush1.bf16.msra.mxu0 0
          %973 = vmatprep.subr.bf16.mxu0 0
          %974 = vmatpush1.bf16.msra.mxu0 0
          %975 = vmatprep.subr.bf16.mxu0 0
          %976 = vmatpush1.bf16.msra.mxu0 0
          %977 = vmatprep.subr.bf16.mxu0 0
          %978 = vmatpush1.bf16.msra.mxu0 0
          %979 = vmatprep.subr.bf16.mxu0 0
          %980 = vmatpush1.bf16.msra.mxu0 0
          %981 = vmatprep.subr.bf16.mxu0 0
          %982 = vmatpush1.bf16.msra.mxu0 0
          %983 = vmatprep.subr.bf16.mxu0 0
          %984 = vmatpush1.bf16.msra.mxu0 0
          %985 = vmatprep.subr.bf16.mxu0 0
          %986 = vmatpush1.bf16.msra.mxu0 0
          %987 = vmatprep.subr.bf16.mxu0 0
          %988 = vmatpush1.bf16.msra.mxu0 0
          %989 = vmatprep.subr.bf16.mxu0 0
          %990 = vmatpush1.bf16.msra.mxu0 0
          %991 = vmatprep.mubr.bf16.mxu0 0
          %992 = vmatmul.mubr.bf16.gmra.mrb[0].mxu0 %v882
          %v993 = vpop.f32.mrb[0].mxu0
          %v994 = vadd.f32 %v945, %v993
          %v995 = vpop.f32.mrb[0].mxu0
          %v996 = vpop.f32.mrb[0].mxu0
          %v997 = vadd.f32 %v945, %v996
          %v998 = vpop.f32.mrb[0].mxu0
          %999 = vmatprep.mubr.bf16.mxu0 0
          %1000 = vmatmul.mubr.bf16.gmra.mrb[0].mxu0 %v885
          %v1001 = vpop.f32.mrb[0].mxu0
          %v1002 = vadd.f32 %v945, %v1001
          %v1003 = vpop.f32.mrb[0].mxu0
          %v1004 = vpop.f32.mrb[0].mxu0
          %v1005 = vadd.f32 %v945, %v1004
          %v1006 = vpop.f32.mrb[0].mxu0
          %1007 = vdwg.mxu0
          %1010 = vrot.lane.b32.xlu0 %v842, 120
          %v1011 = vpop.permute.xlu0 %1010
          %1012 = vrot.lane.b32.xlu0 %v845, 120
          %v1013 = vpop.permute.xlu0 %1012
          %1016 = vrot.lane.b32.xlu0 %v842, 112
          %v1017 = vpop.permute.xlu0 %1016
          %1018 = vrot.lane.b32.xlu0 %v845, 112
          %v1019 = vpop.permute.xlu0 %1018
          %1022 = vrot.lane.b32.xlu0 %v842, 104
          %v1023 = vpop.permute.xlu0 %1022
          %1024 = vrot.lane.b32.xlu0 %v845, 104
          %v1025 = vpop.permute.xlu0 %1024
          %v1028 = vcombine.low %v842, %v1017
          %v1029 = vcombine.high %v842, %v1017
          %v1031 = vunpack.c.l.s4 1983009808
          %v1032 = vunpack.c.0.s8 %v1031
          %v1033 = vlaneseq
          %v1034 = vshrl.u32 %v1033, 7
          %v1035 = vsub.s32 %v1032, %v1034
          %v1036 = vrot.slane %v1028, %v1035
          %v1038 = vunpack.c.l.s4 1983009808
          %v1039 = vunpack.c.0.s8 %v1038
          %v1040 = vlaneseq
          %v1041 = vshrl.u32 %v1040, 7
          %v1042 = vsub.s32 %v1039, %v1041
          %v1043 = vrot.slane %v1029, %v1042
          %v1044 = vcombine.low %v1011, %v1023
          %v1045 = vcombine.high %v1011, %v1023
          %v1047 = vunpack.c.l.s4 1983009808
          %v1048 = vunpack.c.0.s8 %v1047
          %v1049 = vlaneseq
          %v1050 = vshrl.u32 %v1049, 7
          %v1051 = vsub.s32 %v1048, %v1050
          %v1052 = vrot.slane %v1044, %v1051
          %v1054 = vunpack.c.l.s4 1983009808
          %v1055 = vunpack.c.0.s8 %v1054
          %v1056 = vlaneseq
          %v1057 = vshrl.u32 %v1056, 7
          %v1058 = vsub.s32 %v1055, %v1057
          %v1059 = vrot.slane %v1045, %v1058
          %v1060 = vcombine.low %v1036, %v1052
          %v1061 = vcombine.high %v1036, %v1052
          %v1063 = vunpack.c.l.s4 1934713408
          %v1064 = vunpack.c.0.s8 %v1063
          %v1065 = vlaneseq
          %v1066 = vshrl.u32 %v1065, 7
          %v1067 = vsub.s32 %v1064, %v1066
          %v1068 = vrot.slane %v1060, %v1067
          %v1070 = vunpack.c.l.s4 1934713408
          %v1071 = vunpack.c.0.s8 %v1070
          %v1072 = vlaneseq
          %v1073 = vshrl.u32 %v1072, 7
          %v1074 = vsub.s32 %v1071, %v1073
          %v1075 = vrot.slane %v1061, %v1074
          %v1076 = vcombine.low %v1043, %v1059
          %v1077 = vcombine.high %v1043, %v1059
          %v1079 = vunpack.c.l.s4 1934713408
          %v1080 = vunpack.c.0.s8 %v1079
          %v1081 = vlaneseq
          %v1082 = vshrl.u32 %v1081, 7
          %v1083 = vsub.s32 %v1080, %v1082
          %v1084 = vrot.slane %v1076, %v1083
          %v1086 = vunpack.c.l.s4 1934713408
          %v1087 = vunpack.c.0.s8 %v1086
          %v1088 = vlaneseq
          %v1089 = vshrl.u32 %v1088, 7
          %v1090 = vsub.s32 %v1087, %v1089
          %v1091 = vrot.slane %v1077, %v1090
          %v1092 = vcombine.high %v1068, 0.0
          %v1093 = vcombine.high %v1075, 0.0
          %v1094 = vcombine.high %v1084, 0.0
          %v1095 = vcombine.high %v1091, 0.0
          %v1096 = vcombine.low %v845, %v1019
          %v1097 = vcombine.high %v845, %v1019
          %v1099 = vunpack.c.l.s4 1983009808
          %v1100 = vunpack.c.0.s8 %v1099
          %v1101 = vlaneseq
          %v1102 = vshrl.u32 %v1101, 7
          %v1103 = vsub.s32 %v1100, %v1102
          %v1104 = vrot.slane %v1096, %v1103
          %v1106 = vunpack.c.l.s4 1983009808
          %v1107 = vunpack.c.0.s8 %v1106
          %v1108 = vlaneseq
          %v1109 = vshrl.u32 %v1108, 7
          %v1110 = vsub.s32 %v1107, %v1109
          %v1111 = vrot.slane %v1097, %v1110
          %v1112 = vcombine.low %v1013, %v1025
          %v1113 = vcombine.high %v1013, %v1025
          %v1115 = vunpack.c.l.s4 1983009808
          %v1116 = vunpack.c.0.s8 %v1115
          %v1117 = vlaneseq
          %v1118 = vshrl.u32 %v1117, 7
          %v1119 = vsub.s32 %v1116, %v1118
          %v1120 = vrot.slane %v1112, %v1119
          %v1122 = vunpack.c.l.s4 1983009808
          %v1123 = vunpack.c.0.s8 %v1122
          %v1124 = vlaneseq
          %v1125 = vshrl.u32 %v1124, 7
          %v1126 = vsub.s32 %v1123, %v1125
          %v1127 = vrot.slane %v1113, %v1126
          %v1128 = vcombine.low %v1104, %v1120
          %v1129 = vcombine.high %v1104, %v1120
          %v1131 = vunpack.c.l.s4 1934713408
          %v1132 = vunpack.c.0.s8 %v1131
          %v1133 = vlaneseq
          %v1134 = vshrl.u32 %v1133, 7
          %v1135 = vsub.s32 %v1132, %v1134
          %v1136 = vrot.slane %v1128, %v1135
          %v1138 = vunpack.c.l.s4 1934713408
          %v1139 = vunpack.c.0.s8 %v1138
          %v1140 = vlaneseq
          %v1141 = vshrl.u32 %v1140, 7
          %v1142 = vsub.s32 %v1139, %v1141
          %v1143 = vrot.slane %v1129, %v1142
          %v1144 = vcombine.low %v1111, %v1127
          %v1145 = vcombine.high %v1111, %v1127
          %v1147 = vunpack.c.l.s4 1934713408
          %v1148 = vunpack.c.0.s8 %v1147
          %v1149 = vlaneseq
          %v1150 = vshrl.u32 %v1149, 7
          %v1151 = vsub.s32 %v1148, %v1150
          %v1152 = vrot.slane %v1144, %v1151
          %v1154 = vunpack.c.l.s4 1934713408
          %v1155 = vunpack.c.0.s8 %v1154
          %v1156 = vlaneseq
          %v1157 = vshrl.u32 %v1156, 7
          %v1158 = vsub.s32 %v1155, %v1157
          %v1159 = vrot.slane %v1145, %v1158
          %v1160 = vcombine.high %v1136, 0.0
          %v1161 = vcombine.high %v1143, 0.0
          %v1162 = vcombine.high %v1152, 0.0
          %v1163 = vcombine.high %v1159, 0.0
          %v1164 = vcombine.low %v1068, %v1075
          %v1166 = vunpack.c.l.s4 1983009808
          %v1167 = vunpack.c.0.s8 %v1166
          %v1168 = vlaneseq
          %v1169 = vshrl.u32 %v1168, 7
          %v1170 = vsub.s32 %v1167, %v1169
          %v1171 = vrot.slane %v1164, %v1170
          %v1172 = vcombine.low %v1092, %v1093
          %v1174 = vunpack.c.l.s4 1983009808
          %v1175 = vunpack.c.0.s8 %v1174
          %v1176 = vlaneseq
          %v1177 = vshrl.u32 %v1176, 7
          %v1178 = vsub.s32 %v1175, %v1177
          %v1179 = vrot.slane %v1172, %v1178
          %v1180 = vcombine.low %v1084, %v1091
          %v1182 = vunpack.c.l.s4 1983009808
          %v1183 = vunpack.c.0.s8 %v1182
          %v1184 = vlaneseq
          %v1185 = vshrl.u32 %v1184, 7
          %v1186 = vsub.s32 %v1183, %v1185
          %v1187 = vrot.slane %v1180, %v1186
          %v1188 = vcombine.low %v1094, %v1095
          %v1190 = vunpack.c.l.s4 1983009808
          %v1191 = vunpack.c.0.s8 %v1190
          %v1192 = vlaneseq
          %v1193 = vshrl.u32 %v1192, 7
          %v1194 = vsub.s32 %v1191, %v1193
          %v1195 = vrot.slane %v1188, %v1194
          %v1196 = vcombine.low %v1171, %v1179
          %v1197 = vcombine.high %v1171, %v1179
          %v1199 = vunpack.c.l.s4 1934713408
          %v1200 = vunpack.c.0.s8 %v1199
          %v1201 = vlaneseq
          %v1202 = vshrl.u32 %v1201, 7
          %v1203 = vsub.s32 %v1200, %v1202
          %v1204 = vrot.slane %v1196, %v1203
          %v1206 = vunpack.c.l.s4 1934713408
          %v1207 = vunpack.c.0.s8 %v1206
          %v1208 = vlaneseq
          %v1209 = vshrl.u32 %v1208, 7
          %v1210 = vsub.s32 %v1207, %v1209
          %v1211 = vrot.slane %v1197, %v1210
          %v1212 = vcombine.low %v1187, %v1195
          %v1213 = vcombine.high %v1187, %v1195
          %v1215 = vunpack.c.l.s4 1934713408
          %v1216 = vunpack.c.0.s8 %v1215
          %v1217 = vlaneseq
          %v1218 = vshrl.u32 %v1217, 7
          %v1219 = vsub.s32 %v1216, %v1218
          %v1220 = vrot.slane %v1212, %v1219
          %v1222 = vunpack.c.l.s4 1934713408
          %v1223 = vunpack.c.0.s8 %v1222
          %v1224 = vlaneseq
          %v1225 = vshrl.u32 %v1224, 7
          %v1226 = vsub.s32 %v1223, %v1225
          %v1227 = vrot.slane %v1213, %v1226
          %v1228 = vcombine.low %v1204, %v1220
          %v1229 = vcombine.high %v1204, %v1220
          %v1230 = vcombine.low %v1211, %v1227
          %v1231 = vcombine.high %v1211, %v1227
          %v1232 = vcombine.low %v1136, %v1143
          %v1234 = vunpack.c.l.s4 1983009808
          %v1235 = vunpack.c.0.s8 %v1234
          %v1236 = vlaneseq
          %v1237 = vshrl.u32 %v1236, 7
          %v1238 = vsub.s32 %v1235, %v1237
          %v1239 = vrot.slane %v1232, %v1238
          %v1240 = vcombine.low %v1160, %v1161
          %v1242 = vunpack.c.l.s4 1983009808
          %v1243 = vunpack.c.0.s8 %v1242
          %v1244 = vlaneseq
          %v1245 = vshrl.u32 %v1244, 7
          %v1246 = vsub.s32 %v1243, %v1245
          %v1247 = vrot.slane %v1240, %v1246
          %v1248 = vcombine.low %v1152, %v1159
          %v1250 = vunpack.c.l.s4 1983009808
          %v1251 = vunpack.c.0.s8 %v1250
          %v1252 = vlaneseq
          %v1253 = vshrl.u32 %v1252, 7
          %v1254 = vsub.s32 %v1251, %v1253
          %v1255 = vrot.slane %v1248, %v1254
          %v1256 = vcombine.low %v1162, %v1163
          %v1258 = vunpack.c.l.s4 1983009808
          %v1259 = vunpack.c.0.s8 %v1258
          %v1260 = vlaneseq
          %v1261 = vshrl.u32 %v1260, 7
          %v1262 = vsub.s32 %v1259, %v1261
          %v1263 = vrot.slane %v1256, %v1262
          %v1264 = vcombine.low %v1239, %v1247
          %v1265 = vcombine.high %v1239, %v1247
          %v1267 = vunpack.c.l.s4 1934713408
          %v1268 = vunpack.c.0.s8 %v1267
          %v1269 = vlaneseq
          %v1270 = vshrl.u32 %v1269, 7
          %v1271 = vsub.s32 %v1268, %v1270
          %v1272 = vrot.slane %v1264, %v1271
          %v1274 = vunpack.c.l.s4 1934713408
          %v1275 = vunpack.c.0.s8 %v1274
          %v1276 = vlaneseq
          %v1277 = vshrl.u32 %v1276, 7
          %v1278 = vsub.s32 %v1275, %v1277
          %v1279 = vrot.slane %v1265, %v1278
          %v1280 = vcombine.low %v1255, %v1263
          %v1281 = vcombine.high %v1255, %v1263
          %v1283 = vunpack.c.l.s4 1934713408
          %v1284 = vunpack.c.0.s8 %v1283
          %v1285 = vlaneseq
          %v1286 = vshrl.u32 %v1285, 7
          %v1287 = vsub.s32 %v1284, %v1286
          %v1288 = vrot.slane %v1280, %v1287
          %v1290 = vunpack.c.l.s4 1934713408
          %v1291 = vunpack.c.0.s8 %v1290
          %v1292 = vlaneseq
          %v1293 = vshrl.u32 %v1292, 7
          %v1294 = vsub.s32 %v1291, %v1293
          %v1295 = vrot.slane %v1281, %v1294
          %v1296 = vcombine.low %v1272, %v1288
          %v1297 = vcombine.high %v1272, %v1288
          %v1298 = vcombine.low %v1279, %v1295
          %v1299 = vcombine.high %v1279, %v1295
          %1304 = vrot.lane.b32.xlu0 %v922, 120
          %v1305 = vpop.permute.xlu0 %1304
          %1306 = vrot.lane.b32.xlu0 %v925, 120
          %v1307 = vpop.permute.xlu0 %1306
          %1308 = vrot.lane.b32.xlu0 %v930, 120
          %v1309 = vpop.permute.xlu0 %1308
          %1310 = vrot.lane.b32.xlu0 %v933, 120
          %v1311 = vpop.permute.xlu0 %1310
          %1316 = vrot.lane.b32.xlu0 %v922, 112
          %v1317 = vpop.permute.xlu0 %1316
          %1318 = vrot.lane.b32.xlu0 %v925, 112
          %v1319 = vpop.permute.xlu0 %1318
          %1320 = vrot.lane.b32.xlu0 %v930, 112
          %v1321 = vpop.permute.xlu0 %1320
          %1322 = vrot.lane.b32.xlu0 %v933, 112
          %v1323 = vpop.permute.xlu0 %1322
          %1328 = vrot.lane.b32.xlu0 %v922, 104
          %v1329 = vpop.permute.xlu0 %1328
          %1330 = vrot.lane.b32.xlu0 %v925, 104
          %v1331 = vpop.permute.xlu0 %1330
          %1332 = vrot.lane.b32.xlu0 %v930, 104
          %v1333 = vpop.permute.xlu0 %1332
          %1334 = vrot.lane.b32.xlu0 %v933, 104
          %v1335 = vpop.permute.xlu0 %1334
          %v1340 = vcombine.low %v922, %v1317
          %v1341 = vcombine.high %v922, %v1317
          %v1343 = vunpack.c.l.s4 1983009808
          %v1344 = vunpack.c.0.s8 %v1343
          %v1345 = vlaneseq
          %v1346 = vshrl.u32 %v1345, 7
          %v1347 = vsub.s32 %v1344, %v1346
          %v1348 = vrot.slane %v1340, %v1347
          %v1350 = vunpack.c.l.s4 1983009808
          %v1351 = vunpack.c.0.s8 %v1350
          %v1352 = vlaneseq
          %v1353 = vshrl.u32 %v1352, 7
          %v1354 = vsub.s32 %v1351, %v1353
          %v1355 = vrot.slane %v1341, %v1354
          %v1356 = vcombine.low %v1305, %v1329
          %v1357 = vcombine.high %v1305, %v1329
          %v1359 = vunpack.c.l.s4 1983009808
          %v1360 = vunpack.c.0.s8 %v1359
          %v1361 = vlaneseq
          %v1362 = vshrl.u32 %v1361, 7
          %v1363 = vsub.s32 %v1360, %v1362
          %v1364 = vrot.slane %v1356, %v1363
          %v1366 = vunpack.c.l.s4 1983009808
          %v1367 = vunpack.c.0.s8 %v1366
          %v1368 = vlaneseq
          %v1369 = vshrl.u32 %v1368, 7
          %v1370 = vsub.s32 %v1367, %v1369
          %v1371 = vrot.slane %v1357, %v1370
          %v1372 = vcombine.low %v1348, %v1364
          %v1373 = vcombine.high %v1348, %v1364
          %v1375 = vunpack.c.l.s4 1934713408
          %v1376 = vunpack.c.0.s8 %v1375
          %v1377 = vlaneseq
          %v1378 = vshrl.u32 %v1377, 7
          %v1379 = vsub.s32 %v1376, %v1378
          %v1380 = vrot.slane %v1372, %v1379
          %v1382 = vunpack.c.l.s4 1934713408
          %v1383 = vunpack.c.0.s8 %v1382
          %v1384 = vlaneseq
          %v1385 = vshrl.u32 %v1384, 7
          %v1386 = vsub.s32 %v1383, %v1385
          %v1387 = vrot.slane %v1373, %v1386
          %v1388 = vcombine.low %v1355, %v1371
          %v1389 = vcombine.high %v1355, %v1371
          %v1391 = vunpack.c.l.s4 1934713408
          %v1392 = vunpack.c.0.s8 %v1391
          %v1393 = vlaneseq
          %v1394 = vshrl.u32 %v1393, 7
          %v1395 = vsub.s32 %v1392, %v1394
          %v1396 = vrot.slane %v1388, %v1395
          %v1398 = vunpack.c.l.s4 1934713408
          %v1399 = vunpack.c.0.s8 %v1398
          %v1400 = vlaneseq
          %v1401 = vshrl.u32 %v1400, 7
          %v1402 = vsub.s32 %v1399, %v1401
          %v1403 = vrot.slane %v1389, %v1402
          %v1404 = vcombine.high %v1380, 0.0
          %v1405 = vcombine.high %v1387, 0.0
          %v1406 = vcombine.high %v1396, 0.0
          %v1407 = vcombine.high %v1403, 0.0
          %v1408 = vcombine.low %v925, %v1319
          %v1409 = vcombine.high %v925, %v1319
          %v1411 = vunpack.c.l.s4 1983009808
          %v1412 = vunpack.c.0.s8 %v1411
          %v1413 = vlaneseq
          %v1414 = vshrl.u32 %v1413, 7
          %v1415 = vsub.s32 %v1412, %v1414
          %v1416 = vrot.slane %v1408, %v1415
          %v1418 = vunpack.c.l.s4 1983009808
          %v1419 = vunpack.c.0.s8 %v1418
          %v1420 = vlaneseq
          %v1421 = vshrl.u32 %v1420, 7
          %v1422 = vsub.s32 %v1419, %v1421
          %v1423 = vrot.slane %v1409, %v1422
          %v1424 = vcombine.low %v1307, %v1331
          %v1425 = vcombine.high %v1307, %v1331
          %v1427 = vunpack.c.l.s4 1983009808
          %v1428 = vunpack.c.0.s8 %v1427
          %v1429 = vlaneseq
          %v1430 = vshrl.u32 %v1429, 7
          %v1431 = vsub.s32 %v1428, %v1430
          %v1432 = vrot.slane %v1424, %v1431
          %v1434 = vunpack.c.l.s4 1983009808
          %v1435 = vunpack.c.0.s8 %v1434
          %v1436 = vlaneseq
          %v1437 = vshrl.u32 %v1436, 7
          %v1438 = vsub.s32 %v1435, %v1437
          %v1439 = vrot.slane %v1425, %v1438
          %v1440 = vcombine.low %v1416, %v1432
          %v1441 = vcombine.high %v1416, %v1432
          %v1443 = vunpack.c.l.s4 1934713408
          %v1444 = vunpack.c.0.s8 %v1443
          %v1445 = vlaneseq
          %v1446 = vshrl.u32 %v1445, 7
          %v1447 = vsub.s32 %v1444, %v1446
          %v1448 = vrot.slane %v1440, %v1447
          %v1450 = vunpack.c.l.s4 1934713408
          %v1451 = vunpack.c.0.s8 %v1450
          %v1452 = vlaneseq
          %v1453 = vshrl.u32 %v1452, 7
          %v1454 = vsub.s32 %v1451, %v1453
          %v1455 = vrot.slane %v1441, %v1454
          %v1456 = vcombine.low %v1423, %v1439
          %v1457 = vcombine.high %v1423, %v1439
          %v1459 = vunpack.c.l.s4 1934713408
          %v1460 = vunpack.c.0.s8 %v1459
          %v1461 = vlaneseq
          %v1462 = vshrl.u32 %v1461, 7
          %v1463 = vsub.s32 %v1460, %v1462
          %v1464 = vrot.slane %v1456, %v1463
          %v1466 = vunpack.c.l.s4 1934713408
          %v1467 = vunpack.c.0.s8 %v1466
          %v1468 = vlaneseq
          %v1469 = vshrl.u32 %v1468, 7
          %v1470 = vsub.s32 %v1467, %v1469
          %v1471 = vrot.slane %v1457, %v1470
          %v1472 = vcombine.high %v1448, 0.0
          %v1473 = vcombine.high %v1455, 0.0
          %v1474 = vcombine.high %v1464, 0.0
          %v1475 = vcombine.high %v1471, 0.0
          %v1476 = vcombine.low %v930, %v1321
          %v1477 = vcombine.high %v930, %v1321
          %v1479 = vunpack.c.l.s4 1983009808
          %v1480 = vunpack.c.0.s8 %v1479
          %v1481 = vlaneseq
          %v1482 = vshrl.u32 %v1481, 7
          %v1483 = vsub.s32 %v1480, %v1482
          %v1484 = vrot.slane %v1476, %v1483
          %v1486 = vunpack.c.l.s4 1983009808
          %v1487 = vunpack.c.0.s8 %v1486
          %v1488 = vlaneseq
          %v1489 = vshrl.u32 %v1488, 7
          %v1490 = vsub.s32 %v1487, %v1489
          %v1491 = vrot.slane %v1477, %v1490
          %v1492 = vcombine.low %v1309, %v1333
          %v1493 = vcombine.high %v1309, %v1333
          %v1495 = vunpack.c.l.s4 1983009808
          %v1496 = vunpack.c.0.s8 %v1495
          %v1497 = vlaneseq
          %v1498 = vshrl.u32 %v1497, 7
          %v1499 = vsub.s32 %v1496, %v1498
          %v1500 = vrot.slane %v1492, %v1499
          %v1502 = vunpack.c.l.s4 1983009808
          %v1503 = vunpack.c.0.s8 %v1502
          %v1504 = vlaneseq
          %v1505 = vshrl.u32 %v1504, 7
          %v1506 = vsub.s32 %v1503, %v1505
          %v1507 = vrot.slane %v1493, %v1506
          %v1508 = vcombine.low %v1484, %v1500
          %v1509 = vcombine.high %v1484, %v1500
          %v1511 = vunpack.c.l.s4 1934713408
          %v1512 = vunpack.c.0.s8 %v1511
          %v1513 = vlaneseq
          %v1514 = vshrl.u32 %v1513, 7
          %v1515 = vsub.s32 %v1512, %v1514
          %v1516 = vrot.slane %v1508, %v1515
          %v1518 = vunpack.c.l.s4 1934713408
          %v1519 = vunpack.c.0.s8 %v1518
          %v1520 = vlaneseq
          %v1521 = vshrl.u32 %v1520, 7
          %v1522 = vsub.s32 %v1519, %v1521
          %v1523 = vrot.slane %v1509, %v1522
          %v1524 = vcombine.low %v1491, %v1507
          %v1525 = vcombine.high %v1491, %v1507
          %v1527 = vunpack.c.l.s4 1934713408
          %v1528 = vunpack.c.0.s8 %v1527
          %v1529 = vlaneseq
          %v1530 = vshrl.u32 %v1529, 7
          %v1531 = vsub.s32 %v1528, %v1530
          %v1532 = vrot.slane %v1524, %v1531
          %v1534 = vunpack.c.l.s4 1934713408
          %v1535 = vunpack.c.0.s8 %v1534
          %v1536 = vlaneseq
          %v1537 = vshrl.u32 %v1536, 7
          %v1538 = vsub.s32 %v1535, %v1537
          %v1539 = vrot.slane %v1525, %v1538
          %v1540 = vcombine.high %v1516, 0.0
          %v1541 = vcombine.high %v1523, 0.0
          %v1542 = vcombine.high %v1532, 0.0
          %v1543 = vcombine.high %v1539, 0.0
          %v1544 = vcombine.low %v933, %v1323
          %v1545 = vcombine.high %v933, %v1323
          %v1547 = vunpack.c.l.s4 1983009808
          %v1548 = vunpack.c.0.s8 %v1547
          %v1549 = vlaneseq
          %v1550 = vshrl.u32 %v1549, 7
          %v1551 = vsub.s32 %v1548, %v1550
          %v1552 = vrot.slane %v1544, %v1551
          %v1554 = vunpack.c.l.s4 1983009808
          %v1555 = vunpack.c.0.s8 %v1554
          %v1556 = vlaneseq
          %v1557 = vshrl.u32 %v1556, 7
          %v1558 = vsub.s32 %v1555, %v1557
          %v1559 = vrot.slane %v1545, %v1558
          %v1560 = vcombine.low %v1311, %v1335
          %v1561 = vcombine.high %v1311, %v1335
          %v1563 = vunpack.c.l.s4 1983009808
          %v1564 = vunpack.c.0.s8 %v1563
          %v1565 = vlaneseq
          %v1566 = vshrl.u32 %v1565, 7
          %v1567 = vsub.s32 %v1564, %v1566
          %v1568 = vrot.slane %v1560, %v1567
          %v1570 = vunpack.c.l.s4 1983009808
          %v1571 = vunpack.c.0.s8 %v1570
          %v1572 = vlaneseq
          %v1573 = vshrl.u32 %v1572, 7
          %v1574 = vsub.s32 %v1571, %v1573
          %v1575 = vrot.slane %v1561, %v1574
          %v1576 = vcombine.low %v1552, %v1568
          %v1577 = vcombine.high %v1552, %v1568
          %v1579 = vunpack.c.l.s4 1934713408
          %v1580 = vunpack.c.0.s8 %v1579
          %v1581 = vlaneseq
          %v1582 = vshrl.u32 %v1581, 7
          %v1583 = vsub.s32 %v1580, %v1582
          %v1584 = vrot.slane %v1576, %v1583
          %v1586 = vunpack.c.l.s4 1934713408
          %v1587 = vunpack.c.0.s8 %v1586
          %v1588 = vlaneseq
          %v1589 = vshrl.u32 %v1588, 7
          %v1590 = vsub.s32 %v1587, %v1589
          %v1591 = vrot.slane %v1577, %v1590
          %v1592 = vcombine.low %v1559, %v1575
          %v1593 = vcombine.high %v1559, %v1575
          %v1595 = vunpack.c.l.s4 1934713408
          %v1596 = vunpack.c.0.s8 %v1595
          %v1597 = vlaneseq
          %v1598 = vshrl.u32 %v1597, 7
          %v1599 = vsub.s32 %v1596, %v1598
          %v1600 = vrot.slane %v1592, %v1599
          %v1602 = vunpack.c.l.s4 1934713408
          %v1603 = vunpack.c.0.s8 %v1602
          %v1604 = vlaneseq
          %v1605 = vshrl.u32 %v1604, 7
          %v1606 = vsub.s32 %v1603, %v1605
          %v1607 = vrot.slane %v1593, %v1606
          %v1608 = vcombine.high %v1584, 0.0
          %v1609 = vcombine.high %v1591, 0.0
          %v1610 = vcombine.high %v1600, 0.0
          %v1611 = vcombine.high %v1607, 0.0
          %v1612 = vcombine.low %v1380, %v1387
          %v1614 = vunpack.c.l.s4 1983009808
          %v1615 = vunpack.c.0.s8 %v1614
          %v1616 = vlaneseq
          %v1617 = vshrl.u32 %v1616, 7
          %v1618 = vsub.s32 %v1615, %v1617
          %v1619 = vrot.slane %v1612, %v1618
          %v1620 = vcombine.low %v1404, %v1405
          %v1622 = vunpack.c.l.s4 1983009808
          %v1623 = vunpack.c.0.s8 %v1622
          %v1624 = vlaneseq
          %v1625 = vshrl.u32 %v1624, 7
          %v1626 = vsub.s32 %v1623, %v1625
          %v1627 = vrot.slane %v1620, %v1626
          %v1628 = vcombine.low %v1396, %v1403
          %v1630 = vunpack.c.l.s4 1983009808
          %v1631 = vunpack.c.0.s8 %v1630
          %v1632 = vlaneseq
          %v1633 = vshrl.u32 %v1632, 7
          %v1634 = vsub.s32 %v1631, %v1633
          %v1635 = vrot.slane %v1628, %v1634
          %v1636 = vcombine.low %v1406, %v1407
          %v1638 = vunpack.c.l.s4 1983009808
          %v1639 = vunpack.c.0.s8 %v1638
          %v1640 = vlaneseq
          %v1641 = vshrl.u32 %v1640, 7
          %v1642 = vsub.s32 %v1639, %v1641
          %v1643 = vrot.slane %v1636, %v1642
          %v1644 = vcombine.low %v1619, %v1627
          %v1645 = vcombine.high %v1619, %v1627
          %v1647 = vunpack.c.l.s4 1934713408
          %v1648 = vunpack.c.0.s8 %v1647
          %v1649 = vlaneseq
          %v1650 = vshrl.u32 %v1649, 7
          %v1651 = vsub.s32 %v1648, %v1650
          %v1652 = vrot.slane %v1644, %v1651
          %v1654 = vunpack.c.l.s4 1934713408
          %v1655 = vunpack.c.0.s8 %v1654
          %v1656 = vlaneseq
          %v1657 = vshrl.u32 %v1656, 7
          %v1658 = vsub.s32 %v1655, %v1657
          %v1659 = vrot.slane %v1645, %v1658
          %v1660 = vcombine.low %v1635, %v1643
          %v1661 = vcombine.high %v1635, %v1643
          %v1663 = vunpack.c.l.s4 1934713408
          %v1664 = vunpack.c.0.s8 %v1663
          %v1665 = vlaneseq
          %v1666 = vshrl.u32 %v1665, 7
          %v1667 = vsub.s32 %v1664, %v1666
          %v1668 = vrot.slane %v1660, %v1667
          %v1670 = vunpack.c.l.s4 1934713408
          %v1671 = vunpack.c.0.s8 %v1670
          %v1672 = vlaneseq
          %v1673 = vshrl.u32 %v1672, 7
          %v1674 = vsub.s32 %v1671, %v1673
          %v1675 = vrot.slane %v1661, %v1674
          %v1676 = vcombine.low %v1652, %v1668
          %v1677 = vcombine.high %v1652, %v1668
          %v1678 = vcombine.low %v1659, %v1675
          %v1679 = vcombine.high %v1659, %v1675
          %v1680 = vcombine.low %v1448, %v1455
          %v1682 = vunpack.c.l.s4 1983009808
          %v1683 = vunpack.c.0.s8 %v1682
          %v1684 = vlaneseq
          %v1685 = vshrl.u32 %v1684, 7
          %v1686 = vsub.s32 %v1683, %v1685
          %v1687 = vrot.slane %v1680, %v1686
          %v1688 = vcombine.low %v1472, %v1473
          %v1690 = vunpack.c.l.s4 1983009808
          %v1691 = vunpack.c.0.s8 %v1690
          %v1692 = vlaneseq
          %v1693 = vshrl.u32 %v1692, 7
          %v1694 = vsub.s32 %v1691, %v1693
          %v1695 = vrot.slane %v1688, %v1694
          %v1696 = vcombine.low %v1464, %v1471
          %v1698 = vunpack.c.l.s4 1983009808
          %v1699 = vunpack.c.0.s8 %v1698
          %v1700 = vlaneseq
          %v1701 = vshrl.u32 %v1700, 7
          %v1702 = vsub.s32 %v1699, %v1701
          %v1703 = vrot.slane %v1696, %v1702
          %v1704 = vcombine.low %v1474, %v1475
          %v1706 = vunpack.c.l.s4 1983009808
          %v1707 = vunpack.c.0.s8 %v1706
          %v1708 = vlaneseq
          %v1709 = vshrl.u32 %v1708, 7
          %v1710 = vsub.s32 %v1707, %v1709
          %v1711 = vrot.slane %v1704, %v1710
          %v1712 = vcombine.low %v1687, %v1695
          %v1713 = vcombine.high %v1687, %v1695
          %v1715 = vunpack.c.l.s4 1934713408
          %v1716 = vunpack.c.0.s8 %v1715
          %v1717 = vlaneseq
          %v1718 = vshrl.u32 %v1717, 7
          %v1719 = vsub.s32 %v1716, %v1718
          %v1720 = vrot.slane %v1712, %v1719
          %v1722 = vunpack.c.l.s4 1934713408
          %v1723 = vunpack.c.0.s8 %v1722
          %v1724 = vlaneseq
          %v1725 = vshrl.u32 %v1724, 7
          %v1726 = vsub.s32 %v1723, %v1725
          %v1727 = vrot.slane %v1713, %v1726
          %v1728 = vcombine.low %v1703, %v1711
          %v1729 = vcombine.high %v1703, %v1711
          %v1731 = vunpack.c.l.s4 1934713408
          %v1732 = vunpack.c.0.s8 %v1731
          %v1733 = vlaneseq
          %v1734 = vshrl.u32 %v1733, 7
          %v1735 = vsub.s32 %v1732, %v1734
          %v1736 = vrot.slane %v1728, %v1735
          %v1738 = vunpack.c.l.s4 1934713408
          %v1739 = vunpack.c.0.s8 %v1738
          %v1740 = vlaneseq
          %v1741 = vshrl.u32 %v1740, 7
          %v1742 = vsub.s32 %v1739, %v1741
          %v1743 = vrot.slane %v1729, %v1742
          %v1744 = vcombine.low %v1720, %v1736
          %v1745 = vcombine.high %v1720, %v1736
          %v1746 = vcombine.low %v1727, %v1743
          %v1747 = vcombine.high %v1727, %v1743
          %v1748 = vcombine.low %v1516, %v1523
          %v1750 = vunpack.c.l.s4 1983009808
          %v1751 = vunpack.c.0.s8 %v1750
          %v1752 = vlaneseq
          %v1753 = vshrl.u32 %v1752, 7
          %v1754 = vsub.s32 %v1751, %v1753
          %v1755 = vrot.slane %v1748, %v1754
          %v1756 = vcombine.low %v1540, %v1541
          %v1758 = vunpack.c.l.s4 1983009808
          %v1759 = vunpack.c.0.s8 %v1758
          %v1760 = vlaneseq
          %v1761 = vshrl.u32 %v1760, 7
          %v1762 = vsub.s32 %v1759, %v1761
          %v1763 = vrot.slane %v1756, %v1762
          %v1764 = vcombine.low %v1532, %v1539
          %v1766 = vunpack.c.l.s4 1983009808
          %v1767 = vunpack.c.0.s8 %v1766
          %v1768 = vlaneseq
          %v1769 = vshrl.u32 %v1768, 7
          %v1770 = vsub.s32 %v1767, %v1769
          %v1771 = vrot.slane %v1764, %v1770
          %v1772 = vcombine.low %v1542, %v1543
          %v1774 = vunpack.c.l.s4 1983009808
          %v1775 = vunpack.c.0.s8 %v1774
          %v1776 = vlaneseq
          %v1777 = vshrl.u32 %v1776, 7
          %v1778 = vsub.s32 %v1775, %v1777
          %v1779 = vrot.slane %v1772, %v1778
          %v1780 = vcombine.low %v1755, %v1763
          %v1781 = vcombine.high %v1755, %v1763
          %v1783 = vunpack.c.l.s4 1934713408
          %v1784 = vunpack.c.0.s8 %v1783
          %v1785 = vlaneseq
          %v1786 = vshrl.u32 %v1785, 7
          %v1787 = vsub.s32 %v1784, %v1786
          %v1788 = vrot.slane %v1780, %v1787
          %v1790 = vunpack.c.l.s4 1934713408
          %v1791 = vunpack.c.0.s8 %v1790
          %v1792 = vlaneseq
          %v1793 = vshrl.u32 %v1792, 7
          %v1794 = vsub.s32 %v1791, %v1793
          %v1795 = vrot.slane %v1781, %v1794
          %v1796 = vcombine.low %v1771, %v1779
          %v1797 = vcombine.high %v1771, %v1779
          %v1799 = vunpack.c.l.s4 1934713408
          %v1800 = vunpack.c.0.s8 %v1799
          %v1801 = vlaneseq
          %v1802 = vshrl.u32 %v1801, 7
          %v1803 = vsub.s32 %v1800, %v1802
          %v1804 = vrot.slane %v1796, %v1803
          %v1806 = vunpack.c.l.s4 1934713408
          %v1807 = vunpack.c.0.s8 %v1806
          %v1808 = vlaneseq
          %v1809 = vshrl.u32 %v1808, 7
          %v1810 = vsub.s32 %v1807, %v1809
          %v1811 = vrot.slane %v1797, %v1810
          %v1812 = vcombine.low %v1788, %v1804
          %v1813 = vcombine.high %v1788, %v1804
          %v1814 = vcombine.low %v1795, %v1811
          %v1815 = vcombine.high %v1795, %v1811
          %v1816 = vcombine.low %v1584, %v1591
          %v1818 = vunpack.c.l.s4 1983009808
          %v1819 = vunpack.c.0.s8 %v1818
          %v1820 = vlaneseq
          %v1821 = vshrl.u32 %v1820, 7
          %v1822 = vsub.s32 %v1819, %v1821
          %v1823 = vrot.slane %v1816, %v1822
          %v1824 = vcombine.low %v1608, %v1609
          %v1826 = vunpack.c.l.s4 1983009808
          %v1827 = vunpack.c.0.s8 %v1826
          %v1828 = vlaneseq
          %v1829 = vshrl.u32 %v1828, 7
          %v1830 = vsub.s32 %v1827, %v1829
          %v1831 = vrot.slane %v1824, %v1830
          %v1832 = vcombine.low %v1600, %v1607
          %v1834 = vunpack.c.l.s4 1983009808
          %v1835 = vunpack.c.0.s8 %v1834
          %v1836 = vlaneseq
          %v1837 = vshrl.u32 %v1836, 7
          %v1838 = vsub.s32 %v1835, %v1837
          %v1839 = vrot.slane %v1832, %v1838
          %v1840 = vcombine.low %v1610, %v1611
          %v1842 = vunpack.c.l.s4 1983009808
          %v1843 = vunpack.c.0.s8 %v1842
          %v1844 = vlaneseq
          %v1845 = vshrl.u32 %v1844, 7
          %v1846 = vsub.s32 %v1843, %v1845
          %v1847 = vrot.slane %v1840, %v1846
          %v1848 = vcombine.low %v1823, %v1831
          %v1849 = vcombine.high %v1823, %v1831
          %v1851 = vunpack.c.l.s4 1934713408
          %v1852 = vunpack.c.0.s8 %v1851
          %v1853 = vlaneseq
          %v1854 = vshrl.u32 %v1853, 7
          %v1855 = vsub.s32 %v1852, %v1854
          %v1856 = vrot.slane %v1848, %v1855
          %v1858 = vunpack.c.l.s4 1934713408
          %v1859 = vunpack.c.0.s8 %v1858
          %v1860 = vlaneseq
          %v1861 = vshrl.u32 %v1860, 7
          %v1862 = vsub.s32 %v1859, %v1861
          %v1863 = vrot.slane %v1849, %v1862
          %v1864 = vcombine.low %v1839, %v1847
          %v1865 = vcombine.high %v1839, %v1847
          %v1867 = vunpack.c.l.s4 1934713408
          %v1868 = vunpack.c.0.s8 %v1867
          %v1869 = vlaneseq
          %v1870 = vshrl.u32 %v1869, 7
          %v1871 = vsub.s32 %v1868, %v1870
          %v1872 = vrot.slane %v1864, %v1871
          %v1874 = vunpack.c.l.s4 1934713408
          %v1875 = vunpack.c.0.s8 %v1874
          %v1876 = vlaneseq
          %v1877 = vshrl.u32 %v1876, 7
          %v1878 = vsub.s32 %v1875, %v1877
          %v1879 = vrot.slane %v1865, %v1878
          %v1880 = vcombine.low %v1856, %v1872
          %v1881 = vcombine.high %v1856, %v1872
          %v1882 = vcombine.low %v1863, %v1879
          %v1883 = vcombine.high %v1863, %v1879
          %1888 = vrot.lane.b32.xlu0 %v994, 120
          %v1889 = vpop.permute.xlu0 %1888
          %1890 = vrot.lane.b32.xlu0 %v997, 120
          %v1891 = vpop.permute.xlu0 %1890
          %1892 = vrot.lane.b32.xlu0 %v1002, 120
          %v1893 = vpop.permute.xlu0 %1892
          %1894 = vrot.lane.b32.xlu0 %v1005, 120
          %v1895 = vpop.permute.xlu0 %1894
          %1900 = vrot.lane.b32.xlu0 %v994, 112
          %v1901 = vpop.permute.xlu0 %1900
          %1902 = vrot.lane.b32.xlu0 %v997, 112
          %v1903 = vpop.permute.xlu0 %1902
          %1904 = vrot.lane.b32.xlu0 %v1002, 112
          %v1905 = vpop.permute.xlu0 %1904
          %1906 = vrot.lane.b32.xlu0 %v1005, 112
          %v1907 = vpop.permute.xlu0 %1906
          %1912 = vrot.lane.b32.xlu0 %v994, 104
          %v1913 = vpop.permute.xlu0 %1912
          %1914 = vrot.lane.b32.xlu0 %v997, 104
          %v1915 = vpop.permute.xlu0 %1914
          %1916 = vrot.lane.b32.xlu0 %v1002, 104
          %v1917 = vpop.permute.xlu0 %1916
          %1918 = vrot.lane.b32.xlu0 %v1005, 104
          %v1919 = vpop.permute.xlu0 %1918
          %v1924 = vcombine.low %v994, %v1901
          %v1925 = vcombine.high %v994, %v1901
          %v1927 = vunpack.c.l.s4 1983009808
          %v1928 = vunpack.c.0.s8 %v1927
          %v1929 = vlaneseq
          %v1930 = vshrl.u32 %v1929, 7
          %v1931 = vsub.s32 %v1928, %v1930
          %v1932 = vrot.slane %v1924, %v1931
          %v1934 = vunpack.c.l.s4 1983009808
          %v1935 = vunpack.c.0.s8 %v1934
          %v1936 = vlaneseq
          %v1937 = vshrl.u32 %v1936, 7
          %v1938 = vsub.s32 %v1935, %v1937
          %v1939 = vrot.slane %v1925, %v1938
          %v1940 = vcombine.low %v1889, %v1913
          %v1941 = vcombine.high %v1889, %v1913
          %v1943 = vunpack.c.l.s4 1983009808
          %v1944 = vunpack.c.0.s8 %v1943
          %v1945 = vlaneseq
          %v1946 = vshrl.u32 %v1945, 7
          %v1947 = vsub.s32 %v1944, %v1946
          %v1948 = vrot.slane %v1940, %v1947
          %v1950 = vunpack.c.l.s4 1983009808
          %v1951 = vunpack.c.0.s8 %v1950
          %v1952 = vlaneseq
          %v1953 = vshrl.u32 %v1952, 7
          %v1954 = vsub.s32 %v1951, %v1953
          %v1955 = vrot.slane %v1941, %v1954
          %v1956 = vcombine.low %v1932, %v1948
          %v1957 = vcombine.high %v1932, %v1948
          %v1959 = vunpack.c.l.s4 1934713408
          %v1960 = vunpack.c.0.s8 %v1959
          %v1961 = vlaneseq
          %v1962 = vshrl.u32 %v1961, 7
          %v1963 = vsub.s32 %v1960, %v1962
          %v1964 = vrot.slane %v1956, %v1963
          %v1966 = vunpack.c.l.s4 1934713408
          %v1967 = vunpack.c.0.s8 %v1966
          %v1968 = vlaneseq
          %v1969 = vshrl.u32 %v1968, 7
          %v1970 = vsub.s32 %v1967, %v1969
          %v1971 = vrot.slane %v1957, %v1970
          %v1972 = vcombine.low %v1939, %v1955
          %v1973 = vcombine.high %v1939, %v1955
          %v1975 = vunpack.c.l.s4 1934713408
          %v1976 = vunpack.c.0.s8 %v1975
          %v1977 = vlaneseq
          %v1978 = vshrl.u32 %v1977, 7
          %v1979 = vsub.s32 %v1976, %v1978
          %v1980 = vrot.slane %v1972, %v1979
          %v1982 = vunpack.c.l.s4 1934713408
          %v1983 = vunpack.c.0.s8 %v1982
          %v1984 = vlaneseq
          %v1985 = vshrl.u32 %v1984, 7
          %v1986 = vsub.s32 %v1983, %v1985
          %v1987 = vrot.slane %v1973, %v1986
          %v1988 = vcombine.high %v1964, 0.0
          %v1989 = vcombine.high %v1971, 0.0
          %v1990 = vcombine.high %v1980, 0.0
          %v1991 = vcombine.high %v1987, 0.0
          %v1992 = vcombine.low %v997, %v1903
          %v1993 = vcombine.high %v997, %v1903
          %v1995 = vunpack.c.l.s4 1983009808
          %v1996 = vunpack.c.0.s8 %v1995
          %v1997 = vlaneseq
          %v1998 = vshrl.u32 %v1997, 7
          %v1999 = vsub.s32 %v1996, %v1998
          %v2000 = vrot.slane %v1992, %v1999
          %v2002 = vunpack.c.l.s4 1983009808
          %v2003 = vunpack.c.0.s8 %v2002
          %v2004 = vlaneseq
          %v2005 = vshrl.u32 %v2004, 7
          %v2006 = vsub.s32 %v2003, %v2005
          %v2007 = vrot.slane %v1993, %v2006
          %v2008 = vcombine.low %v1891, %v1915
          %v2009 = vcombine.high %v1891, %v1915
          %v2011 = vunpack.c.l.s4 1983009808
          %v2012 = vunpack.c.0.s8 %v2011
          %v2013 = vlaneseq
          %v2014 = vshrl.u32 %v2013, 7
          %v2015 = vsub.s32 %v2012, %v2014
          %v2016 = vrot.slane %v2008, %v2015
          %v2018 = vunpack.c.l.s4 1983009808
          %v2019 = vunpack.c.0.s8 %v2018
          %v2020 = vlaneseq
          %v2021 = vshrl.u32 %v2020, 7
          %v2022 = vsub.s32 %v2019, %v2021
          %v2023 = vrot.slane %v2009, %v2022
          %v2024 = vcombine.low %v2000, %v2016
          %v2025 = vcombine.high %v2000, %v2016
          %v2027 = vunpack.c.l.s4 1934713408
          %v2028 = vunpack.c.0.s8 %v2027
          %v2029 = vlaneseq
          %v2030 = vshrl.u32 %v2029, 7
          %v2031 = vsub.s32 %v2028, %v2030
          %v2032 = vrot.slane %v2024, %v2031
          %v2034 = vunpack.c.l.s4 1934713408
          %v2035 = vunpack.c.0.s8 %v2034
          %v2036 = vlaneseq
          %v2037 = vshrl.u32 %v2036, 7
          %v2038 = vsub.s32 %v2035, %v2037
          %v2039 = vrot.slane %v2025, %v2038
          %v2040 = vcombine.low %v2007, %v2023
          %v2041 = vcombine.high %v2007, %v2023
          %v2043 = vunpack.c.l.s4 1934713408
          %v2044 = vunpack.c.0.s8 %v2043
          %v2045 = vlaneseq
          %v2046 = vshrl.u32 %v2045, 7
          %v2047 = vsub.s32 %v2044, %v2046
          %v2048 = vrot.slane %v2040, %v2047
          %v2050 = vunpack.c.l.s4 1934713408
          %v2051 = vunpack.c.0.s8 %v2050
          %v2052 = vlaneseq
          %v2053 = vshrl.u32 %v2052, 7
          %v2054 = vsub.s32 %v2051, %v2053
          %v2055 = vrot.slane %v2041, %v2054
          %v2056 = vcombine.high %v2032, 0.0
          %v2057 = vcombine.high %v2039, 0.0
          %v2058 = vcombine.high %v2048, 0.0
          %v2059 = vcombine.high %v2055, 0.0
          %v2060 = vcombine.low %v1002, %v1905
          %v2061 = vcombine.high %v1002, %v1905
          %v2063 = vunpack.c.l.s4 1983009808
          %v2064 = vunpack.c.0.s8 %v2063
          %v2065 = vlaneseq
          %v2066 = vshrl.u32 %v2065, 7
          %v2067 = vsub.s32 %v2064, %v2066
          %v2068 = vrot.slane %v2060, %v2067
          %v2070 = vunpack.c.l.s4 1983009808
          %v2071 = vunpack.c.0.s8 %v2070
          %v2072 = vlaneseq
          %v2073 = vshrl.u32 %v2072, 7
          %v2074 = vsub.s32 %v2071, %v2073
          %v2075 = vrot.slane %v2061, %v2074
          %v2076 = vcombine.low %v1893, %v1917
          %v2077 = vcombine.high %v1893, %v1917
          %v2079 = vunpack.c.l.s4 1983009808
          %v2080 = vunpack.c.0.s8 %v2079
          %v2081 = vlaneseq
          %v2082 = vshrl.u32 %v2081, 7
          %v2083 = vsub.s32 %v2080, %v2082
          %v2084 = vrot.slane %v2076, %v2083
          %v2086 = vunpack.c.l.s4 1983009808
          %v2087 = vunpack.c.0.s8 %v2086
          %v2088 = vlaneseq
          %v2089 = vshrl.u32 %v2088, 7
          %v2090 = vsub.s32 %v2087, %v2089
          %v2091 = vrot.slane %v2077, %v2090
          %v2092 = vcombine.low %v2068, %v2084
          %v2093 = vcombine.high %v2068, %v2084
          %v2095 = vunpack.c.l.s4 1934713408
          %v2096 = vunpack.c.0.s8 %v2095
          %v2097 = vlaneseq
          %v2098 = vshrl.u32 %v2097, 7
          %v2099 = vsub.s32 %v2096, %v2098
          %v2100 = vrot.slane %v2092, %v2099
          %v2102 = vunpack.c.l.s4 1934713408
          %v2103 = vunpack.c.0.s8 %v2102
          %v2104 = vlaneseq
          %v2105 = vshrl.u32 %v2104, 7
          %v2106 = vsub.s32 %v2103, %v2105
          %v2107 = vrot.slane %v2093, %v2106
          %v2108 = vcombine.low %v2075, %v2091
          %v2109 = vcombine.high %v2075, %v2091
          %v2111 = vunpack.c.l.s4 1934713408
          %v2112 = vunpack.c.0.s8 %v2111
          %v2113 = vlaneseq
          %v2114 = vshrl.u32 %v2113, 7
          %v2115 = vsub.s32 %v2112, %v2114
          %v2116 = vrot.slane %v2108, %v2115
          %v2118 = vunpack.c.l.s4 1934713408
          %v2119 = vunpack.c.0.s8 %v2118
          %v2120 = vlaneseq
          %v2121 = vshrl.u32 %v2120, 7
          %v2122 = vsub.s32 %v2119, %v2121
          %v2123 = vrot.slane %v2109, %v2122
          %v2124 = vcombine.high %v2100, 0.0
          %v2125 = vcombine.high %v2107, 0.0
          %v2126 = vcombine.high %v2116, 0.0
          %v2127 = vcombine.high %v2123, 0.0
          %v2128 = vcombine.low %v1005, %v1907
          %v2129 = vcombine.high %v1005, %v1907
          %v2131 = vunpack.c.l.s4 1983009808
          %v2132 = vunpack.c.0.s8 %v2131
          %v2133 = vlaneseq
          %v2134 = vshrl.u32 %v2133, 7
          %v2135 = vsub.s32 %v2132, %v2134
          %v2136 = vrot.slane %v2128, %v2135
          %v2138 = vunpack.c.l.s4 1983009808
          %v2139 = vunpack.c.0.s8 %v2138
          %v2140 = vlaneseq
          %v2141 = vshrl.u32 %v2140, 7
          %v2142 = vsub.s32 %v2139, %v2141
          %v2143 = vrot.slane %v2129, %v2142
          %v2144 = vcombine.low %v1895, %v1919
          %v2145 = vcombine.high %v1895, %v1919
          %v2147 = vunpack.c.l.s4 1983009808
          %v2148 = vunpack.c.0.s8 %v2147
          %v2149 = vlaneseq
          %v2150 = vshrl.u32 %v2149, 7
          %v2151 = vsub.s32 %v2148, %v2150
          %v2152 = vrot.slane %v2144, %v2151
          %v2154 = vunpack.c.l.s4 1983009808
          %v2155 = vunpack.c.0.s8 %v2154
          %v2156 = vlaneseq
          %v2157 = vshrl.u32 %v2156, 7
          %v2158 = vsub.s32 %v2155, %v2157
          %v2159 = vrot.slane %v2145, %v2158
          %v2160 = vcombine.low %v2136, %v2152
          %v2161 = vcombine.high %v2136, %v2152
          %v2163 = vunpack.c.l.s4 1934713408
          %v2164 = vunpack.c.0.s8 %v2163
          %v2165 = vlaneseq
          %v2166 = vshrl.u32 %v2165, 7
          %v2167 = vsub.s32 %v2164, %v2166
          %v2168 = vrot.slane %v2160, %v2167
          %v2170 = vunpack.c.l.s4 1934713408
          %v2171 = vunpack.c.0.s8 %v2170
          %v2172 = vlaneseq
          %v2173 = vshrl.u32 %v2172, 7
          %v2174 = vsub.s32 %v2171, %v2173
          %v2175 = vrot.slane %v2161, %v2174
          %v2176 = vcombine.low %v2143, %v2159
          %v2177 = vcombine.high %v2143, %v2159
          %v2179 = vunpack.c.l.s4 1934713408
          %v2180 = vunpack.c.0.s8 %v2179
          %v2181 = vlaneseq
          %v2182 = vshrl.u32 %v2181, 7
          %v2183 = vsub.s32 %v2180, %v2182
          %v2184 = vrot.slane %v2176, %v2183
          %v2186 = vunpack.c.l.s4 1934713408
          %v2187 = vunpack.c.0.s8 %v2186
          %v2188 = vlaneseq
          %v2189 = vshrl.u32 %v2188, 7
          %v2190 = vsub.s32 %v2187, %v2189
          %v2191 = vrot.slane %v2177, %v2190
          %v2192 = vcombine.high %v2168, 0.0
          %v2193 = vcombine.high %v2175, 0.0
          %v2194 = vcombine.high %v2184, 0.0
          %v2195 = vcombine.high %v2191, 0.0
          %v2196 = vcombine.low %v1964, %v1971
          %v2198 = vunpack.c.l.s4 1983009808
          %v2199 = vunpack.c.0.s8 %v2198
          %v2200 = vlaneseq
          %v2201 = vshrl.u32 %v2200, 7
          %v2202 = vsub.s32 %v2199, %v2201
          %v2203 = vrot.slane %v2196, %v2202
          %v2204 = vcombine.low %v1988, %v1989
          %v2206 = vunpack.c.l.s4 1983009808
          %v2207 = vunpack.c.0.s8 %v2206
          %v2208 = vlaneseq
          %v2209 = vshrl.u32 %v2208, 7
          %v2210 = vsub.s32 %v2207, %v2209
          %v2211 = vrot.slane %v2204, %v2210
          %v2212 = vcombine.low %v1980, %v1987
          %v2214 = vunpack.c.l.s4 1983009808
          %v2215 = vunpack.c.0.s8 %v2214
          %v2216 = vlaneseq
          %v2217 = vshrl.u32 %v2216, 7
          %v2218 = vsub.s32 %v2215, %v2217
          %v2219 = vrot.slane %v2212, %v2218
          %v2220 = vcombine.low %v1990, %v1991
          %v2222 = vunpack.c.l.s4 1983009808
          %v2223 = vunpack.c.0.s8 %v2222
          %v2224 = vlaneseq
          %v2225 = vshrl.u32 %v2224, 7
          %v2226 = vsub.s32 %v2223, %v2225
          %v2227 = vrot.slane %v2220, %v2226
          %v2228 = vcombine.low %v2203, %v2211
          %v2229 = vcombine.high %v2203, %v2211
          %v2231 = vunpack.c.l.s4 1934713408
          %v2232 = vunpack.c.0.s8 %v2231
          %v2233 = vlaneseq
          %v2234 = vshrl.u32 %v2233, 7
          %v2235 = vsub.s32 %v2232, %v2234
          %v2236 = vrot.slane %v2228, %v2235
          %v2238 = vunpack.c.l.s4 1934713408
          %v2239 = vunpack.c.0.s8 %v2238
          %v2240 = vlaneseq
          %v2241 = vshrl.u32 %v2240, 7
          %v2242 = vsub.s32 %v2239, %v2241
          %v2243 = vrot.slane %v2229, %v2242
          %v2244 = vcombine.low %v2219, %v2227
          %v2245 = vcombine.high %v2219, %v2227
          %v2247 = vunpack.c.l.s4 1934713408
          %v2248 = vunpack.c.0.s8 %v2247
          %v2249 = vlaneseq
          %v2250 = vshrl.u32 %v2249, 7
          %v2251 = vsub.s32 %v2248, %v2250
          %v2252 = vrot.slane %v2244, %v2251
          %v2254 = vunpack.c.l.s4 1934713408
          %v2255 = vunpack.c.0.s8 %v2254
          %v2256 = vlaneseq
          %v2257 = vshrl.u32 %v2256, 7
          %v2258 = vsub.s32 %v2255, %v2257
          %v2259 = vrot.slane %v2245, %v2258
          %v2260 = vcombine.low %v2236, %v2252
          %v2261 = vcombine.high %v2236, %v2252
          %v2262 = vcombine.low %v2243, %v2259
          %v2263 = vcombine.high %v2243, %v2259
          %v2264 = vcombine.low %v2032, %v2039
          %v2266 = vunpack.c.l.s4 1983009808
          %v2267 = vunpack.c.0.s8 %v2266
          %v2268 = vlaneseq
          %v2269 = vshrl.u32 %v2268, 7
          %v2270 = vsub.s32 %v2267, %v2269
          %v2271 = vrot.slane %v2264, %v2270
          %v2272 = vcombine.low %v2056, %v2057
          %v2274 = vunpack.c.l.s4 1983009808
          %v2275 = vunpack.c.0.s8 %v2274
          %v2276 = vlaneseq
          %v2277 = vshrl.u32 %v2276, 7
          %v2278 = vsub.s32 %v2275, %v2277
          %v2279 = vrot.slane %v2272, %v2278
          %v2280 = vcombine.low %v2048, %v2055
          %v2282 = vunpack.c.l.s4 1983009808
          %v2283 = vunpack.c.0.s8 %v2282
          %v2284 = vlaneseq
          %v2285 = vshrl.u32 %v2284, 7
          %v2286 = vsub.s32 %v2283, %v2285
          %v2287 = vrot.slane %v2280, %v2286
          %v2288 = vcombine.low %v2058, %v2059
          %v2290 = vunpack.c.l.s4 1983009808
          %v2291 = vunpack.c.0.s8 %v2290
          %v2292 = vlaneseq
          %v2293 = vshrl.u32 %v2292, 7
          %v2294 = vsub.s32 %v2291, %v2293
          %v2295 = vrot.slane %v2288, %v2294
          %v2296 = vcombine.low %v2271, %v2279
          %v2297 = vcombine.high %v2271, %v2279
          %v2299 = vunpack.c.l.s4 1934713408
          %v2300 = vunpack.c.0.s8 %v2299
          %v2301 = vlaneseq
          %v2302 = vshrl.u32 %v2301, 7
          %v2303 = vsub.s32 %v2300, %v2302
          %v2304 = vrot.slane %v2296, %v2303
          %v2306 = vunpack.c.l.s4 1934713408
          %v2307 = vunpack.c.0.s8 %v2306
          %v2308 = vlaneseq
          %v2309 = vshrl.u32 %v2308, 7
          %v2310 = vsub.s32 %v2307, %v2309
          %v2311 = vrot.slane %v2297, %v2310
          %v2312 = vcombine.low %v2287, %v2295
          %v2313 = vcombine.high %v2287, %v2295
          %v2315 = vunpack.c.l.s4 1934713408
          %v2316 = vunpack.c.0.s8 %v2315
          %v2317 = vlaneseq
          %v2318 = vshrl.u32 %v2317, 7
          %v2319 = vsub.s32 %v2316, %v2318
          %v2320 = vrot.slane %v2312, %v2319
          %v2322 = vunpack.c.l.s4 1934713408
          %v2323 = vunpack.c.0.s8 %v2322
          %v2324 = vlaneseq
          %v2325 = vshrl.u32 %v2324, 7
          %v2326 = vsub.s32 %v2323, %v2325
          %v2327 = vrot.slane %v2313, %v2326
          %v2328 = vcombine.low %v2304, %v2320
          %v2329 = vcombine.high %v2304, %v2320
          %v2330 = vcombine.low %v2311, %v2327
          %v2331 = vcombine.high %v2311, %v2327
          %v2332 = vcombine.low %v2100, %v2107
          %v2334 = vunpack.c.l.s4 1983009808
          %v2335 = vunpack.c.0.s8 %v2334
          %v2336 = vlaneseq
          %v2337 = vshrl.u32 %v2336, 7
          %v2338 = vsub.s32 %v2335, %v2337
          %v2339 = vrot.slane %v2332, %v2338
          %v2340 = vcombine.low %v2124, %v2125
          %v2342 = vunpack.c.l.s4 1983009808
          %v2343 = vunpack.c.0.s8 %v2342
          %v2344 = vlaneseq
          %v2345 = vshrl.u32 %v2344, 7
          %v2346 = vsub.s32 %v2343, %v2345
          %v2347 = vrot.slane %v2340, %v2346
          %v2348 = vcombine.low %v2116, %v2123
          %v2350 = vunpack.c.l.s4 1983009808
          %v2351 = vunpack.c.0.s8 %v2350
          %v2352 = vlaneseq
          %v2353 = vshrl.u32 %v2352, 7
          %v2354 = vsub.s32 %v2351, %v2353
          %v2355 = vrot.slane %v2348, %v2354
          %v2356 = vcombine.low %v2126, %v2127
          %v2358 = vunpack.c.l.s4 1983009808
          %v2359 = vunpack.c.0.s8 %v2358
          %v2360 = vlaneseq
          %v2361 = vshrl.u32 %v2360, 7
          %v2362 = vsub.s32 %v2359, %v2361
          %v2363 = vrot.slane %v2356, %v2362
          %v2364 = vcombine.low %v2339, %v2347
          %v2365 = vcombine.high %v2339, %v2347
          %v2367 = vunpack.c.l.s4 1934713408
          %v2368 = vunpack.c.0.s8 %v2367
          %v2369 = vlaneseq
          %v2370 = vshrl.u32 %v2369, 7
          %v2371 = vsub.s32 %v2368, %v2370
          %v2372 = vrot.slane %v2364, %v2371
          %v2374 = vunpack.c.l.s4 1934713408
          %v2375 = vunpack.c.0.s8 %v2374
          %v2376 = vlaneseq
          %v2377 = vshrl.u32 %v2376, 7
          %v2378 = vsub.s32 %v2375, %v2377
          %v2379 = vrot.slane %v2365, %v2378
          %v2380 = vcombine.low %v2355, %v2363
          %v2381 = vcombine.high %v2355, %v2363
          %v2383 = vunpack.c.l.s4 1934713408
          %v2384 = vunpack.c.0.s8 %v2383
          %v2385 = vlaneseq
          %v2386 = vshrl.u32 %v2385, 7
          %v2387 = vsub.s32 %v2384, %v2386
          %v2388 = vrot.slane %v2380, %v2387
          %v2390 = vunpack.c.l.s4 1934713408
          %v2391 = vunpack.c.0.s8 %v2390
          %v2392 = vlaneseq
          %v2393 = vshrl.u32 %v2392, 7
          %v2394 = vsub.s32 %v2391, %v2393
          %v2395 = vrot.slane %v2381, %v2394
          %v2396 = vcombine.low %v2372, %v2388
          %v2397 = vcombine.high %v2372, %v2388
          %v2398 = vcombine.low %v2379, %v2395
          %v2399 = vcombine.high %v2379, %v2395
          %v2400 = vcombine.low %v2168, %v2175
          %v2402 = vunpack.c.l.s4 1983009808
          %v2403 = vunpack.c.0.s8 %v2402
          %v2404 = vlaneseq
          %v2405 = vshrl.u32 %v2404, 7
          %v2406 = vsub.s32 %v2403, %v2405
          %v2407 = vrot.slane %v2400, %v2406
          %v2408 = vcombine.low %v2192, %v2193
          %v2410 = vunpack.c.l.s4 1983009808
          %v2411 = vunpack.c.0.s8 %v2410
          %v2412 = vlaneseq
          %v2413 = vshrl.u32 %v2412, 7
          %v2414 = vsub.s32 %v2411, %v2413
          %v2415 = vrot.slane %v2408, %v2414
          %v2416 = vcombine.low %v2184, %v2191
          %v2418 = vunpack.c.l.s4 1983009808
          %v2419 = vunpack.c.0.s8 %v2418
          %v2420 = vlaneseq
          %v2421 = vshrl.u32 %v2420, 7
          %v2422 = vsub.s32 %v2419, %v2421
          %v2423 = vrot.slane %v2416, %v2422
          %v2424 = vcombine.low %v2194, %v2195
          %v2426 = vunpack.c.l.s4 1983009808
          %v2427 = vunpack.c.0.s8 %v2426
          %v2428 = vlaneseq
          %v2429 = vshrl.u32 %v2428, 7
          %v2430 = vsub.s32 %v2427, %v2429
          %v2431 = vrot.slane %v2424, %v2430
          %v2432 = vcombine.low %v2407, %v2415
          %v2433 = vcombine.high %v2407, %v2415
          %v2435 = vunpack.c.l.s4 1934713408
          %v2436 = vunpack.c.0.s8 %v2435
          %v2437 = vlaneseq
          %v2438 = vshrl.u32 %v2437, 7
          %v2439 = vsub.s32 %v2436, %v2438
          %v2440 = vrot.slane %v2432, %v2439
          %v2442 = vunpack.c.l.s4 1934713408
          %v2443 = vunpack.c.0.s8 %v2442
          %v2444 = vlaneseq
          %v2445 = vshrl.u32 %v2444, 7
          %v2446 = vsub.s32 %v2443, %v2445
          %v2447 = vrot.slane %v2433, %v2446
          %v2448 = vcombine.low %v2423, %v2431
          %v2449 = vcombine.high %v2423, %v2431
          %v2451 = vunpack.c.l.s4 1934713408
          %v2452 = vunpack.c.0.s8 %v2451
          %v2453 = vlaneseq
          %v2454 = vshrl.u32 %v2453, 7
          %v2455 = vsub.s32 %v2452, %v2454
          %v2456 = vrot.slane %v2448, %v2455
          %v2458 = vunpack.c.l.s4 1934713408
          %v2459 = vunpack.c.0.s8 %v2458
          %v2460 = vlaneseq
          %v2461 = vshrl.u32 %v2460, 7
          %v2462 = vsub.s32 %v2459, %v2461
          %v2463 = vrot.slane %v2449, %v2462
          %v2464 = vcombine.low %v2440, %v2456
          %v2465 = vcombine.high %v2440, %v2456
          %v2466 = vcombine.low %v2447, %v2463
          %v2467 = vcombine.high %v2447, %v2463
          %v2468 = vpack.c.bf16 %v1228, %v1228
          %v2469 = vpack.c.bf16 %v1229, %v1229
          %v2470 = vpack.c.bf16 %v1230, %v1230
          %v2471 = vpack.c.bf16 %v1231, %v1231
          %v2472 = vpack.c.bf16 %v1296, %v1296
          %v2473 = vpack.c.bf16 %v1297, %v1297
          %v2474 = vpack.c.bf16 %v1298, %v1298
          %v2475 = vpack.c.bf16 %v1299, %v1299
          %v2476 = vpack.c.bf16 %v1744, %v1676
          %v2477 = vpack.c.bf16 %v1745, %v1677
          %v2478 = vpack.c.bf16 %v1746, %v1678
          %v2479 = vpack.c.bf16 %v1747, %v1679
          %v2480 = vpack.c.bf16 %v1880, %v1812
          %v2481 = vpack.c.bf16 %v1881, %v1813
          %v2482 = vpack.c.bf16 %v1882, %v1814
          %v2483 = vpack.c.bf16 %v1883, %v1815
          %vm2484 = vcmask 64512
          %v2486 = vsel %vm2484, %v2468, 0
          %v2489 = vsel %vm2484, %v2476, 0
          %2491 = vmatprep.subr.bf16.mxu0 0
          %2492 = vmatpush1.bf16.xpose.msra.mxu0 %v2489
          %2493 = vmatprep.subr.bf16.mxu0 0
          %2494 = vmatpush1.bf16.xpose.msra.mxu0 0
          %2495 = vmatprep.subr.bf16.mxu0 0
          %2496 = vmatpush1.bf16.xpose.msra.mxu0 0
          %2497 = vmatprep.subr.bf16.mxu0 0
          %2498 = vmatpush1.bf16.xpose.msra.mxu0 0
          %2499 = vmatprep.subr.bf16.mxu0 0
          %2500 = vmatpush1.bf16.xpose.msra.mxu0 0
          %2501 = vmatprep.subr.bf16.mxu0 0
          %2502 = vmatpush1.bf16.xpose.msra.mxu0 0
          %2503 = vmatprep.subr.bf16.mxu0 0
          %2504 = vmatpush1.bf16.xpose.msra.mxu0 0
          %2505 = vmatprep.subr.bf16.mxu0 0
          %2506 = vmatpush1.bf16.xpose.msra.mxu0 0
          %2507 = vmatprep.subr.bf16.mxu0 0
          %2508 = vmatpush1.bf16.xpose.msra.mxu0 0
          %2509 = vmatprep.subr.bf16.mxu0 0
          %2510 = vmatpush1.bf16.xpose.msra.mxu0 0
          %2511 = vmatprep.subr.bf16.mxu0 0
          %2512 = vmatpush1.bf16.xpose.msra.mxu0 0
          %2513 = vmatprep.subr.bf16.mxu0 0
          %2514 = vmatpush1.bf16.xpose.msra.mxu0 0
          %2515 = vmatprep.subr.bf16.mxu0 0
          %2516 = vmatpush1.bf16.xpose.msra.mxu0 0
          %2517 = vmatprep.subr.bf16.mxu0 0
          %2518 = vmatpush1.bf16.xpose.msra.mxu0 0
          %2519 = vmatprep.subr.bf16.mxu0 0
          %2520 = vmatpush1.bf16.xpose.msra.mxu0 0
          %2521 = vmatprep.subr.bf16.mxu0 0
          %2522 = vmatpush1.bf16.xpose.msra.mxu0 0
          %2523 = vmatprep.mubr.bf16.mxu0 0
          %2524 = vmatmul.mubr.bf16.gmra.mrb[0].mxu0 %v2486
          %v2525 = vpop.f32.mrb[0].mxu0
          %v2526 = vadd.f32 0.0, %v2525
          %v2527 = vpop.f32.mrb[0].mxu0
          %v2528 = vpop.f32.mrb[0].mxu0
          %v2529 = vpop.f32.mrb[0].mxu0
          %2530 = vdwg.mxu0
          %v2532 = vsel %vm2484, %v2469, 0
          %v2535 = vsel %vm2484, %v2477, 0
          %2537 = vmatprep.subr.bf16.mxu0 0
          %2538 = vmatpush1.bf16.xpose.msra.mxu0 %v2535
          %2539 = vmatprep.subr.bf16.mxu0 0
          %2540 = vmatpush1.bf16.xpose.msra.mxu0 0
          %2541 = vmatprep.subr.bf16.mxu0 0
          %2542 = vmatpush1.bf16.xpose.msra.mxu0 0
          %2543 = vmatprep.subr.bf16.mxu0 0
          %2544 = vmatpush1.bf16.xpose.msra.mxu0 0
          %2545 = vmatprep.subr.bf16.mxu0 0
          %2546 = vmatpush1.bf16.xpose.msra.mxu0 0
          %2547 = vmatprep.subr.bf16.mxu0 0
          %2548 = vmatpush1.bf16.xpose.msra.mxu0 0
          %2549 = vmatprep.subr.bf16.mxu0 0
          %2550 = vmatpush1.bf16.xpose.msra.mxu0 0
          %2551 = vmatprep.subr.bf16.mxu0 0
          %2552 = vmatpush1.bf16.xpose.msra.mxu0 0
          %2553 = vmatprep.subr.bf16.mxu0 0
          %2554 = vmatpush1.bf16.xpose.msra.mxu0 0
          %2555 = vmatprep.subr.bf16.mxu0 0
          %2556 = vmatpush1.bf16.xpose.msra.mxu0 0
          %2557 = vmatprep.subr.bf16.mxu0 0
          %2558 = vmatpush1.bf16.xpose.msra.mxu0 0
          %2559 = vmatprep.subr.bf16.mxu0 0
          %2560 = vmatpush1.bf16.xpose.msra.mxu0 0
          %2561 = vmatprep.subr.bf16.mxu0 0
          %2562 = vmatpush1.bf16.xpose.msra.mxu0 0
          %2563 = vmatprep.subr.bf16.mxu0 0
          %2564 = vmatpush1.bf16.xpose.msra.mxu0 0
          %2565 = vmatprep.subr.bf16.mxu0 0
          %2566 = vmatpush1.bf16.xpose.msra.mxu0 0
          %2567 = vmatprep.subr.bf16.mxu0 0
          %2568 = vmatpush1.bf16.xpose.msra.mxu0 0
          %2569 = vmatprep.mubr.bf16.mxu0 0
          %2570 = vmatmul.mubr.bf16.gmra.mrb[0].mxu0 %v2532
          %v2571 = vpop.f32.mrb[0].mxu0
          %v2572 = vadd.f32 0.0, %v2571
          %v2573 = vpop.f32.mrb[0].mxu0
          %v2574 = vpop.f32.mrb[0].mxu0
          %v2575 = vpop.f32.mrb[0].mxu0
          %2576 = vdwg.mxu0
          %v2578 = vsel %vm2484, %v2470, 0
          %v2581 = vsel %vm2484, %v2478, 0
          %2583 = vmatprep.subr.bf16.mxu0 0
          %2584 = vmatpush1.bf16.xpose.msra.mxu0 %v2581
          %2585 = vmatprep.subr.bf16.mxu0 0
          %2586 = vmatpush1.bf16.xpose.msra.mxu0 0
          %2587 = vmatprep.subr.bf16.mxu0 0
          %2588 = vmatpush1.bf16.xpose.msra.mxu0 0
          %2589 = vmatprep.subr.bf16.mxu0 0
          %2590 = vmatpush1.bf16.xpose.msra.mxu0 0
          %2591 = vmatprep.subr.bf16.mxu0 0
          %2592 = vmatpush1.bf16.xpose.msra.mxu0 0
          %2593 = vmatprep.subr.bf16.mxu0 0
          %2594 = vmatpush1.bf16.xpose.msra.mxu0 0
          %2595 = vmatprep.subr.bf16.mxu0 0
          %2596 = vmatpush1.bf16.xpose.msra.mxu0 0
          %2597 = vmatprep.subr.bf16.mxu0 0
          %2598 = vmatpush1.bf16.xpose.msra.mxu0 0
          %2599 = vmatprep.subr.bf16.mxu0 0
          %2600 = vmatpush1.bf16.xpose.msra.mxu0 0
          %2601 = vmatprep.subr.bf16.mxu0 0
          %2602 = vmatpush1.bf16.xpose.msra.mxu0 0
          %2603 = vmatprep.subr.bf16.mxu0 0
          %2604 = vmatpush1.bf16.xpose.msra.mxu0 0
          %2605 = vmatprep.subr.bf16.mxu0 0
          %2606 = vmatpush1.bf16.xpose.msra.mxu0 0
          %2607 = vmatprep.subr.bf16.mxu0 0
          %2608 = vmatpush1.bf16.xpose.msra.mxu0 0
          %2609 = vmatprep.subr.bf16.mxu0 0
          %2610 = vmatpush1.bf16.xpose.msra.mxu0 0
          %2611 = vmatprep.subr.bf16.mxu0 0
          %2612 = vmatpush1.bf16.xpose.msra.mxu0 0
          %2613 = vmatprep.subr.bf16.mxu0 0
          %2614 = vmatpush1.bf16.xpose.msra.mxu0 0
          %2615 = vmatprep.mubr.bf16.mxu0 0
          %2616 = vmatmul.mubr.bf16.gmra.mrb[0].mxu0 %v2578
          %v2617 = vpop.f32.mrb[0].mxu0
          %v2618 = vadd.f32 0.0, %v2617
          %v2619 = vpop.f32.mrb[0].mxu0
          %v2620 = vpop.f32.mrb[0].mxu0
          %v2621 = vpop.f32.mrb[0].mxu0
          %2622 = vdwg.mxu0
          %v2624 = vsel %vm2484, %v2471, 0
          %v2627 = vsel %vm2484, %v2479, 0
          %2629 = vmatprep.subr.bf16.mxu0 0
          %2630 = vmatpush1.bf16.xpose.msra.mxu0 %v2627
          %2631 = vmatprep.subr.bf16.mxu0 0
          %2632 = vmatpush1.bf16.xpose.msra.mxu0 0
          %2633 = vmatprep.subr.bf16.mxu0 0
          %2634 = vmatpush1.bf16.xpose.msra.mxu0 0
          %2635 = vmatprep.subr.bf16.mxu0 0
          %2636 = vmatpush1.bf16.xpose.msra.mxu0 0
          %2637 = vmatprep.subr.bf16.mxu0 0
          %2638 = vmatpush1.bf16.xpose.msra.mxu0 0
          %2639 = vmatprep.subr.bf16.mxu0 0
          %2640 = vmatpush1.bf16.xpose.msra.mxu0 0
          %2641 = vmatprep.subr.bf16.mxu0 0
          %2642 = vmatpush1.bf16.xpose.msra.mxu0 0
          %2643 = vmatprep.subr.bf16.mxu0 0
          %2644 = vmatpush1.bf16.xpose.msra.mxu0 0
          %2645 = vmatprep.subr.bf16.mxu0 0
          %2646 = vmatpush1.bf16.xpose.msra.mxu0 0
          %2647 = vmatprep.subr.bf16.mxu0 0
          %2648 = vmatpush1.bf16.xpose.msra.mxu0 0
          %2649 = vmatprep.subr.bf16.mxu0 0
          %2650 = vmatpush1.bf16.xpose.msra.mxu0 0
          %2651 = vmatprep.subr.bf16.mxu0 0
          %2652 = vmatpush1.bf16.xpose.msra.mxu0 0
          %2653 = vmatprep.subr.bf16.mxu0 0
          %2654 = vmatpush1.bf16.xpose.msra.mxu0 0
          %2655 = vmatprep.subr.bf16.mxu0 0
          %2656 = vmatpush1.bf16.xpose.msra.mxu0 0
          %2657 = vmatprep.subr.bf16.mxu0 0
          %2658 = vmatpush1.bf16.xpose.msra.mxu0 0
          %2659 = vmatprep.subr.bf16.mxu0 0
          %2660 = vmatpush1.bf16.xpose.msra.mxu0 0
          %2661 = vmatprep.mubr.bf16.mxu0 0
          %2662 = vmatmul.mubr.bf16.gmra.mrb[0].mxu0 %v2624
          %v2663 = vpop.f32.mrb[0].mxu0
          %v2664 = vadd.f32 0.0, %v2663
          %v2665 = vpop.f32.mrb[0].mxu0
          %v2666 = vpop.f32.mrb[0].mxu0
          %v2667 = vpop.f32.mrb[0].mxu0
          %2668 = vdwg.mxu0
          %v2670 = vsel %vm2484, %v2472, 0
          %v2673 = vsel %vm2484, %v2480, 0
          %2675 = vmatprep.subr.bf16.mxu0 0
          %2676 = vmatpush1.bf16.xpose.msra.mxu0 %v2673
          %2677 = vmatprep.subr.bf16.mxu0 0
          %2678 = vmatpush1.bf16.xpose.msra.mxu0 0
          %2679 = vmatprep.subr.bf16.mxu0 0
          %2680 = vmatpush1.bf16.xpose.msra.mxu0 0
          %2681 = vmatprep.subr.bf16.mxu0 0
          %2682 = vmatpush1.bf16.xpose.msra.mxu0 0
          %2683 = vmatprep.subr.bf16.mxu0 0
          %2684 = vmatpush1.bf16.xpose.msra.mxu0 0
          %2685 = vmatprep.subr.bf16.mxu0 0
          %2686 = vmatpush1.bf16.xpose.msra.mxu0 0
          %2687 = vmatprep.subr.bf16.mxu0 0
          %2688 = vmatpush1.bf16.xpose.msra.mxu0 0
          %2689 = vmatprep.subr.bf16.mxu0 0
          %2690 = vmatpush1.bf16.xpose.msra.mxu0 0
          %2691 = vmatprep.subr.bf16.mxu0 0
          %2692 = vmatpush1.bf16.xpose.msra.mxu0 0
          %2693 = vmatprep.subr.bf16.mxu0 0
          %2694 = vmatpush1.bf16.xpose.msra.mxu0 0
          %2695 = vmatprep.subr.bf16.mxu0 0
          %2696 = vmatpush1.bf16.xpose.msra.mxu0 0
          %2697 = vmatprep.subr.bf16.mxu0 0
          %2698 = vmatpush1.bf16.xpose.msra.mxu0 0
          %2699 = vmatprep.subr.bf16.mxu0 0
          %2700 = vmatpush1.bf16.xpose.msra.mxu0 0
          %2701 = vmatprep.subr.bf16.mxu0 0
          %2702 = vmatpush1.bf16.xpose.msra.mxu0 0
          %2703 = vmatprep.subr.bf16.mxu0 0
          %2704 = vmatpush1.bf16.xpose.msra.mxu0 0
          %2705 = vmatprep.subr.bf16.mxu0 0
          %2706 = vmatpush1.bf16.xpose.msra.mxu0 0
          %2707 = vmatprep.mubr.bf16.mxu0 0
          %2708 = vmatmul.mubr.bf16.gmra.mrb[0].mxu0 %v2670
          %v2709 = vpop.f32.mrb[0].mxu0
          %v2710 = vadd.f32 0.0, %v2709
          %v2711 = vpop.f32.mrb[0].mxu0
          %v2712 = vpop.f32.mrb[0].mxu0
          %v2713 = vpop.f32.mrb[0].mxu0
          %2714 = vdwg.mxu0
          %v2716 = vsel %vm2484, %v2473, 0
          %v2719 = vsel %vm2484, %v2481, 0
          %2721 = vmatprep.subr.bf16.mxu0 0
          %2722 = vmatpush1.bf16.xpose.msra.mxu0 %v2719
          %2723 = vmatprep.subr.bf16.mxu0 0
          %2724 = vmatpush1.bf16.xpose.msra.mxu0 0
          %2725 = vmatprep.subr.bf16.mxu0 0
          %2726 = vmatpush1.bf16.xpose.msra.mxu0 0
          %2727 = vmatprep.subr.bf16.mxu0 0
          %2728 = vmatpush1.bf16.xpose.msra.mxu0 0
          %2729 = vmatprep.subr.bf16.mxu0 0
          %2730 = vmatpush1.bf16.xpose.msra.mxu0 0
          %2731 = vmatprep.subr.bf16.mxu0 0
          %2732 = vmatpush1.bf16.xpose.msra.mxu0 0
          %2733 = vmatprep.subr.bf16.mxu0 0
          %2734 = vmatpush1.bf16.xpose.msra.mxu0 0
          %2735 = vmatprep.subr.bf16.mxu0 0
          %2736 = vmatpush1.bf16.xpose.msra.mxu0 0
          %2737 = vmatprep.subr.bf16.mxu0 0
          %2738 = vmatpush1.bf16.xpose.msra.mxu0 0
          %2739 = vmatprep.subr.bf16.mxu0 0
          %2740 = vmatpush1.bf16.xpose.msra.mxu0 0
          %2741 = vmatprep.subr.bf16.mxu0 0
          %2742 = vmatpush1.bf16.xpose.msra.mxu0 0
          %2743 = vmatprep.subr.bf16.mxu0 0
          %2744 = vmatpush1.bf16.xpose.msra.mxu0 0
          %2745 = vmatprep.subr.bf16.mxu0 0
          %2746 = vmatpush1.bf16.xpose.msra.mxu0 0
          %2747 = vmatprep.subr.bf16.mxu0 0
          %2748 = vmatpush1.bf16.xpose.msra.mxu0 0
          %2749 = vmatprep.subr.bf16.mxu0 0
          %2750 = vmatpush1.bf16.xpose.msra.mxu0 0
          %2751 = vmatprep.subr.bf16.mxu0 0
          %2752 = vmatpush1.bf16.xpose.msra.mxu0 0
          %2753 = vmatprep.mubr.bf16.mxu0 0
          %2754 = vmatmul.mubr.bf16.gmra.mrb[0].mxu0 %v2716
          %v2755 = vpop.f32.mrb[0].mxu0
          %v2756 = vadd.f32 0.0, %v2755
          %v2757 = vpop.f32.mrb[0].mxu0
          %v2758 = vpop.f32.mrb[0].mxu0
          %v2759 = vpop.f32.mrb[0].mxu0
          %2760 = vdwg.mxu0
          %v2762 = vsel %vm2484, %v2474, 0
          %v2765 = vsel %vm2484, %v2482, 0
          %2767 = vmatprep.subr.bf16.mxu0 0
          %2768 = vmatpush1.bf16.xpose.msra.mxu0 %v2765
          %2769 = vmatprep.subr.bf16.mxu0 0
          %2770 = vmatpush1.bf16.xpose.msra.mxu0 0
          %2771 = vmatprep.subr.bf16.mxu0 0
          %2772 = vmatpush1.bf16.xpose.msra.mxu0 0
          %2773 = vmatprep.subr.bf16.mxu0 0
          %2774 = vmatpush1.bf16.xpose.msra.mxu0 0
          %2775 = vmatprep.subr.bf16.mxu0 0
          %2776 = vmatpush1.bf16.xpose.msra.mxu0 0
          %2777 = vmatprep.subr.bf16.mxu0 0
          %2778 = vmatpush1.bf16.xpose.msra.mxu0 0
          %2779 = vmatprep.subr.bf16.mxu0 0
          %2780 = vmatpush1.bf16.xpose.msra.mxu0 0
          %2781 = vmatprep.subr.bf16.mxu0 0
          %2782 = vmatpush1.bf16.xpose.msra.mxu0 0
          %2783 = vmatprep.subr.bf16.mxu0 0
          %2784 = vmatpush1.bf16.xpose.msra.mxu0 0
          %2785 = vmatprep.subr.bf16.mxu0 0
          %2786 = vmatpush1.bf16.xpose.msra.mxu0 0
          %2787 = vmatprep.subr.bf16.mxu0 0
          %2788 = vmatpush1.bf16.xpose.msra.mxu0 0
          %2789 = vmatprep.subr.bf16.mxu0 0
          %2790 = vmatpush1.bf16.xpose.msra.mxu0 0
          %2791 = vmatprep.subr.bf16.mxu0 0
          %2792 = vmatpush1.bf16.xpose.msra.mxu0 0
          %2793 = vmatprep.subr.bf16.mxu0 0
          %2794 = vmatpush1.bf16.xpose.msra.mxu0 0
          %2795 = vmatprep.subr.bf16.mxu0 0
          %2796 = vmatpush1.bf16.xpose.msra.mxu0 0
          %2797 = vmatprep.subr.bf16.mxu0 0
          %2798 = vmatpush1.bf16.xpose.msra.mxu0 0
          %2799 = vmatprep.mubr.bf16.mxu0 0
          %2800 = vmatmul.mubr.bf16.gmra.mrb[0].mxu0 %v2762
          %v2801 = vpop.f32.mrb[0].mxu0
          %v2802 = vadd.f32 0.0, %v2801
          %v2803 = vpop.f32.mrb[0].mxu0
          %v2804 = vpop.f32.mrb[0].mxu0
          %v2805 = vpop.f32.mrb[0].mxu0
          %2806 = vdwg.mxu0
          %v2808 = vsel %vm2484, %v2475, 0
          %v2811 = vsel %vm2484, %v2483, 0
          %2813 = vmatprep.subr.bf16.mxu0 0
          %2814 = vmatpush1.bf16.xpose.msra.mxu0 %v2811
          %2815 = vmatprep.subr.bf16.mxu0 0
          %2816 = vmatpush1.bf16.xpose.msra.mxu0 0
          %2817 = vmatprep.subr.bf16.mxu0 0
          %2818 = vmatpush1.bf16.xpose.msra.mxu0 0
          %2819 = vmatprep.subr.bf16.mxu0 0
          %2820 = vmatpush1.bf16.xpose.msra.mxu0 0
          %2821 = vmatprep.subr.bf16.mxu0 0
          %2822 = vmatpush1.bf16.xpose.msra.mxu0 0
          %2823 = vmatprep.subr.bf16.mxu0 0
          %2824 = vmatpush1.bf16.xpose.msra.mxu0 0
          %2825 = vmatprep.subr.bf16.mxu0 0
          %2826 = vmatpush1.bf16.xpose.msra.mxu0 0
          %2827 = vmatprep.subr.bf16.mxu0 0
          %2828 = vmatpush1.bf16.xpose.msra.mxu0 0
          %2829 = vmatprep.subr.bf16.mxu0 0
          %2830 = vmatpush1.bf16.xpose.msra.mxu0 0
          %2831 = vmatprep.subr.bf16.mxu0 0
          %2832 = vmatpush1.bf16.xpose.msra.mxu0 0
          %2833 = vmatprep.subr.bf16.mxu0 0
          %2834 = vmatpush1.bf16.xpose.msra.mxu0 0
          %2835 = vmatprep.subr.bf16.mxu0 0
          %2836 = vmatpush1.bf16.xpose.msra.mxu0 0
          %2837 = vmatprep.subr.bf16.mxu0 0
          %2838 = vmatpush1.bf16.xpose.msra.mxu0 0
          %2839 = vmatprep.subr.bf16.mxu0 0
          %2840 = vmatpush1.bf16.xpose.msra.mxu0 0
          %2841 = vmatprep.subr.bf16.mxu0 0
          %2842 = vmatpush1.bf16.xpose.msra.mxu0 0
          %2843 = vmatprep.subr.bf16.mxu0 0
          %2844 = vmatpush1.bf16.xpose.msra.mxu0 0
          %2845 = vmatprep.mubr.bf16.mxu0 0
          %2846 = vmatmul.mubr.bf16.gmra.mrb[0].mxu0 %v2808
          %v2847 = vpop.f32.mrb[0].mxu0
          %v2848 = vadd.f32 0.0, %v2847
          %v2849 = vpop.f32.mrb[0].mxu0
          %v2850 = vpop.f32.mrb[0].mxu0
          %v2851 = vpop.f32.mrb[0].mxu0
          %2852 = vdwg.mxu0
          %v2853 = vld [vmem:[%s746] sm:$0x1]
          %v2854 = vld [vmem:[%s746 + $0x1] sm:$0x1]
          %vm2855 = vcmp.gt.f32.partialorder %v2853, 0.5
          %vm2856 = vcmp.gt.f32.partialorder %v2854, 0.5
          %v2857 = vsel %vm2855, 1, 0
          %v2858 = vsel %vm2856, 1, 0
          %v2859 = vlaneseq
          %v2860 = vshrl.u32 %v2859, 7
          %v2861 = vsub.s32 0, %v2860
          %v2862 = vrot.slane %v2857, %v2861
          %v2863 = vlaneseq
          %v2864 = vshrl.u32 %v2863, 7
          %v2865 = vsub.s32 0, %v2864
          %v2866 = vrot.slane %v2858, %v2865
          %vm2867 = vcmp.eq.s32.totalorder %v2862, 1
          %vm2868 = vcmp.eq.s32.totalorder %v2866, 1
          %v2869 = vsel %vm2867, %v2526, -1e+30
          %v2870 = vsel %vm2867, %v2572, -1e+30
          %v2871 = vsel %vm2867, %v2618, -1e+30
          %v2872 = vsel %vm2867, %v2664, -1e+30
          %v2873 = vsel %vm2868, %v2710, -1e+30
          %v2874 = vsel %vm2868, %v2756, -1e+30
          %v2875 = vsel %vm2868, %v2802, -1e+30
          %v2876 = vsel %vm2868, %v2848, -1e+30
          %vm2877 = vcmask 130048
          %v2878 = vsel %vm2877, %v2869, -inf
          %2879 = vmax.xlane.f32.xlu0 %v2878
          %v2880 = vpop.xlane.xlu0 %2879
          %v2881 = vsel %vm2877, %v2870, -inf
          %2882 = vmax.xlane.f32.xlu0 %v2881
          %v2883 = vpop.xlane.xlu0 %2882
          %v2884 = vsel %vm2877, %v2871, -inf
          %2885 = vmax.xlane.f32.xlu0 %v2884
          %v2886 = vpop.xlane.xlu0 %2885
          %v2887 = vsel %vm2877, %v2872, -inf
          %2888 = vmax.xlane.f32.xlu0 %v2887
          %v2889 = vpop.xlane.xlu0 %2888
          %v2890 = vsel %vm2877, %v2873, -inf
          %2891 = vmax.xlane.f32.xlu0 %v2890
          %v2892 = vpop.xlane.xlu0 %2891
          %v2893 = vsel %vm2877, %v2874, -inf
          %2894 = vmax.xlane.f32.xlu0 %v2893
          %v2895 = vpop.xlane.xlu0 %2894
          %v2896 = vsel %vm2877, %v2875, -inf
          %2897 = vmax.xlane.f32.xlu0 %v2896
          %v2898 = vpop.xlane.xlu0 %2897
          %v2899 = vsel %vm2877, %v2876, -inf
          %2900 = vmax.xlane.f32.xlu0 %v2899
          %v2901 = vpop.xlane.xlu0 %2900
          %v2902 = vsub.f32 %v2869, %v2880
          %v2903 = vsub.f32 %v2870, %v2883
          %v2904 = vsub.f32 %v2871, %v2886
          %v2905 = vsub.f32 %v2872, %v2889
          %v2906 = vsub.f32 %v2873, %v2892
          %v2907 = vsub.f32 %v2874, %v2895
          %v2908 = vsub.f32 %v2875, %v2898
          %v2909 = vsub.f32 %v2876, %v2901
          %v2910 = vmul.f32 %v2902, 1.442695
          %v2911 = vpow.pop %v2910
          %v2912 = vmul.f32 %v2903, 1.442695
          %v2913 = vpow.pop %v2912
          %v2914 = vmul.f32 %v2904, 1.442695
          %v2915 = vpow.pop %v2914
          %v2916 = vmul.f32 %v2905, 1.442695
          %v2917 = vpow.pop %v2916
          %v2918 = vmul.f32 %v2906, 1.442695
          %v2919 = vpow.pop %v2918
          %v2920 = vmul.f32 %v2907, 1.442695
          %v2921 = vpow.pop %v2920
          %v2922 = vmul.f32 %v2908, 1.442695
          %v2923 = vpow.pop %v2922
          %v2924 = vmul.f32 %v2909, 1.442695
          %v2925 = vpow.pop %v2924
          %v2926 = vsel %vm2877, %v2911, 0.0
          %2927 = vadd.xlane.f32.xlu0 %v2926
          %v2928 = vpop.xlane.xlu0 %2927
          %v2929 = vsel %vm2877, %v2913, 0.0
          %2930 = vadd.xlane.f32.xlu0 %v2929
          %v2931 = vpop.xlane.xlu0 %2930
          %v2932 = vsel %vm2877, %v2915, 0.0
          %2933 = vadd.xlane.f32.xlu0 %v2932
          %v2934 = vpop.xlane.xlu0 %2933
          %v2935 = vsel %vm2877, %v2917, 0.0
          %2936 = vadd.xlane.f32.xlu0 %v2935
          %v2937 = vpop.xlane.xlu0 %2936
          %v2938 = vsel %vm2877, %v2919, 0.0
          %2939 = vadd.xlane.f32.xlu0 %v2938
          %v2940 = vpop.xlane.xlu0 %2939
          %v2941 = vsel %vm2877, %v2921, 0.0
          %2942 = vadd.xlane.f32.xlu0 %v2941
          %v2943 = vpop.xlane.xlu0 %2942
          %v2944 = vsel %vm2877, %v2923, 0.0
          %2945 = vadd.xlane.f32.xlu0 %v2944
          %v2946 = vpop.xlane.xlu0 %2945
          %v2947 = vsel %vm2877, %v2925, 0.0
          %2948 = vadd.xlane.f32.xlu0 %v2947
          %v2949 = vpop.xlane.xlu0 %2948
          %v2950 = vrcp.pop %v2928
          %v2951 = vrcp.pop %v2931
          %v2952 = vrcp.pop %v2934
          %v2953 = vrcp.pop %v2937
          %v2954 = vrcp.pop %v2940
          %v2955 = vrcp.pop %v2943
          %v2956 = vrcp.pop %v2946
          %v2957 = vrcp.pop %v2949
          %v2958 = vmul.f32 %v2911, %v2950
          %v2959 = vmul.f32 %v2913, %v2951
          %v2960 = vmul.f32 %v2915, %v2952
          %v2961 = vmul.f32 %v2917, %v2953
          %v2962 = vmul.f32 %v2919, %v2954
          %v2963 = vmul.f32 %v2921, %v2955
          %v2964 = vmul.f32 %v2923, %v2956
          %v2965 = vmul.f32 %v2925, %v2957
          %v2966 = vpack.c.bf16 %v2958, %v2958
          %v2967 = vpack.c.bf16 %v2959, %v2959
          %v2968 = vpack.c.bf16 %v2960, %v2960
          %v2969 = vpack.c.bf16 %v2961, %v2961
          %v2970 = vpack.c.bf16 %v2962, %v2962
          %v2971 = vpack.c.bf16 %v2963, %v2963
          %v2972 = vpack.c.bf16 %v2964, %v2964
          %v2973 = vpack.c.bf16 %v2965, %v2965
          %v2974 = vpack.c.bf16 %v2328, %v2260
          %v2975 = vpack.c.bf16 %v2329, %v2261
          %v2976 = vpack.c.bf16 %v2330, %v2262
          %v2977 = vpack.c.bf16 %v2331, %v2263
          %v2978 = vpack.c.bf16 %v2464, %v2396
          %v2979 = vpack.c.bf16 %v2465, %v2397
          %v2980 = vpack.c.bf16 %v2466, %v2398
          %v2981 = vpack.c.bf16 %v2467, %v2399
          %v2983 = vsel %vm2877, %v2966, 0
          %2985 = vmatprep.subr.bf16.mxu0 0
          %2986 = vmatpush1.bf16.msra.mxu0 %v2974
          %2987 = vmatprep.subr.bf16.mxu0 0
          %2988 = vmatpush1.bf16.msra.mxu0 0
          %2989 = vmatprep.subr.bf16.mxu0 0
          %2990 = vmatpush1.bf16.msra.mxu0 0
          %2991 = vmatprep.subr.bf16.mxu0 0
          %2992 = vmatpush1.bf16.msra.mxu0 0
          %2993 = vmatprep.subr.bf16.mxu0 0
          %2994 = vmatpush1.bf16.msra.mxu0 0
          %2995 = vmatprep.subr.bf16.mxu0 0
          %2996 = vmatpush1.bf16.msra.mxu0 0
          %2997 = vmatprep.subr.bf16.mxu0 0
          %2998 = vmatpush1.bf16.msra.mxu0 0
          %2999 = vmatprep.subr.bf16.mxu0 0
          %3000 = vmatpush1.bf16.msra.mxu0 0
          %3001 = vmatprep.subr.bf16.mxu0 0
          %3002 = vmatpush1.bf16.msra.mxu0 0
          %3003 = vmatprep.subr.bf16.mxu0 0
          %3004 = vmatpush1.bf16.msra.mxu0 0
          %3005 = vmatprep.subr.bf16.mxu0 0
          %3006 = vmatpush1.bf16.msra.mxu0 0
          %3007 = vmatprep.subr.bf16.mxu0 0
          %3008 = vmatpush1.bf16.msra.mxu0 0
          %3009 = vmatprep.subr.bf16.mxu0 0
          %3010 = vmatpush1.bf16.msra.mxu0 0
          %3011 = vmatprep.subr.bf16.mxu0 0
          %3012 = vmatpush1.bf16.msra.mxu0 0
          %3013 = vmatprep.subr.bf16.mxu0 0
          %3014 = vmatpush1.bf16.msra.mxu0 0
          %3015 = vmatprep.subr.bf16.mxu0 0
          %3016 = vmatpush1.bf16.msra.mxu0 0
          %3017 = vmatprep.mubr.bf16.mxu0 0
          %3018 = vmatmul.mubr.bf16.gmra.mrb[0].mxu0 %v2983
          %v3019 = vpop.f32.mrb[0].mxu0
          %v3020 = vadd.f32 0.0, %v3019
          %v3021 = vpop.f32.mrb[0].mxu0
          %v3022 = vpop.f32.mrb[0].mxu0
          %v3023 = vpop.f32.mrb[0].mxu0
          %3024 = vdwg.mxu0
          %v3026 = vsel %vm2877, %v2967, 0
          %3028 = vmatprep.subr.bf16.mxu0 0
          %3029 = vmatpush1.bf16.msra.mxu0 %v2975
          %3030 = vmatprep.subr.bf16.mxu0 0
          %3031 = vmatpush1.bf16.msra.mxu0 0
          %3032 = vmatprep.subr.bf16.mxu0 0
          %3033 = vmatpush1.bf16.msra.mxu0 0
          %3034 = vmatprep.subr.bf16.mxu0 0
          %3035 = vmatpush1.bf16.msra.mxu0 0
          %3036 = vmatprep.subr.bf16.mxu0 0
          %3037 = vmatpush1.bf16.msra.mxu0 0
          %3038 = vmatprep.subr.bf16.mxu0 0
          %3039 = vmatpush1.bf16.msra.mxu0 0
          %3040 = vmatprep.subr.bf16.mxu0 0
          %3041 = vmatpush1.bf16.msra.mxu0 0
          %3042 = vmatprep.subr.bf16.mxu0 0
          %3043 = vmatpush1.bf16.msra.mxu0 0
          %3044 = vmatprep.subr.bf16.mxu0 0
          %3045 = vmatpush1.bf16.msra.mxu0 0
          %3046 = vmatprep.subr.bf16.mxu0 0
          %3047 = vmatpush1.bf16.msra.mxu0 0
          %3048 = vmatprep.subr.bf16.mxu0 0
          %3049 = vmatpush1.bf16.msra.mxu0 0
          %3050 = vmatprep.subr.bf16.mxu0 0
          %3051 = vmatpush1.bf16.msra.mxu0 0
          %3052 = vmatprep.subr.bf16.mxu0 0
          %3053 = vmatpush1.bf16.msra.mxu0 0
          %3054 = vmatprep.subr.bf16.mxu0 0
          %3055 = vmatpush1.bf16.msra.mxu0 0
          %3056 = vmatprep.subr.bf16.mxu0 0
          %3057 = vmatpush1.bf16.msra.mxu0 0
          %3058 = vmatprep.subr.bf16.mxu0 0
          %3059 = vmatpush1.bf16.msra.mxu0 0
          %3060 = vmatprep.mubr.bf16.mxu0 0
          %3061 = vmatmul.mubr.bf16.gmra.mrb[0].mxu0 %v3026
          %v3062 = vpop.f32.mrb[0].mxu0
          %v3063 = vadd.f32 0.0, %v3062
          %v3064 = vpop.f32.mrb[0].mxu0
          %v3065 = vpop.f32.mrb[0].mxu0
          %v3066 = vpop.f32.mrb[0].mxu0
          %3067 = vdwg.mxu0
          %v3069 = vsel %vm2877, %v2968, 0
          %3071 = vmatprep.subr.bf16.mxu0 0
          %3072 = vmatpush1.bf16.msra.mxu0 %v2976
          %3073 = vmatprep.subr.bf16.mxu0 0
          %3074 = vmatpush1.bf16.msra.mxu0 0
          %3075 = vmatprep.subr.bf16.mxu0 0
          %3076 = vmatpush1.bf16.msra.mxu0 0
          %3077 = vmatprep.subr.bf16.mxu0 0
          %3078 = vmatpush1.bf16.msra.mxu0 0
          %3079 = vmatprep.subr.bf16.mxu0 0
          %3080 = vmatpush1.bf16.msra.mxu0 0
          %3081 = vmatprep.subr.bf16.mxu0 0
          %3082 = vmatpush1.bf16.msra.mxu0 0
          %3083 = vmatprep.subr.bf16.mxu0 0
          %3084 = vmatpush1.bf16.msra.mxu0 0
          %3085 = vmatprep.subr.bf16.mxu0 0
          %3086 = vmatpush1.bf16.msra.mxu0 0
          %3087 = vmatprep.subr.bf16.mxu0 0
          %3088 = vmatpush1.bf16.msra.mxu0 0
          %3089 = vmatprep.subr.bf16.mxu0 0
          %3090 = vmatpush1.bf16.msra.mxu0 0
          %3091 = vmatprep.subr.bf16.mxu0 0
          %3092 = vmatpush1.bf16.msra.mxu0 0
          %3093 = vmatprep.subr.bf16.mxu0 0
          %3094 = vmatpush1.bf16.msra.mxu0 0
          %3095 = vmatprep.subr.bf16.mxu0 0
          %3096 = vmatpush1.bf16.msra.mxu0 0
          %3097 = vmatprep.subr.bf16.mxu0 0
          %3098 = vmatpush1.bf16.msra.mxu0 0
          %3099 = vmatprep.subr.bf16.mxu0 0
          %3100 = vmatpush1.bf16.msra.mxu0 0
          %3101 = vmatprep.subr.bf16.mxu0 0
          %3102 = vmatpush1.bf16.msra.mxu0 0
          %3103 = vmatprep.mubr.bf16.mxu0 0
          %3104 = vmatmul.mubr.bf16.gmra.mrb[0].mxu0 %v3069
          %v3105 = vpop.f32.mrb[0].mxu0
          %v3106 = vadd.f32 0.0, %v3105
          %v3107 = vpop.f32.mrb[0].mxu0
          %v3108 = vpop.f32.mrb[0].mxu0
          %v3109 = vpop.f32.mrb[0].mxu0
          %3110 = vdwg.mxu0
          %v3112 = vsel %vm2877, %v2969, 0
          %3114 = vmatprep.subr.bf16.mxu0 0
          %3115 = vmatpush1.bf16.msra.mxu0 %v2977
          %3116 = vmatprep.subr.bf16.mxu0 0
          %3117 = vmatpush1.bf16.msra.mxu0 0
          %3118 = vmatprep.subr.bf16.mxu0 0
          %3119 = vmatpush1.bf16.msra.mxu0 0
          %3120 = vmatprep.subr.bf16.mxu0 0
          %3121 = vmatpush1.bf16.msra.mxu0 0
          %3122 = vmatprep.subr.bf16.mxu0 0
          %3123 = vmatpush1.bf16.msra.mxu0 0
          %3124 = vmatprep.subr.bf16.mxu0 0
          %3125 = vmatpush1.bf16.msra.mxu0 0
          %3126 = vmatprep.subr.bf16.mxu0 0
          %3127 = vmatpush1.bf16.msra.mxu0 0
          %3128 = vmatprep.subr.bf16.mxu0 0
          %3129 = vmatpush1.bf16.msra.mxu0 0
          %3130 = vmatprep.subr.bf16.mxu0 0
          %3131 = vmatpush1.bf16.msra.mxu0 0
          %3132 = vmatprep.subr.bf16.mxu0 0
          %3133 = vmatpush1.bf16.msra.mxu0 0
          %3134 = vmatprep.subr.bf16.mxu0 0
          %3135 = vmatpush1.bf16.msra.mxu0 0
          %3136 = vmatprep.subr.bf16.mxu0 0
          %3137 = vmatpush1.bf16.msra.mxu0 0
          %3138 = vmatprep.subr.bf16.mxu0 0
          %3139 = vmatpush1.bf16.msra.mxu0 0
          %3140 = vmatprep.subr.bf16.mxu0 0
          %3141 = vmatpush1.bf16.msra.mxu0 0
          %3142 = vmatprep.subr.bf16.mxu0 0
          %3143 = vmatpush1.bf16.msra.mxu0 0
          %3144 = vmatprep.subr.bf16.mxu0 0
          %3145 = vmatpush1.bf16.msra.mxu0 0
          %3146 = vmatprep.mubr.bf16.mxu0 0
          %3147 = vmatmul.mubr.bf16.gmra.mrb[0].mxu0 %v3112
          %v3148 = vpop.f32.mrb[0].mxu0
          %v3149 = vadd.f32 0.0, %v3148
          %v3150 = vpop.f32.mrb[0].mxu0
          %v3151 = vpop.f32.mrb[0].mxu0
          %v3152 = vpop.f32.mrb[0].mxu0
          %3153 = vdwg.mxu0
          %v3155 = vsel %vm2877, %v2970, 0
          %3157 = vmatprep.subr.bf16.mxu0 0
          %3158 = vmatpush1.bf16.msra.mxu0 %v2978
          %3159 = vmatprep.subr.bf16.mxu0 0
          %3160 = vmatpush1.bf16.msra.mxu0 0
          %3161 = vmatprep.subr.bf16.mxu0 0
          %3162 = vmatpush1.bf16.msra.mxu0 0
          %3163 = vmatprep.subr.bf16.mxu0 0
          %3164 = vmatpush1.bf16.msra.mxu0 0
          %3165 = vmatprep.subr.bf16.mxu0 0
          %3166 = vmatpush1.bf16.msra.mxu0 0
          %3167 = vmatprep.subr.bf16.mxu0 0
          %3168 = vmatpush1.bf16.msra.mxu0 0
          %3169 = vmatprep.subr.bf16.mxu0 0
          %3170 = vmatpush1.bf16.msra.mxu0 0
          %3171 = vmatprep.subr.bf16.mxu0 0
          %3172 = vmatpush1.bf16.msra.mxu0 0
          %3173 = vmatprep.subr.bf16.mxu0 0
          %3174 = vmatpush1.bf16.msra.mxu0 0
          %3175 = vmatprep.subr.bf16.mxu0 0
          %3176 = vmatpush1.bf16.msra.mxu0 0
          %3177 = vmatprep.subr.bf16.mxu0 0
          %3178 = vmatpush1.bf16.msra.mxu0 0
          %3179 = vmatprep.subr.bf16.mxu0 0
          %3180 = vmatpush1.bf16.msra.mxu0 0
          %3181 = vmatprep.subr.bf16.mxu0 0
          %3182 = vmatpush1.bf16.msra.mxu0 0
          %3183 = vmatprep.subr.bf16.mxu0 0
          %3184 = vmatpush1.bf16.msra.mxu0 0
          %3185 = vmatprep.subr.bf16.mxu0 0
          %3186 = vmatpush1.bf16.msra.mxu0 0
          %3187 = vmatprep.subr.bf16.mxu0 0
          %3188 = vmatpush1.bf16.msra.mxu0 0
          %3189 = vmatprep.mubr.bf16.mxu0 0
          %3190 = vmatmul.mubr.bf16.gmra.mrb[0].mxu0 %v3155
          %v3191 = vpop.f32.mrb[0].mxu0
          %v3192 = vadd.f32 0.0, %v3191
          %v3193 = vpop.f32.mrb[0].mxu0
          %v3194 = vpop.f32.mrb[0].mxu0
          %v3195 = vpop.f32.mrb[0].mxu0
          %3196 = vdwg.mxu0
          %v3198 = vsel %vm2877, %v2971, 0
          %3200 = vmatprep.subr.bf16.mxu0 0
          %3201 = vmatpush1.bf16.msra.mxu0 %v2979
          %3202 = vmatprep.subr.bf16.mxu0 0
          %3203 = vmatpush1.bf16.msra.mxu0 0
          %3204 = vmatprep.subr.bf16.mxu0 0
          %3205 = vmatpush1.bf16.msra.mxu0 0
          %3206 = vmatprep.subr.bf16.mxu0 0
          %3207 = vmatpush1.bf16.msra.mxu0 0
          %3208 = vmatprep.subr.bf16.mxu0 0
          %3209 = vmatpush1.bf16.msra.mxu0 0
          %3210 = vmatprep.subr.bf16.mxu0 0
          %3211 = vmatpush1.bf16.msra.mxu0 0
          %3212 = vmatprep.subr.bf16.mxu0 0
          %3213 = vmatpush1.bf16.msra.mxu0 0
          %3214 = vmatprep.subr.bf16.mxu0 0
          %3215 = vmatpush1.bf16.msra.mxu0 0
          %3216 = vmatprep.subr.bf16.mxu0 0
          %3217 = vmatpush1.bf16.msra.mxu0 0
          %3218 = vmatprep.subr.bf16.mxu0 0
          %3219 = vmatpush1.bf16.msra.mxu0 0
          %3220 = vmatprep.subr.bf16.mxu0 0
          %3221 = vmatpush1.bf16.msra.mxu0 0
          %3222 = vmatprep.subr.bf16.mxu0 0
          %3223 = vmatpush1.bf16.msra.mxu0 0
          %3224 = vmatprep.subr.bf16.mxu0 0
          %3225 = vmatpush1.bf16.msra.mxu0 0
          %3226 = vmatprep.subr.bf16.mxu0 0
          %3227 = vmatpush1.bf16.msra.mxu0 0
          %3228 = vmatprep.subr.bf16.mxu0 0
          %3229 = vmatpush1.bf16.msra.mxu0 0
          %3230 = vmatprep.subr.bf16.mxu0 0
          %3231 = vmatpush1.bf16.msra.mxu0 0
          %3232 = vmatprep.mubr.bf16.mxu0 0
          %3233 = vmatmul.mubr.bf16.gmra.mrb[0].mxu0 %v3198
          %v3234 = vpop.f32.mrb[0].mxu0
          %v3235 = vadd.f32 0.0, %v3234
          %v3236 = vpop.f32.mrb[0].mxu0
          %v3237 = vpop.f32.mrb[0].mxu0
          %v3238 = vpop.f32.mrb[0].mxu0
          %3239 = vdwg.mxu0
          %v3241 = vsel %vm2877, %v2972, 0
          %3243 = vmatprep.subr.bf16.mxu0 0
          %3244 = vmatpush1.bf16.msra.mxu0 %v2980
          %3245 = vmatprep.subr.bf16.mxu0 0
          %3246 = vmatpush1.bf16.msra.mxu0 0
          %3247 = vmatprep.subr.bf16.mxu0 0
          %3248 = vmatpush1.bf16.msra.mxu0 0
          %3249 = vmatprep.subr.bf16.mxu0 0
          %3250 = vmatpush1.bf16.msra.mxu0 0
          %3251 = vmatprep.subr.bf16.mxu0 0
          %3252 = vmatpush1.bf16.msra.mxu0 0
          %3253 = vmatprep.subr.bf16.mxu0 0
          %3254 = vmatpush1.bf16.msra.mxu0 0
          %3255 = vmatprep.subr.bf16.mxu0 0
          %3256 = vmatpush1.bf16.msra.mxu0 0
          %3257 = vmatprep.subr.bf16.mxu0 0
          %3258 = vmatpush1.bf16.msra.mxu0 0
          %3259 = vmatprep.subr.bf16.mxu0 0
          %3260 = vmatpush1.bf16.msra.mxu0 0
          %3261 = vmatprep.subr.bf16.mxu0 0
          %3262 = vmatpush1.bf16.msra.mxu0 0
          %3263 = vmatprep.subr.bf16.mxu0 0
          %3264 = vmatpush1.bf16.msra.mxu0 0
          %3265 = vmatprep.subr.bf16.mxu0 0
          %3266 = vmatpush1.bf16.msra.mxu0 0
          %3267 = vmatprep.subr.bf16.mxu0 0
          %3268 = vmatpush1.bf16.msra.mxu0 0
          %3269 = vmatprep.subr.bf16.mxu0 0
          %3270 = vmatpush1.bf16.msra.mxu0 0
          %3271 = vmatprep.subr.bf16.mxu0 0
          %3272 = vmatpush1.bf16.msra.mxu0 0
          %3273 = vmatprep.subr.bf16.mxu0 0
          %3274 = vmatpush1.bf16.msra.mxu0 0
          %3275 = vmatprep.mubr.bf16.mxu0 0
          %3276 = vmatmul.mubr.bf16.gmra.mrb[0].mxu0 %v3241
          %v3277 = vpop.f32.mrb[0].mxu0
          %v3278 = vadd.f32 0.0, %v3277
          %v3279 = vpop.f32.mrb[0].mxu0
          %v3280 = vpop.f32.mrb[0].mxu0
          %v3281 = vpop.f32.mrb[0].mxu0
          %3282 = vdwg.mxu0
          %v3284 = vsel %vm2877, %v2973, 0
          %3286 = vmatprep.subr.bf16.mxu0 0
          %3287 = vmatpush1.bf16.msra.mxu0 %v2981
          %3288 = vmatprep.subr.bf16.mxu0 0
          %3289 = vmatpush1.bf16.msra.mxu0 0
          %3290 = vmatprep.subr.bf16.mxu0 0
          %3291 = vmatpush1.bf16.msra.mxu0 0
          %3292 = vmatprep.subr.bf16.mxu0 0
          %3293 = vmatpush1.bf16.msra.mxu0 0
          %3294 = vmatprep.subr.bf16.mxu0 0
          %3295 = vmatpush1.bf16.msra.mxu0 0
          %3296 = vmatprep.subr.bf16.mxu0 0
          %3297 = vmatpush1.bf16.msra.mxu0 0
          %3298 = vmatprep.subr.bf16.mxu0 0
          %3299 = vmatpush1.bf16.msra.mxu0 0
          %3300 = vmatprep.subr.bf16.mxu0 0
          %3301 = vmatpush1.bf16.msra.mxu0 0
          %3302 = vmatprep.subr.bf16.mxu0 0
          %3303 = vmatpush1.bf16.msra.mxu0 0
          %3304 = vmatprep.subr.bf16.mxu0 0
          %3305 = vmatpush1.bf16.msra.mxu0 0
          %3306 = vmatprep.subr.bf16.mxu0 0
          %3307 = vmatpush1.bf16.msra.mxu0 0
          %3308 = vmatprep.subr.bf16.mxu0 0
          %3309 = vmatpush1.bf16.msra.mxu0 0
          %3310 = vmatprep.subr.bf16.mxu0 0
          %3311 = vmatpush1.bf16.msra.mxu0 0
          %3312 = vmatprep.subr.bf16.mxu0 0
          %3313 = vmatpush1.bf16.msra.mxu0 0
          %3314 = vmatprep.subr.bf16.mxu0 0
          %3315 = vmatpush1.bf16.msra.mxu0 0
          %3316 = vmatprep.subr.bf16.mxu0 0
          %3317 = vmatpush1.bf16.msra.mxu0 0
          %3318 = vmatprep.mubr.bf16.mxu0 0
          %3319 = vmatmul.mubr.bf16.gmra.mrb[0].mxu0 %v3284
          %v3320 = vpop.f32.mrb[0].mxu0
          %v3321 = vadd.f32 0.0, %v3320
          %v3322 = vpop.f32.mrb[0].mxu0
          %v3323 = vpop.f32.mrb[0].mxu0
          %v3324 = vpop.f32.mrb[0].mxu0
          %3325 = vdwg.mxu0
          %v3326 = vcombine.low %v3020, %v3106
          %v3327 = vcombine.high %v3020, %v3106
          %v3329 = vunpack.c.l.s4 1983009808
          %v3330 = vunpack.c.0.s8 %v3329
          %v3331 = vlaneseq
          %v3332 = vshrl.u32 %v3331, 7
          %v3333 = vsub.s32 %v3330, %v3332
          %v3334 = vrot.slane %v3326, %v3333
          %v3336 = vunpack.c.l.s4 1983009808
          %v3337 = vunpack.c.0.s8 %v3336
          %v3338 = vlaneseq
          %v3339 = vshrl.u32 %v3338, 7
          %v3340 = vsub.s32 %v3337, %v3339
          %v3341 = vrot.slane %v3327, %v3340
          %v3342 = vcombine.low %v3063, %v3149
          %v3343 = vcombine.high %v3063, %v3149
          %v3345 = vunpack.c.l.s4 1983009808
          %v3346 = vunpack.c.0.s8 %v3345
          %v3347 = vlaneseq
          %v3348 = vshrl.u32 %v3347, 7
          %v3349 = vsub.s32 %v3346, %v3348
          %v3350 = vrot.slane %v3342, %v3349
          %v3352 = vunpack.c.l.s4 1983009808
          %v3353 = vunpack.c.0.s8 %v3352
          %v3354 = vlaneseq
          %v3355 = vshrl.u32 %v3354, 7
          %v3356 = vsub.s32 %v3353, %v3355
          %v3357 = vrot.slane %v3343, %v3356
          %v3358 = vcombine.low %v3334, %v3350
          %v3359 = vcombine.high %v3334, %v3350
          %v3361 = vunpack.c.l.s4 1934713408
          %v3362 = vunpack.c.0.s8 %v3361
          %v3363 = vlaneseq
          %v3364 = vshrl.u32 %v3363, 7
          %v3365 = vsub.s32 %v3362, %v3364
          %v3366 = vrot.slane %v3358, %v3365
          %v3368 = vunpack.c.l.s4 1934713408
          %v3369 = vunpack.c.0.s8 %v3368
          %v3370 = vlaneseq
          %v3371 = vshrl.u32 %v3370, 7
          %v3372 = vsub.s32 %v3369, %v3371
          %v3373 = vrot.slane %v3359, %v3372
          %v3374 = vcombine.low %v3341, %v3357
          %v3375 = vcombine.high %v3341, %v3357
          %v3377 = vunpack.c.l.s4 1934713408
          %v3378 = vunpack.c.0.s8 %v3377
          %v3379 = vlaneseq
          %v3380 = vshrl.u32 %v3379, 7
          %v3381 = vsub.s32 %v3378, %v3380
          %v3382 = vrot.slane %v3374, %v3381
          %v3384 = vunpack.c.l.s4 1934713408
          %v3385 = vunpack.c.0.s8 %v3384
          %v3386 = vlaneseq
          %v3387 = vshrl.u32 %v3386, 7
          %v3388 = vsub.s32 %v3385, %v3387
          %v3389 = vrot.slane %v3375, %v3388
          %v3390 = vcombine.high %v3366, 0.0
          %v3391 = vcombine.high %v3373, 0.0
          %v3392 = vcombine.high %v3382, 0.0
          %v3393 = vcombine.high %v3389, 0.0
          %v3394 = vcombine.low %v3192, %v3278
          %v3395 = vcombine.high %v3192, %v3278
          %v3397 = vunpack.c.l.s4 1983009808
          %v3398 = vunpack.c.0.s8 %v3397
          %v3399 = vlaneseq
          %v3400 = vshrl.u32 %v3399, 7
          %v3401 = vsub.s32 %v3398, %v3400
          %v3402 = vrot.slane %v3394, %v3401
          %v3404 = vunpack.c.l.s4 1983009808
          %v3405 = vunpack.c.0.s8 %v3404
          %v3406 = vlaneseq
          %v3407 = vshrl.u32 %v3406, 7
          %v3408 = vsub.s32 %v3405, %v3407
          %v3409 = vrot.slane %v3395, %v3408
          %v3410 = vcombine.low %v3235, %v3321
          %v3411 = vcombine.high %v3235, %v3321
          %v3413 = vunpack.c.l.s4 1983009808
          %v3414 = vunpack.c.0.s8 %v3413
          %v3415 = vlaneseq
          %v3416 = vshrl.u32 %v3415, 7
          %v3417 = vsub.s32 %v3414, %v3416
          %v3418 = vrot.slane %v3410, %v3417
          %v3420 = vunpack.c.l.s4 1983009808
          %v3421 = vunpack.c.0.s8 %v3420
          %v3422 = vlaneseq
          %v3423 = vshrl.u32 %v3422, 7
          %v3424 = vsub.s32 %v3421, %v3423
          %v3425 = vrot.slane %v3411, %v3424
          %v3426 = vcombine.low %v3402, %v3418
          %v3427 = vcombine.high %v3402, %v3418
          %v3429 = vunpack.c.l.s4 1934713408
          %v3430 = vunpack.c.0.s8 %v3429
          %v3431 = vlaneseq
          %v3432 = vshrl.u32 %v3431, 7
          %v3433 = vsub.s32 %v3430, %v3432
          %v3434 = vrot.slane %v3426, %v3433
          %v3436 = vunpack.c.l.s4 1934713408
          %v3437 = vunpack.c.0.s8 %v3436
          %v3438 = vlaneseq
          %v3439 = vshrl.u32 %v3438, 7
          %v3440 = vsub.s32 %v3437, %v3439
          %v3441 = vrot.slane %v3427, %v3440
          %v3442 = vcombine.low %v3409, %v3425
          %v3443 = vcombine.high %v3409, %v3425
          %v3445 = vunpack.c.l.s4 1934713408
          %v3446 = vunpack.c.0.s8 %v3445
          %v3447 = vlaneseq
          %v3448 = vshrl.u32 %v3447, 7
          %v3449 = vsub.s32 %v3446, %v3448
          %v3450 = vrot.slane %v3442, %v3449
          %v3452 = vunpack.c.l.s4 1934713408
          %v3453 = vunpack.c.0.s8 %v3452
          %v3454 = vlaneseq
          %v3455 = vshrl.u32 %v3454, 7
          %v3456 = vsub.s32 %v3453, %v3455
          %v3457 = vrot.slane %v3443, %v3456
          %v3458 = vcombine.high %v3434, 0.0
          %v3459 = vcombine.high %v3441, 0.0
          %v3460 = vcombine.high %v3450, 0.0
          %v3461 = vcombine.high %v3457, 0.0
          %v3462 = vcombine.low %v3366, %v3373
          %v3464 = vunpack.c.l.s4 1983009808
          %v3465 = vunpack.c.0.s8 %v3464
          %v3466 = vlaneseq
          %v3467 = vshrl.u32 %v3466, 7
          %v3468 = vsub.s32 %v3465, %v3467
          %v3469 = vrot.slane %v3462, %v3468
          %v3470 = vcombine.low %v3390, %v3391
          %v3472 = vunpack.c.l.s4 1983009808
          %v3473 = vunpack.c.0.s8 %v3472
          %v3474 = vlaneseq
          %v3475 = vshrl.u32 %v3474, 7
          %v3476 = vsub.s32 %v3473, %v3475
          %v3477 = vrot.slane %v3470, %v3476
          %v3478 = vcombine.low %v3382, %v3389
          %v3480 = vunpack.c.l.s4 1983009808
          %v3481 = vunpack.c.0.s8 %v3480
          %v3482 = vlaneseq
          %v3483 = vshrl.u32 %v3482, 7
          %v3484 = vsub.s32 %v3481, %v3483
          %v3485 = vrot.slane %v3478, %v3484
          %v3486 = vcombine.low %v3392, %v3393
          %v3488 = vunpack.c.l.s4 1983009808
          %v3489 = vunpack.c.0.s8 %v3488
          %v3490 = vlaneseq
          %v3491 = vshrl.u32 %v3490, 7
          %v3492 = vsub.s32 %v3489, %v3491
          %v3493 = vrot.slane %v3486, %v3492
          %v3494 = vcombine.low %v3469, %v3477
          %v3495 = vcombine.high %v3469, %v3477
          %v3497 = vunpack.c.l.s4 1934713408
          %v3498 = vunpack.c.0.s8 %v3497
          %v3499 = vlaneseq
          %v3500 = vshrl.u32 %v3499, 7
          %v3501 = vsub.s32 %v3498, %v3500
          %v3502 = vrot.slane %v3494, %v3501
          %v3504 = vunpack.c.l.s4 1934713408
          %v3505 = vunpack.c.0.s8 %v3504
          %v3506 = vlaneseq
          %v3507 = vshrl.u32 %v3506, 7
          %v3508 = vsub.s32 %v3505, %v3507
          %v3509 = vrot.slane %v3495, %v3508
          %v3510 = vcombine.low %v3485, %v3493
          %v3511 = vcombine.high %v3485, %v3493
          %v3513 = vunpack.c.l.s4 1934713408
          %v3514 = vunpack.c.0.s8 %v3513
          %v3515 = vlaneseq
          %v3516 = vshrl.u32 %v3515, 7
          %v3517 = vsub.s32 %v3514, %v3516
          %v3518 = vrot.slane %v3510, %v3517
          %v3520 = vunpack.c.l.s4 1934713408
          %v3521 = vunpack.c.0.s8 %v3520
          %v3522 = vlaneseq
          %v3523 = vshrl.u32 %v3522, 7
          %v3524 = vsub.s32 %v3521, %v3523
          %v3525 = vrot.slane %v3511, %v3524
          %v3526 = vcombine.low %v3502, %v3518
          %v3527 = vcombine.high %v3502, %v3518
          %v3528 = vcombine.low %v3509, %v3525
          %v3529 = vcombine.high %v3509, %v3525
          %v3530 = vcombine.low %v3434, %v3441
          %v3532 = vunpack.c.l.s4 1983009808
          %v3533 = vunpack.c.0.s8 %v3532
          %v3534 = vlaneseq
          %v3535 = vshrl.u32 %v3534, 7
          %v3536 = vsub.s32 %v3533, %v3535
          %v3537 = vrot.slane %v3530, %v3536
          %v3538 = vcombine.low %v3458, %v3459
          %v3540 = vunpack.c.l.s4 1983009808
          %v3541 = vunpack.c.0.s8 %v3540
          %v3542 = vlaneseq
          %v3543 = vshrl.u32 %v3542, 7
          %v3544 = vsub.s32 %v3541, %v3543
          %v3545 = vrot.slane %v3538, %v3544
          %v3546 = vcombine.low %v3450, %v3457
          %v3548 = vunpack.c.l.s4 1983009808
          %v3549 = vunpack.c.0.s8 %v3548
          %v3550 = vlaneseq
          %v3551 = vshrl.u32 %v3550, 7
          %v3552 = vsub.s32 %v3549, %v3551
          %v3553 = vrot.slane %v3546, %v3552
          %v3554 = vcombine.low %v3460, %v3461
          %v3556 = vunpack.c.l.s4 1983009808
          %v3557 = vunpack.c.0.s8 %v3556
          %v3558 = vlaneseq
          %v3559 = vshrl.u32 %v3558, 7
          %v3560 = vsub.s32 %v3557, %v3559
          %v3561 = vrot.slane %v3554, %v3560
          %v3562 = vcombine.low %v3537, %v3545
          %v3563 = vcombine.high %v3537, %v3545
          %v3565 = vunpack.c.l.s4 1934713408
          %v3566 = vunpack.c.0.s8 %v3565
          %v3567 = vlaneseq
          %v3568 = vshrl.u32 %v3567, 7
          %v3569 = vsub.s32 %v3566, %v3568
          %v3570 = vrot.slane %v3562, %v3569
          %v3572 = vunpack.c.l.s4 1934713408
          %v3573 = vunpack.c.0.s8 %v3572
          %v3574 = vlaneseq
          %v3575 = vshrl.u32 %v3574, 7
          %v3576 = vsub.s32 %v3573, %v3575
          %v3577 = vrot.slane %v3563, %v3576
          %v3578 = vcombine.low %v3553, %v3561
          %v3579 = vcombine.high %v3553, %v3561
          %v3581 = vunpack.c.l.s4 1934713408
          %v3582 = vunpack.c.0.s8 %v3581
          %v3583 = vlaneseq
          %v3584 = vshrl.u32 %v3583, 7
          %v3585 = vsub.s32 %v3582, %v3584
          %v3586 = vrot.slane %v3578, %v3585
          %v3588 = vunpack.c.l.s4 1934713408
          %v3589 = vunpack.c.0.s8 %v3588
          %v3590 = vlaneseq
          %v3591 = vshrl.u32 %v3590, 7
          %v3592 = vsub.s32 %v3589, %v3591
          %v3593 = vrot.slane %v3579, %v3592
          %v3594 = vcombine.low %v3570, %v3586
          %v3595 = vcombine.high %v3570, %v3586
          %v3596 = vcombine.low %v3577, %v3593
          %v3597 = vcombine.high %v3577, %v3593
          %3600 = vrot.lane.b32.xlu0 %v3527, 8
          %v3601 = vpop.permute.xlu0 %3600
          %3602 = vrot.lane.b32.xlu0 %v3595, 8
          %v3603 = vpop.permute.xlu0 %3602
          %3608 = vrot.lane.b32.xlu0 %v3528, 16
          %v3609 = vpop.permute.xlu0 %3608
          %3610 = vrot.lane.b32.xlu0 %v3596, 16
          %v3611 = vpop.permute.xlu0 %3610
          %3616 = vrot.lane.b32.xlu0 %v3529, 24
          %v3617 = vpop.permute.xlu0 %3616
          %3618 = vrot.lane.b32.xlu0 %v3597, 24
          %v3619 = vpop.permute.xlu0 %3618
          %v3622 = vsel %vm2484, %v3526, %v3601
          %v3623 = vsel %vm2484, %v3594, %v3603
          %v3624 = vsel %vm2877, %v3622, %v3609
          %v3625 = vsel %vm2877, %v3623, %v3611
          %vm3626 = vcmask 195584
          %v3627 = vsel %vm3626, %v3624, %v3617
          %v3628 = vsel %vm3626, %v3625, %v3619
          %v3629 = vpack.c.bf16 %v3628, %v3627
          %v3630 = vld [vmem:[#allocation12] sm:$0xf]
          %v3631 = vld [vmem:[#allocation12 + $0x4] sm:$0xf]
          %v3632 = vld [vmem:[#allocation12 + $0x8] sm:$0xf]
          %v3633 = vld [vmem:[#allocation12 + $0xc] sm:$0xf]
          %v3634 = vld [vmem:[%s10] sm:$0x1]
          %v3636 = vlaneseq
          %v3637 = vshrl.u32 %v3636, 7
          %v3638 = vsub.s32 0, %v3637
          %v3639 = vrot.slane %v3634, %v3638
          %v3645 = vunpack.c.l.b16 %v3630
          %v3646 = vunpack.c.l.b16 %v3631
          %v3647 = vunpack.c.l.b16 %v3632
          %v3648 = vunpack.c.l.b16 %v3633
          %v3649 = vpack.c.b16 %v3646, %v3645
          %v3650 = vpack.c.b16 %v3648, %v3647
          %v3654 = vsel %vm803, %v3629, 0
          %3656 = vmatprep.subr.bf16.mxu0 0
          %3657 = vmatpush1.bf16.msra.mxu0 %v3649
          %3658 = vmatprep.subr.bf16.mxu0 0
          %3659 = vmatpush1.bf16.msra.mxu0 %v3650
          %3660 = vmatprep.subr.bf16.mxu0 0
          %3661 = vmatpush1.bf16.msra.mxu0 0
          %3662 = vmatprep.subr.bf16.mxu0 0
          %3663 = vmatpush1.bf16.msra.mxu0 0
          %3664 = vmatprep.subr.bf16.mxu0 0
          %3665 = vmatpush1.bf16.msra.mxu0 0
          %3666 = vmatprep.subr.bf16.mxu0 0
          %3667 = vmatpush1.bf16.msra.mxu0 0
          %3668 = vmatprep.subr.bf16.mxu0 0
          %3669 = vmatpush1.bf16.msra.mxu0 0
          %3670 = vmatprep.subr.bf16.mxu0 0
          %3671 = vmatpush1.bf16.msra.mxu0 0
          %3672 = vmatprep.subr.bf16.mxu0 0
          %3673 = vmatpush1.bf16.msra.mxu0 0
          %3674 = vmatprep.subr.bf16.mxu0 0
          %3675 = vmatpush1.bf16.msra.mxu0 0
          %3676 = vmatprep.subr.bf16.mxu0 0
          %3677 = vmatpush1.bf16.msra.mxu0 0
          %3678 = vmatprep.subr.bf16.mxu0 0
          %3679 = vmatpush1.bf16.msra.mxu0 0
          %3680 = vmatprep.subr.bf16.mxu0 0
          %3681 = vmatpush1.bf16.msra.mxu0 0
          %3682 = vmatprep.subr.bf16.mxu0 0
          %3683 = vmatpush1.bf16.msra.mxu0 0
          %3684 = vmatprep.subr.bf16.mxu0 0
          %3685 = vmatpush1.bf16.msra.mxu0 0
          %3686 = vmatprep.subr.bf16.mxu0 0
          %3687 = vmatpush1.bf16.msra.mxu0 0
          %3688 = vmatprep.mubr.bf16.mxu0 0
          %3689 = vmatmul.mubr.bf16.gmra.mrb[0].mxu0 %v3654
          %v3690 = vpop.f32.mrb[0].mxu0
          %v3691 = vadd.f32 %v3639, %v3690
          %v3692 = vpop.f32.mrb[0].mxu0
          %v3693 = vpop.f32.mrb[0].mxu0
          %v3694 = vadd.f32 %v3639, %v3693
          %v3695 = vpop.f32.mrb[0].mxu0
          %3696 = vdwg.mxu0
          %v3697 = vadd.f32 %v773, %v3691
          %v3698 = vadd.f32 %v774, %v3694
          %3699 = vst.msk [vmem:[%s726] sm:$0xff] %vm803, %v3697
          %3700 = vst.msk [vmem:[%s726 + $0x8] sm:$0xff] %vm803, %v3698
          %v3701 = vpack.c.bf16 %v3698, %v3697
          %3702 = vst.msk [vmem:[#allocation2] sm:$0xff] %vm803, %v3701
          %v3703 = vld [vmem:[%s13] sm:$0xf]
          %v3704 = vld [vmem:[%s13 + $0x4] sm:$0xf]
          %v3705 = vld [vmem:[%s13 + $0x8] sm:$0xf]
          %v3706 = vld [vmem:[%s13 + $0xc] sm:$0xf]
          %v3711 = vunpack.c.l.b16 %v3703
          %v3712 = vunpack.c.l.b16 %v3704
          %v3713 = vunpack.c.l.b16 %v3705
          %v3714 = vunpack.c.l.b16 %v3706
          %v3715 = vpack.c.b16 %v3712, %v3711
          %v3716 = vpack.c.b16 %v3714, %v3713
          %v3720 = vsel %vm803, %v3701, 0
          %3722 = vmatprep.subr.bf16.mxu0 0
          %3723 = vmatpush1.bf16.msra.mxu0 %v3715
          %3724 = vmatprep.subr.bf16.mxu0 0
          %3725 = vmatpush1.bf16.msra.mxu0 %v3716
          %3726 = vmatprep.subr.bf16.mxu0 0
          %3727 = vmatpush1.bf16.msra.mxu0 0
          %3728 = vmatprep.subr.bf16.mxu0 0
          %3729 = vmatpush1.bf16.msra.mxu0 0
          %3730 = vmatprep.subr.bf16.mxu0 0
          %3731 = vmatpush1.bf16.msra.mxu0 0
          %3732 = vmatprep.subr.bf16.mxu0 0
          %3733 = vmatpush1.bf16.msra.mxu0 0
          %3734 = vmatprep.subr.bf16.mxu0 0
          %3735 = vmatpush1.bf16.msra.mxu0 0
          %3736 = vmatprep.subr.bf16.mxu0 0
          %3737 = vmatpush1.bf16.msra.mxu0 0
          %3738 = vmatprep.subr.bf16.mxu0 0
          %3739 = vmatpush1.bf16.msra.mxu0 0
          %3740 = vmatprep.subr.bf16.mxu0 0
          %3741 = vmatpush1.bf16.msra.mxu0 0
          %3742 = vmatprep.subr.bf16.mxu0 0
          %3743 = vmatpush1.bf16.msra.mxu0 0
          %3744 = vmatprep.subr.bf16.mxu0 0
          %3745 = vmatpush1.bf16.msra.mxu0 0
          %3746 = vmatprep.subr.bf16.mxu0 0
          %3747 = vmatpush1.bf16.msra.mxu0 0
          %3748 = vmatprep.subr.bf16.mxu0 0
          %3749 = vmatpush1.bf16.msra.mxu0 0
          %3750 = vmatprep.subr.bf16.mxu0 0
          %3751 = vmatpush1.bf16.msra.mxu0 0
          %3752 = vmatprep.subr.bf16.mxu0 0
          %3753 = vmatpush1.bf16.msra.mxu0 0
          %3754 = vmatprep.mubr.bf16.mxu0 0
          %3755 = vmatmul.mubr.bf16.gmra.mrb[0].mxu0 %v3720
          %v3756 = vpop.f32.mrb[0].mxu0
          %v3757 = vadd.f32 0.0, %v3756
          %v3758 = vpop.f32.mrb[0].mxu0
          %v3759 = vpop.f32.mrb[0].mxu0
          %v3760 = vadd.f32 0.0, %v3759
          %v3761 = vpop.f32.mrb[0].mxu0
          %3762 = vdwg.mxu0
          %s3763 = sld [smem:[#allocation13]]
          %s3764 = sld [smem:[#allocation13 + $0x1]]
          %v3765 = vlaneseq
          %v3766 = vand.u32 %v3765, 127
          %vm3767 = vcmp.eq.s32.totalorder %v3766, 1
          %v3768 = vstv %s3764
          %v3769 = vadd.f32 %v3757, %v3768
          %v3770 = vadd.f32 %v3760, %v3768
          %v3771 = vxor.u32 %v3769, 2147483648
          %v3772 = vxor.u32 %v3770, 2147483648
          %v3773 = vmul.f32 %v3771, 1.442695
          %v3774 = vpow.pop %v3773
          %v3775 = vmul.f32 %v3772, 1.442695
          %v3776 = vpow.pop %v3775
          %v3777 = vadd.f32 %v3774, 1.0
          %v3778 = vadd.f32 %v3776, 1.0
          %v3779 = vrcp.pop %v3777
          %v3780 = vmul.f32 1.0, %v3779
          %v3781 = vrcp.pop %v3778
          %v3782 = vmul.f32 1.0, %v3781
          %v3783 = vstv %s3763
          %v3784 = vadd.f32 %v3757, %v3783
          %v3785 = vadd.f32 %v3760, %v3783
          %v3786 = vsel %vm3767, %v3780, %v3784
          %v3787 = vsel %vm3767, %v3782, %v3785
          %vm3788 = vcmask 15360
          %3789 = vst.msk [vmem:[%s766] sm:$0xff] %vm3788, %v3786
          %3790 = vst.msk [vmem:[%s766 + $0x8] sm:$0xff] %vm3788, %v3787
        $region108: #{tpu_custom_call.1} parent=79 // pred_fallthru
          _
        %v3791 = vld [vmem:[#allocation2] sm:$0xff]
        %v3792 = vld [vmem:[%s752] sm:$0xff]
        %v3793 = vld [vmem:[%s752 + $0x8] sm:$0xff]
        %v3794 = vld [vmem:[%s752 + $0x10] sm:$0xff]
        %v3795 = vld [vmem:[%s752 + $0x18] sm:$0xff]
        %v3796 = vld [vmem:[%s757] sm:$0x3]
        %v3798 = vlaneseq
        %v3799 = vshrl.u32 %v3798, 7
        %v3800 = vsub.s32 0, %v3799
        %v3801 = vrot.slane %v3796, %v3800
        %v3802 = vlaneseq
        %v3803 = vshrl.u32 %v3802, 7
        %v3804 = vsub.s32 1, %v3803
        %v3805 = vrot.slane %v3796, %v3804
        %v3812 = vunpack.c.l.b16 %v3792
        %v3813 = vunpack.c.h.b16 %v3792
        %v3814 = vunpack.c.l.b16 %v3793
        %v3815 = vunpack.c.h.b16 %v3793
        %v3816 = vunpack.c.l.b16 %v3794
        %v3817 = vunpack.c.h.b16 %v3794
        %v3818 = vunpack.c.l.b16 %v3795
        %v3819 = vunpack.c.h.b16 %v3795
        %v3820 = vpack.c.b16 %v3814, %v3812
        %v3821 = vpack.c.b16 %v3815, %v3813
        %v3822 = vpack.c.b16 %v3818, %v3816
        %v3823 = vpack.c.b16 %v3819, %v3817
        %vm3828 = vcmask 261120
        %v3830 = vsel %vm3828, %v3791, 0
        %3832 = vmatprep.subr.bf16.mxu0 %v3821
        %3833 = vmatpush1.bf16.msra.mxu0 %v3820
        %3834 = vmatprep.subr.bf16.mxu0 %v3823
        %3835 = vmatpush1.bf16.msra.mxu0 %v3822
        %3836 = vmatprep.subr.bf16.mxu0 0
        %3837 = vmatpush1.bf16.msra.mxu0 0
        %3838 = vmatprep.subr.bf16.mxu0 0
        %3839 = vmatpush1.bf16.msra.mxu0 0
        %3840 = vmatprep.subr.bf16.mxu0 0
        %3841 = vmatpush1.bf16.msra.mxu0 0
        %3842 = vmatprep.subr.bf16.mxu0 0
        %3843 = vmatpush1.bf16.msra.mxu0 0
        %3844 = vmatprep.subr.bf16.mxu0 0
        %3845 = vmatpush1.bf16.msra.mxu0 0
        %3846 = vmatprep.subr.bf16.mxu0 0
        %3847 = vmatpush1.bf16.msra.mxu0 0
        %3848 = vmatprep.subr.bf16.mxu0 0
        %3849 = vmatpush1.bf16.msra.mxu0 0
        %3850 = vmatprep.subr.bf16.mxu0 0
        %3851 = vmatpush1.bf16.msra.mxu0 0
        %3852 = vmatprep.subr.bf16.mxu0 0
        %3853 = vmatpush1.bf16.msra.mxu0 0
        %3854 = vmatprep.subr.bf16.mxu0 0
        %3855 = vmatpush1.bf16.msra.mxu0 0
        %3856 = vmatprep.subr.bf16.mxu0 0
        %3857 = vmatpush1.bf16.msra.mxu0 0
        %3858 = vmatprep.subr.bf16.mxu0 0
        %3859 = vmatpush1.bf16.msra.mxu0 0
        %3860 = vmatprep.subr.bf16.mxu0 0
        %3861 = vmatpush1.bf16.msra.mxu0 0
        %3862 = vmatprep.subr.bf16.mxu0 0
        %3863 = vmatpush1.bf16.msra.mxu0 0
        %3864 = vmatprep.mubr.bf16.mxu0 0
        %3865 = vmatmul.mubr.bf16.gmra.mrb[0].mxu0 %v3830
        %v3866 = vpop.f32.mrb[0].mxu0
        %v3867 = vadd.f32 %v3801, %v3866
        %v3868 = vpop.f32.mrb[0].mxu0
        %v3869 = vadd.f32 %v3805, %v3868
        %v3870 = vpop.f32.mrb[0].mxu0
        %v3871 = vadd.f32 %v3801, %v3870
        %v3872 = vpop.f32.mrb[0].mxu0
        %v3873 = vadd.f32 %v3805, %v3872
        %3874 = vdwg.mxu0
        %v3875 = vpack.c.bf16 %v3867, %v3867
        %v3876 = vpack.c.bf16 %v3869, %v3869
        %v3877 = vpack.c.bf16 %v3871, %v3871
        %v3878 = vpack.c.bf16 %v3873, %v3873
        %v3883 = vunpack.c.l.b16 %v3875
        %v3884 = vunpack.c.l.b16 %v3876
        %v3885 = vunpack.c.l.b16 %v3877
        %v3886 = vunpack.c.l.b16 %v3878
        %v3887 = vpack.c.b16 %v3884, %v3883
        %v3888 = vpack.c.b16 %v3886, %v3885
        %3891 = vst [vmem:[%s733] sm:$0xff] %v3887
        %3892 = vst [vmem:[%s733 + $0x8] sm:$0xff] %v3888
        %s3893 = sand.u32 %s403, 1
        %s3894 = scalar_lea.sflag [#allocation5], %s3893
        %s3895 = sand.u32 %s403, 1
        %s3896 = smul.addr %s3895, 16
        %s3897 = scalar_lea.vmem [#allocation14], %s3896
        %s3898 = sand.u32 %s431, 1
        %s3899 = scalar_lea.sflag [#allocation16], %s3898
        %s3900 = sand.u32 %s431, 1
        %s3901 = smul.addr %s3900, 16
        %s3902 = scalar_lea.vmem [#allocation15], %s3901
        %s3903 = smul.u32 2, %s47
        %p3904 = scmp.lt.s32.totalorder %s3903, 3
        %s3905 = scalar_select %p3904, %s3903, 3
        %s3906 = smul.addr %s3905, 8
        %s3907 = scalar_lea.vmem %s17, %s3906
        // Predicated region
        $region109: #{tpu_custom_call.1} parent=79 // pred_check
          %p3908 = pneg %p413
        $region110: #{tpu_custom_call.1} parent=79 // pred_check_branch
          %3910 = sbr.rel (%p3908) target = $region112
        $region111: #{tpu_custom_call.1} parent=79 // pred_region
          %s3911 = smul.u32 2, %s47
          %s3913 = ssub.s32 256, 256
          %3914 = vsyncadd %s3894, %s3913
          %s3915 = smul.addr %s3911, 128
          %s3916 = scalar_lea.hbm %s15, %s3915
          %s3917 = sshll.u32 %s3897, 4
          %s3918 = int_to_ptr.vmem [resolvable:$true] %s3917
          %3923 = dma.vmem_to_hbm [thread:$0]  %s3918, 256, %s3916, %s3894, 128, 128, 8
        $region112: #{tpu_custom_call.1} parent=79 // pred_fallthru
          _
        // Predicated region
        $region113: #{tpu_custom_call.1} parent=79 // pred_check
          %p3924 = pneg %p441
        $region114: #{tpu_custom_call.1} parent=79 // pred_check_branch
          %3926 = sbr.rel (%p3924) target = $region116
        $region115: #{tpu_custom_call.1} parent=79 // pred_region
          %s3927 = smul.u32 2, %s47
          %s3928 = smul.u32 2, %s48
          %s3930 = ssub.s32 256, 256
          %3931 = vsyncadd %s3899, %s3930
          %s3932 = smul.addr %s3927, 2
          %s3933 = sadd.s32 %s3928, %s3932
          %s3934 = smul.addr %s3933, 64
          %s3935 = scalar_lea.hbm %s16, %s3934
          %s3936 = sshll.u32 %s3902, 4
          %s3937 = int_to_ptr.vmem [resolvable:$true] %s3936
          %3942 = dma.vmem_to_hbm [thread:$0]  %s3937, 256, %s3935, %s3899, 128, 128, 8
        $region116: #{tpu_custom_call.1} parent=79 // pred_fallthru
          _
        // Predicated region
        $region117: #{tpu_custom_call.1} parent=79 // pred_check
          %p3943 = pneg %p467
        $region118: #{tpu_custom_call.1} parent=79 // pred_check_branch
          %3945 = sbr.rel (%p3943) target = $region120
        $region119: #{tpu_custom_call.1} parent=79 // pred_region
          %s3946 = smul.u32 2, %s47
        $region120: #{tpu_custom_call.1} parent=79 // pred_fallthru
          _
      $region80: #{tpu_custom_call.1} parent=5 // pred_fallthru
        _
      %p3947 = scmp.le.s32.totalorder 2, %s38
      // Predicated region
      $region121: #{tpu_custom_call.1} parent=5 // pred_check
        %p3948 = pneg %p3947
      $region122: #{tpu_custom_call.1} parent=5 // pred_check_branch
        %3950 = sbr.rel (%p3948) target = $region124
      $region123: #{tpu_custom_call.1} parent=5 // pred_region
        %s3951 = ssub.s32 %s38, 2
        // Predicated region
        $region125: #{tpu_custom_call.1} parent=123 // pred_check
          %p3952 = pneg %p419
        $region126: #{tpu_custom_call.1} parent=123 // pred_check_branch
          %3954 = sbr.rel (%p3952) target = $region128
        $region127: #{tpu_custom_call.1} parent=123 // pred_region
          %s3955 = sand.u32 %s404, 1
          %s3956 = scalar_lea.sflag [#allocation5], %s3955
          %s3957 = sand.u32 %s404, 1
          %s3958 = smul.addr %s3957, 16
          %s3959 = scalar_lea.vmem [#allocation14], %s3958
          %3960 = dma.done %s3956, 256
        $region128: #{tpu_custom_call.1} parent=123 // pred_fallthru
          _
        // Predicated region
        $region129: #{tpu_custom_call.1} parent=123 // pred_check
          %p3961 = pneg %p447
        $region130: #{tpu_custom_call.1} parent=123 // pred_check_branch
          %3963 = sbr.rel (%p3961) target = $region132
        $region131: #{tpu_custom_call.1} parent=123 // pred_region
          %s3964 = sand.u32 %s432, 1
          %s3965 = scalar_lea.sflag [#allocation16], %s3964
          %s3966 = sand.u32 %s432, 1
          %s3967 = smul.addr %s3966, 16
          %s3968 = scalar_lea.vmem [#allocation15], %s3967
          %3969 = dma.done %s3965, 256
        $region132: #{tpu_custom_call.1} parent=123 // pred_fallthru
          _
        // Predicated region
        $region133: #{tpu_custom_call.1} parent=123 // pred_check
          %p3970 = pneg %p473
        $region134: #{tpu_custom_call.1} parent=123 // pred_check_branch
          %3972 = sbr.rel (%p3970) target = $region136
        $region135: #{tpu_custom_call.1} parent=123 // pred_region
          %s3973 = smul.u32 2, %s49
          %p3974 = scmp.lt.s32.totalorder %s3973, 3
          %s3975 = scalar_select %p3974, %s3973, 3
          %s3976 = smul.addr %s3975, 8
          %s3977 = scalar_lea.vmem %s17, %s3976
        $region136: #{tpu_custom_call.1} parent=123 // pred_fallthru
          _
      $region124: #{tpu_custom_call.1} parent=5 // pred_fallthru
        _
    $region6: #{tpu_custom_call.1} parent=1 // loop_footer
      %s42 = sadd.s32 1, %s38
    $region7: #{tpu_custom_call.1} parent=1 // loop_footer_branch
      %37 = sbr.rel target = $region3
    $region8: #{tpu_custom_call.1} parent=1 // loop_exit
      _
    %3978 = vsyncpa [#allocation4], 1
    %s3979 = scalar_lea.sflag [#allocation4], 1
    %3980 = vsyncpa %s3979, 1
    %3981 = vsyncpa [#allocation8], 1
    %s3982 = scalar_lea.sflag [#allocation8], 1
    %3983 = vsyncpa %s3982, 1
    %3984 = vsyncpa [#allocation11], 1
    %3985 = vsyncpa [#allocation5], 1
    %s3986 = scalar_lea.sflag [#allocation5], 1
    %3987 = vsyncpa %s3986, 1
    %3988 = vsyncpa [#allocation16], 1
    %s3989 = scalar_lea.sflag [#allocation16], 1
    %3990 = vsyncpa %s3989, 1
    %3991 = vsyncpa [#allocation6], 1
    %s3992 = scalar_lea.sflag [#allocation6], 1
    %3993 = vsyncpa %s3992, 1

</llo_original>
